<compile_context>
chip_gen: v6e
topology: v6e:2x2x1
jax: 0.10.0
libtpu: 0.0.40
codegen_flags: <defaults>
</compile_context>

<pallas_src>
import functools

import jax
import jax.numpy as jnp
import numpy as np
from jax.experimental import pallas as pl
from jax.experimental.pallas import tpu as pltpu

# 8-bit signed integer bounds (the `max`/`min` ctor args of modelQuantized)
QMAX = 127.0
QMIN = -128.0

# Geometry of the demo net: Conv3x3(4->8,pad1)+ReLU ; Conv3x3(8->8,pad1)+ReLU ;
# Flatten ; Linear(8*16*16 -> 10)
H = W = 16
HP, WP = H + 2, W + 2          # zero-padded spatial extent (18 x 18)
R = H * WP                     # 288: width of the flat conv-output span
RP = HP * WP + 4               # 328: flat padded buffer width (mult of 8, >= 38 + R)
CIN_PAD = 8                    # conv1 input channels padded 4 -> 8 (sublane multiple)
C1 = 8                         # conv1 output channels
C2 = 8                         # conv2 output channels
NOUT_PAD = 128                 # linear output features padded 10 -> 128 (lane dense)


# ---------------------------------------------------------------------------
# The single fused Pallas kernel (one grid step == one batch item)
# ---------------------------------------------------------------------------
def _fused_net_kernel(x_ref, mask_ref, w1_ref, b1_ref, w2_ref, b2_ref,
                      w3_ref, b3_ref, out_ref, buf_ref, *,
                      input_scale, s1, s2, s3):

    def q(v, s):  # pre-hook: clamp(round(v * scale)) to signed-8-bit range
        return jnp.clip(jnp.round(v * s), QMIN, QMAX)

    def conv3x3(x_flat, w_taps_ref, b_ref):
        # x_flat: (Cin, RP) f32 channel-major, flat zero-padded image.
        # Tap (kh, kw) is a (Cout, Cin) @ (Cin, R) matmul on a lane-shifted
        # window of x_flat -- patches live only in VMEM, never in HBM.
        cout = w_taps_ref.shape[1]
        acc = jnp.zeros((cout, R), jnp.float32)
        for t in range(9):
            off = (t // 3) * WP + (t % 3)
            acc = acc + jnp.dot(
                w_taps_ref[t],                                 # (Cout, Cin) bf16
                x_flat[:, off:off + R].astype(jnp.bfloat16),   # (Cin, R)   bf16
                preferred_element_type=jnp.float32)
        return acc + b_ref[...]                                # + int-valued bias

    # ---- conv1: input quantization + conv1 pre-hook fused into the prologue ----
    xq = q(q(x_ref[...], input_scale), s1)
    y1 = conv3x3(xq, w1_ref, b1_ref)
    # ReLU pre-hook (scale 1) + ReLU collapse into one clip; y1 is exactly
    # integer-valued (int activations x int weights + int bias, |.| << 2^24),
    # so the module's round() is a numerical no-op and is dropped.
    a1 = q(jnp.clip(y1, 0.0, QMAX), s2) * mask_ref[...]        # conv2 pre-hook fused
    # Scatter the valid columns back into a zero-padded flat buffer for conv2
    # (border rows/cols and the tail stay zero).
    buf_ref[...] = jnp.zeros((C1, RP), jnp.float32)
    buf_ref[:, WP + 1:WP + 1 + R] = a1

    # ---- conv2 ----
    y2 = conv3x3(buf_ref[...], w2_ref, b2_ref)
    a2 = q(jnp.clip(y2, 0.0, QMAX), s3)                        # linear pre-hook fused

    # ---- linear: flatten/transpose are baked into w3 at setup (row-permuted,
    # zero rows for out-of-image columns, outputs zero-padded to 128 lanes) ----
    res = b3_ref[...]                                          # (1, NOUT_PAD) f32
    for c in range(C2):
        res = res + jnp.dot(a2[c:c + 1, :].astype(jnp.bfloat16),
                            w3_ref[c],                         # (R, NOUT_PAD) bf16
                            preferred_element_type=jnp.float32)
    out_ref[...] = jnp.broadcast_to(res, (8, NOUT_PAD))


# ---------------------------------------------------------------------------
# Wrapper: layout prep (tiny, done in XLA once per call) + the pallas_call
# ---------------------------------------------------------------------------
def model_quantized_forward(pixel_values, params):
    n, cin, h, w = pixel_values.shape
    assert (h, w) == (H, W) and cin <= CIN_PAD
    # zero-pad channels (4->8) and spatial (16->18), flatten (hp, wp) into lanes.
    xp = jnp.pad(pixel_values, ((0, 0), (0, CIN_PAD - cin), (1, 1), (1, 1)))
    xp = xp.reshape(n, CIN_PAD, HP * WP)
    xp = jnp.pad(xp, ((0, 0), (0, 0), (0, RP - HP * WP)))

    # mask of conv-output columns that correspond to real (h, w) positions
    lane = np.arange(R)
    mask = jnp.asarray(((lane % WP) < W).astype(np.float32).reshape(1, R))

    kernel = functools.partial(
        _fused_net_kernel,
        input_scale=params["input_scale"], s1=params["s1"],
        s2=params["s2"], s3=params["s3"])

    out = pl.pallas_call(
        kernel,
        out_shape=jax.ShapeDtypeStruct((n, 8, NOUT_PAD), jnp.float32),
        grid=(n,),
        in_specs=[
            pl.BlockSpec((None, CIN_PAD, RP), lambda i: (i, 0, 0)),   # pixels
            pl.BlockSpec((1, R), lambda i: (0, 0)),                   # valid-col mask
            pl.BlockSpec((9, C1, CIN_PAD), lambda i: (0, 0, 0)),      # w1 taps (bf16)
            pl.BlockSpec((C1, 1), lambda i: (0, 0)),                  # b1
            pl.BlockSpec((9, C2, C1), lambda i: (0, 0, 0)),           # w2 taps (bf16)
            pl.BlockSpec((C2, 1), lambda i: (0, 0)),                  # b2
            pl.BlockSpec((C2, R, NOUT_PAD), lambda i: (0, 0, 0)),     # w3 slabs (bf16)
            pl.BlockSpec((1, NOUT_PAD), lambda i: (0, 0)),            # b3 (padded)
        ],
        out_specs=pl.BlockSpec((None, 8, NOUT_PAD), lambda i: (i, 0, 0)),
        scratch_shapes=[pltpu.VMEM((C1, RP), jnp.float32)],
        compiler_params=pltpu.CompilerParams(
            dimension_semantics=("parallel",),
            vmem_limit_bytes=32 * 1024 * 1024),
    )(xp, mask, params["w1_taps"], params["b1"], params["w2_taps"],
      params["b2"], params["w3k"], params["b3"])

    return out[:, 0, :params["nout"]]


# ---------------------------------------------------------------------------
# Setup-time weight layout conversions (done once; all values exactly bf16)
# ---------------------------------------------------------------------------
def conv_weight_to_taps(w_ochw, cin_pad):
    # torch Conv2d weight (O, C, kh, kw) -> (9, O, Cpad): taps[t, o, c]
    o, c, kh, kw = w_ochw.shape
    taps = jnp.transpose(w_ochw, (2, 3, 0, 1)).reshape(kh * kw, o, c)
    taps = jnp.pad(taps, ((0, 0), (0, 0), (0, cin_pad - c)))
    return taps.astype(jnp.bfloat16)


def linear_weight_to_slabs(w_out_in, c2, h, w):
    # torch Linear weight (NOUT, C*H*W) with NCHW flatten order ->
    # (C, H*WP, NOUT_PAD): rows permuted to the kernel's flat padded-column
    # order, zero rows for padded columns, output features padded to 128.
    nout = w_out_in.shape[0]
    w3r = w_out_in.reshape(nout, c2, h, w)
    w3r = jnp.transpose(w3r, (1, 2, 3, 0))                    # (c, h, w, nout)
    w3r = jnp.pad(w3r, ((0, 0), (0, 0), (0, WP - w), (0, NOUT_PAD - nout)))
    return w3r.reshape(c2, h * WP, NOUT_PAD).astype(jnp.bfloat16)


# ---------------------------------------------------------------------------
# Scale / bias setup mirroring modelQuantized.__init__ exactly
# (note: getattr(layer, 'weight.scale', 1) in the original always yields 1)
# ---------------------------------------------------------------------------
def setup_quantization(input_bounds, layer_bounds, float_biases):
    input_scale = (QMAX - QMIN) / (input_bounds[1] - input_bounds[0])
    preceding = []
    output_scales, qbiases = [], []
    for bounds, bias in zip(layer_bounds, float_biases):
        cum = input_scale * 1.0
        for ws, os in preceding:
            cum *= os * ws
        out_s = (QMAX - QMIN) / (bounds[1] - bounds[0]) / cum
        output_scales.append(out_s)
        preceding.append((1.0, out_s))
        cum_b = input_scale * 1.0
        for ws, os in preceding:
            cum_b *= os * ws
        qb = np.clip(np.round(np.asarray(bias) * cum_b), -2147483648, 2147483647)
        qbiases.append(jnp.asarray(qb, jnp.float32))
    return float(input_scale), [float(s) for s in output_scales], qbiases


# ---------------------------------------------------------------------------
# Pure-JAX reference of the same semantics (no Pallas), for the sanity check
# ---------------------------------------------------------------------------
def im2col(x_nhwc, k, pad):
    n, hh, ww, c = x_nhwc.shape
    xp = jnp.pad(x_nhwc, ((0, 0), (pad, pad), (pad, pad), (0, 0)))
    patches = []
    for dh in range(k):
        for dw in range(k):
            patches.append(xp[:, dh:dh + hh, dw:dw + ww, :])
    return jnp.concatenate(patches, axis=-1)


def conv_weight_to_mat(w_ochw):
    o, c, kh, kw = w_ochw.shape
    return jnp.transpose(w_ochw, (2, 3, 1, 0)).reshape(kh * kw * c, o)


def reference_forward(pixel_values, p):
    def q(v, s):
        return jnp.clip(jnp.round(v * s), QMIN, QMAX)
    x = q(pixel_values, p["input_scale"])
    x = q(x, 1.0)                                            # root pre-hook
    xh = jnp.transpose(x, (0, 2, 3, 1))
    n, hh, ww, _ = xh.shape
    cols = im2col(xh, 3, 1).reshape(n * hh * ww, -1)
    y = q(cols, p["s1"]) @ p["w1_mat"] + p["b1"]
    y = jnp.maximum(q(y, 1.0), 0.0)
    xh = y.reshape(n, hh, ww, -1)
    cols = im2col(xh, 3, 1).reshape(n * hh * ww, -1)
    y = q(cols, p["s2"]) @ p["w2_mat"] + p["b2"]
    y = jnp.maximum(q(y, 1.0), 0.0)
    xh = y.reshape(n, hh, ww, -1)
    flat = jnp.transpose(xh, (0, 3, 1, 2)).reshape(n, -1)    # torch NCHW flatten
    return q(flat, p["s3"]) @ p["w3_mat"] + p["b3"]


if __name__ == "__main__":
    key = jax.random.PRNGKey(0)
    k_in, k_w1, k_b1, k_w2, k_b2, k_w3, k_b3 = jax.random.split(key, 7)

    B, C, HW = 2, 4, 16
    O1, O2, NOUT = 8, 8, 10

    pixel_values = jax.random.uniform(k_in, (B, C, HW, HW), jnp.float32)  # bounds [0,1]

    # Integer-valued (already PTQ-quantized) weights, torch layouts.
    w1 = jnp.round(jax.random.uniform(k_w1, (O1, C, 3, 3), jnp.float32, -3.0, 3.0))
    w2 = jnp.round(jax.random.uniform(k_w2, (O2, O1, 3, 3), jnp.float32, -3.0, 3.0))
    w3 = jnp.round(jax.random.uniform(k_w3, (NOUT, O2 * HW * HW), jnp.float32, -2.0, 2.0))
    b1f = jax.random.uniform(k_b1, (O1,), jnp.float32, -0.5, 0.5)
    b2f = jax.random.uniform(k_b2, (O2,), jnp.float32, -0.5, 0.5)
    b3f = jax.random.uniform(k_b3, (NOUT,), jnp.float32, -0.5, 0.5)

    input_bounds = np.array([0.0, 1.0])
    layer_bounds = [np.array([0.0, 2.0]), np.array([0.0, 4.0]), np.array([0.0, 8.0])]
    input_scale, (s1, s2, s3), (b1q, b2q, b3q) = setup_quantization(
        input_bounds, layer_bounds, [b1f, b2f, b3f])

    # Kernel-side parameters (layouts baked once at setup).
    params = dict(
        input_scale=input_scale, s1=s1, s2=s2, s3=s3, nout=NOUT,
        w1_taps=conv_weight_to_taps(w1, CIN_PAD),
        w2_taps=conv_weight_to_taps(w2, C1),
        w3k=linear_weight_to_slabs(w3, O2, HW, HW),
        b1=b1q.reshape(O1, 1),
        b2=b2q.reshape(O2, 1),
        b3=jnp.pad(b3q, (0, NOUT_PAD - NOUT)).reshape(1, NOUT_PAD),
    )
    # Reference-side parameters (plain im2col / matmul layouts).
    ref_params = dict(
        input_scale=input_scale, s1=s1, s2=s2, s3=s3,
        w1_mat=conv_weight_to_mat(w1), w2_mat=conv_weight_to_mat(w2),
        w3_mat=jnp.transpose(w3, (1, 0)),
        b1=b1q, b2=b2q, b3=b3q,
    )

    out = jax.block_until_ready(model_quantized_forward(pixel_values, params))
    ref = jax.block_until_ready(reference_forward(pixel_values, ref_params))
    assert out.shape == (B, NOUT)
    np.testing.assert_allclose(np.asarray(out), np.asarray(ref), rtol=1e-5, atol=1e-3)

    # TODO(synk): the original module raises host-side Exceptions for
    # out-of-range / non-integer values; those checks cannot abort inside a TPU
    # kernel (and are unreachable after the clamp anyway), so they are omitted.
    print("KERNEL_OK")
</pallas_src>

<mosaic_0001>
module attributes {stable_mosaic.version = 11 : i64} {
  func.func @_fused_net_kernel(%arg0: i32, %arg1: memref<1x8x328xf32, #tpu.memory_space<vmem>>, %arg2: memref<1x288xf32, #tpu.memory_space<vmem>>, %arg3: memref<9x8x8xbf16, #tpu.memory_space<vmem>>, %arg4: memref<8x1xf32, #tpu.memory_space<vmem>>, %arg5: memref<9x8x8xbf16, #tpu.memory_space<vmem>>, %arg6: memref<8x1xf32, #tpu.memory_space<vmem>>, %arg7: memref<8x288x128xbf16, #tpu.memory_space<vmem>>, %arg8: memref<1x128xf32, #tpu.memory_space<vmem>>, %arg9: memref<1x8x128xf32, #tpu.memory_space<vmem>>, %arg10: memref<8x328xf32, #tpu.memory_space<vmem>>) attributes {dimension_semantics = [#tpu.dimension_semantics<parallel>], iteration_bounds = array<i64: 2>, scalar_prefetch = 0 : i64, scratch_operands = 1 : i64, tpu.core_type = #tpu.core_type<tc>, window_params = [{transform_indices = @transform_0, window_bounds = array<i64: 1, 8, 328>}, {pipeline_mode = #tpu.pipeline_mode<synchronous>, transform_indices = @transform_1, window_bounds = array<i64: 1, 288>}, {pipeline_mode = #tpu.pipeline_mode<synchronous>, transform_indices = @transform_2, window_bounds = array<i64: 9, 8, 8>}, {pipeline_mode = #tpu.pipeline_mode<synchronous>, transform_indices = @transform_3, window_bounds = array<i64: 8, 1>}, {pipeline_mode = #tpu.pipeline_mode<synchronous>, transform_indices = @transform_4, window_bounds = array<i64: 9, 8, 8>}, {pipeline_mode = #tpu.pipeline_mode<synchronous>, transform_indices = @transform_5, window_bounds = array<i64: 8, 1>}, {pipeline_mode = #tpu.pipeline_mode<synchronous>, transform_indices = @transform_6, window_bounds = array<i64: 8, 288, 128>}, {pipeline_mode = #tpu.pipeline_mode<synchronous>, transform_indices = @transform_7, window_bounds = array<i64: 1, 128>}, {transform_indices = @transform_8, window_bounds = array<i64: 1, 8, 128>}]} {
    %c0 = arith.constant 0 : index
    %c0_0 = arith.constant 0 : index
    %c0_1 = arith.constant 0 : index
    %0 = vector.load %arg1[%c0, %c0_0, %c0_1] : memref<1x8x328xf32, #tpu.memory_space<vmem>>, vector<1x8x328xf32>
    %1 = vector.shape_cast %0 : vector<1x8x328xf32> to vector<8x328xf32>
    %cst = arith.constant 2.550000e+02 : f32
    %2 = vector.broadcast %cst : f32 to vector<8x328xf32>
    %3 = arith.mulf %1, %2 : vector<8x328xf32>
    %4 = math.roundeven %3 : vector<8x328xf32>
    %cst_2 = arith.constant -1.280000e+02 : f32
    %cst_3 = arith.constant 1.270000e+02 : f32
    %5 = vector.broadcast %cst_2 : f32 to vector<8x328xf32>
    %6 = arith.maximumf %5, %4 : vector<8x328xf32>
    %7 = vector.broadcast %cst_3 : f32 to vector<8x328xf32>
    %8 = arith.minimumf %7, %6 : vector<8x328xf32>
    %cst_4 = arith.constant 5.000000e-01 : f32
    %9 = vector.broadcast %cst_4 : f32 to vector<8x328xf32>
    %10 = arith.mulf %8, %9 : vector<8x328xf32>
    %11 = math.roundeven %10 : vector<8x328xf32>
    %cst_5 = arith.constant -1.280000e+02 : f32
    %cst_6 = arith.constant 1.270000e+02 : f32
    %12 = vector.broadcast %cst_5 : f32 to vector<8x328xf32>
    %13 = arith.maximumf %12, %11 : vector<8x328xf32>
    %14 = vector.broadcast %cst_6 : f32 to vector<8x328xf32>
    %15 = arith.minimumf %14, %13 : vector<8x328xf32>
    %cst_7 = arith.constant 0.000000e+00 : f32
    %16 = vector.broadcast %cst_7 : f32 to vector<8x288xf32>
    %c0_8 = arith.constant 0 : index
    %c0_9 = arith.constant 0 : index
    %c0_10 = arith.constant 0 : index
    %17 = vector.load %arg3[%c0_8, %c0_9, %c0_10] : memref<9x8x8xbf16, #tpu.memory_space<vmem>>, vector<1x8x8xbf16>
    %18 = vector.shape_cast %17 : vector<1x8x8xbf16> to vector<8x8xbf16>
    %19 = vector.extract_strided_slice %15 {offsets = [0, 0], sizes = [8, 288], strides = [1, 1]} : vector<8x328xf32> to vector<8x288xf32>
    %20 = arith.truncf %19 : vector<8x288xf32> to vector<8x288xbf16>
    %cst_11 = arith.constant dense<0.000000e+00> : vector<8x288xf32>
    %21 = tpu.matmul %18, %20, %cst_11 {dimension_numbers = #tpu.dot_dimension_numbers<[1], [0], [0], [1], [0, 0, 1, 1], [], []>} : vector<8x8xbf16>, vector<8x288xbf16>, vector<8x288xf32> -> vector<8x288xf32>
    %22 = arith.addf %16, %21 : vector<8x288xf32>
    %c1 = arith.constant 1 : index
    %c0_12 = arith.constant 0 : index
    %c0_13 = arith.constant 0 : index
    %23 = vector.load %arg3[%c1, %c0_12, %c0_13] : memref<9x8x8xbf16, #tpu.memory_space<vmem>>, vector<1x8x8xbf16>
    %24 = vector.shape_cast %23 : vector<1x8x8xbf16> to vector<8x8xbf16>
    %25 = vector.extract_strided_slice %15 {offsets = [0, 1], sizes = [8, 288], strides = [1, 1]} : vector<8x328xf32> to vector<8x288xf32>
    %26 = arith.truncf %25 : vector<8x288xf32> to vector<8x288xbf16>
    %cst_14 = arith.constant dense<0.000000e+00> : vector<8x288xf32>
    %27 = tpu.matmul %24, %26, %cst_14 {dimension_numbers = #tpu.dot_dimension_numbers<[1], [0], [0], [1], [0, 0, 1, 1], [], []>} : vector<8x8xbf16>, vector<8x288xbf16>, vector<8x288xf32> -> vector<8x288xf32>
    %28 = arith.addf %22, %27 : vector<8x288xf32>
    %c2 = arith.constant 2 : index
    %c0_15 = arith.constant 0 : index
    %c0_16 = arith.constant 0 : index
    %29 = vector.load %arg3[%c2, %c0_15, %c0_16] : memref<9x8x8xbf16, #tpu.memory_space<vmem>>, vector<1x8x8xbf16>
    %30 = vector.shape_cast %29 : vector<1x8x8xbf16> to vector<8x8xbf16>
    %31 = vector.extract_strided_slice %15 {offsets = [0, 2], sizes = [8, 288], strides = [1, 1]} : vector<8x328xf32> to vector<8x288xf32>
    %32 = arith.truncf %31 : vector<8x288xf32> to vector<8x288xbf16>
    %cst_17 = arith.constant dense<0.000000e+00> : vector<8x288xf32>
    %33 = tpu.matmul %30, %32, %cst_17 {dimension_numbers = #tpu.dot_dimension_numbers<[1], [0], [0], [1], [0, 0, 1, 1], [], []>} : vector<8x8xbf16>, vector<8x288xbf16>, vector<8x288xf32> -> vector<8x288xf32>
    %34 = arith.addf %28, %33 : vector<8x288xf32>
    %c3 = arith.constant 3 : index
    %c0_18 = arith.constant 0 : index
    %c0_19 = arith.constant 0 : index
    %35 = vector.load %arg3[%c3, %c0_18, %c0_19] : memref<9x8x8xbf16, #tpu.memory_space<vmem>>, vector<1x8x8xbf16>
    %36 = vector.shape_cast %35 : vector<1x8x8xbf16> to vector<8x8xbf16>
    %37 = vector.extract_strided_slice %15 {offsets = [0, 18], sizes = [8, 288], strides = [1, 1]} : vector<8x328xf32> to vector<8x288xf32>
    %38 = arith.truncf %37 : vector<8x288xf32> to vector<8x288xbf16>
    %cst_20 = arith.constant dense<0.000000e+00> : vector<8x288xf32>
    %39 = tpu.matmul %36, %38, %cst_20 {dimension_numbers = #tpu.dot_dimension_numbers<[1], [0], [0], [1], [0, 0, 1, 1], [], []>} : vector<8x8xbf16>, vector<8x288xbf16>, vector<8x288xf32> -> vector<8x288xf32>
    %40 = arith.addf %34, %39 : vector<8x288xf32>
    %c4 = arith.constant 4 : index
    %c0_21 = arith.constant 0 : index
    %c0_22 = arith.constant 0 : index
    %41 = vector.load %arg3[%c4, %c0_21, %c0_22] : memref<9x8x8xbf16, #tpu.memory_space<vmem>>, vector<1x8x8xbf16>
    %42 = vector.shape_cast %41 : vector<1x8x8xbf16> to vector<8x8xbf16>
    %43 = vector.extract_strided_slice %15 {offsets = [0, 19], sizes = [8, 288], strides = [1, 1]} : vector<8x328xf32> to vector<8x288xf32>
    %44 = arith.truncf %43 : vector<8x288xf32> to vector<8x288xbf16>
    %cst_23 = arith.constant dense<0.000000e+00> : vector<8x288xf32>
    %45 = tpu.matmul %42, %44, %cst_23 {dimension_numbers = #tpu.dot_dimension_numbers<[1], [0], [0], [1], [0, 0, 1, 1], [], []>} : vector<8x8xbf16>, vector<8x288xbf16>, vector<8x288xf32> -> vector<8x288xf32>
    %46 = arith.addf %40, %45 : vector<8x288xf32>
    %c5 = arith.constant 5 : index
    %c0_24 = arith.constant 0 : index
    %c0_25 = arith.constant 0 : index
    %47 = vector.load %arg3[%c5, %c0_24, %c0_25] : memref<9x8x8xbf16, #tpu.memory_space<vmem>>, vector<1x8x8xbf16>
    %48 = vector.shape_cast %47 : vector<1x8x8xbf16> to vector<8x8xbf16>
    %49 = vector.extract_strided_slice %15 {offsets = [0, 20], sizes = [8, 288], strides = [1, 1]} : vector<8x328xf32> to vector<8x288xf32>
    %50 = arith.truncf %49 : vector<8x288xf32> to vector<8x288xbf16>
    %cst_26 = arith.constant dense<0.000000e+00> : vector<8x288xf32>
    %51 = tpu.matmul %48, %50, %cst_26 {dimension_numbers = #tpu.dot_dimension_numbers<[1], [0], [0], [1], [0, 0, 1, 1], [], []>} : vector<8x8xbf16>, vector<8x288xbf16>, vector<8x288xf32> -> vector<8x288xf32>
    %52 = arith.addf %46, %51 : vector<8x288xf32>
    %c6 = arith.constant 6 : index
    %c0_27 = arith.constant 0 : index
    %c0_28 = arith.constant 0 : index
    %53 = vector.load %arg3[%c6, %c0_27, %c0_28] : memref<9x8x8xbf16, #tpu.memory_space<vmem>>, vector<1x8x8xbf16>
    %54 = vector.shape_cast %53 : vector<1x8x8xbf16> to vector<8x8xbf16>
    %55 = vector.extract_strided_slice %15 {offsets = [0, 36], sizes = [8, 288], strides = [1, 1]} : vector<8x328xf32> to vector<8x288xf32>
    %56 = arith.truncf %55 : vector<8x288xf32> to vector<8x288xbf16>
    %cst_29 = arith.constant dense<0.000000e+00> : vector<8x288xf32>
    %57 = tpu.matmul %54, %56, %cst_29 {dimension_numbers = #tpu.dot_dimension_numbers<[1], [0], [0], [1], [0, 0, 1, 1], [], []>} : vector<8x8xbf16>, vector<8x288xbf16>, vector<8x288xf32> -> vector<8x288xf32>
    %58 = arith.addf %52, %57 : vector<8x288xf32>
    %c7 = arith.constant 7 : index
    %c0_30 = arith.constant 0 : index
    %c0_31 = arith.constant 0 : index
    %59 = vector.load %arg3[%c7, %c0_30, %c0_31] : memref<9x8x8xbf16, #tpu.memory_space<vmem>>, vector<1x8x8xbf16>
    %60 = vector.shape_cast %59 : vector<1x8x8xbf16> to vector<8x8xbf16>
    %61 = vector.extract_strided_slice %15 {offsets = [0, 37], sizes = [8, 288], strides = [1, 1]} : vector<8x328xf32> to vector<8x288xf32>
    %62 = arith.truncf %61 : vector<8x288xf32> to vector<8x288xbf16>
    %cst_32 = arith.constant dense<0.000000e+00> : vector<8x288xf32>
    %63 = tpu.matmul %60, %62, %cst_32 {dimension_numbers = #tpu.dot_dimension_numbers<[1], [0], [0], [1], [0, 0, 1, 1], [], []>} : vector<8x8xbf16>, vector<8x288xbf16>, vector<8x288xf32> -> vector<8x288xf32>
    %64 = arith.addf %58, %63 : vector<8x288xf32>
    %c8 = arith.constant 8 : index
    %c0_33 = arith.constant 0 : index
    %c0_34 = arith.constant 0 : index
    %65 = vector.load %arg3[%c8, %c0_33, %c0_34] : memref<9x8x8xbf16, #tpu.memory_space<vmem>>, vector<1x8x8xbf16>
    %66 = vector.shape_cast %65 : vector<1x8x8xbf16> to vector<8x8xbf16>
    %67 = vector.extract_strided_slice %15 {offsets = [0, 38], sizes = [8, 288], strides = [1, 1]} : vector<8x328xf32> to vector<8x288xf32>
    %68 = arith.truncf %67 : vector<8x288xf32> to vector<8x288xbf16>
    %cst_35 = arith.constant dense<0.000000e+00> : vector<8x288xf32>
    %69 = tpu.matmul %66, %68, %cst_35 {dimension_numbers = #tpu.dot_dimension_numbers<[1], [0], [0], [1], [0, 0, 1, 1], [], []>} : vector<8x8xbf16>, vector<8x288xbf16>, vector<8x288xf32> -> vector<8x288xf32>
    %70 = arith.addf %64, %69 : vector<8x288xf32>
    %c0_36 = arith.constant 0 : index
    %c0_37 = arith.constant 0 : index
    %71 = vector.load %arg4[%c0_36, %c0_37] : memref<8x1xf32, #tpu.memory_space<vmem>>, vector<8x1xf32>
    %72 = vector.broadcast %71 : vector<8x1xf32> to vector<8x288xf32>
    %73 = arith.addf %70, %72 : vector<8x288xf32>
    %cst_38 = arith.constant 0.000000e+00 : f32
    %cst_39 = arith.constant 1.270000e+02 : f32
    %74 = vector.broadcast %cst_38 : f32 to vector<8x288xf32>
    %75 = arith.maximumf %74, %73 : vector<8x288xf32>
    %76 = vector.broadcast %cst_39 : f32 to vector<8x288xf32>
    %77 = arith.minimumf %76, %75 : vector<8x288xf32>
    %cst_40 = arith.constant 5.000000e-01 : f32
    %78 = vector.broadcast %cst_40 : f32 to vector<8x288xf32>
    %79 = arith.mulf %77, %78 : vector<8x288xf32>
    %80 = math.roundeven %79 : vector<8x288xf32>
    %cst_41 = arith.constant -1.280000e+02 : f32
    %cst_42 = arith.constant 1.270000e+02 : f32
    %81 = vector.broadcast %cst_41 : f32 to vector<8x288xf32>
    %82 = arith.maximumf %81, %80 : vector<8x288xf32>
    %83 = vector.broadcast %cst_42 : f32 to vector<8x288xf32>
    %84 = arith.minimumf %83, %82 : vector<8x288xf32>
    %c0_43 = arith.constant 0 : index
    %c0_44 = arith.constant 0 : index
    %85 = vector.load %arg2[%c0_43, %c0_44] : memref<1x288xf32, #tpu.memory_space<vmem>>, vector<1x288xf32>
    %86 = vector.broadcast %85 : vector<1x288xf32> to vector<8x288xf32>
    %87 = arith.mulf %84, %86 : vector<8x288xf32>
    %cst_45 = arith.constant 0.000000e+00 : f32
    %88 = vector.broadcast %cst_45 : f32 to vector<8x328xf32>
    %c0_46 = arith.constant 0 : index
    %c0_47 = arith.constant 0 : index
    %89 = vector.load %arg10[%c0_46, %c0_47] : memref<8x328xf32, #tpu.memory_space<vmem>>, vector<8x328xf32>
    tpu.vector_store %arg10[%c0_46, %c0_47], %88 {strides = array<i32>} : memref<8x328xf32, #tpu.memory_space<vmem>>, vector<8x328xf32>,
    %c0_48 = arith.constant 0 : index
    %c19 = arith.constant 19 : index
    %90 = vector.load %arg10[%c0_48, %c19] : memref<8x328xf32, #tpu.memory_space<vmem>>, vector<8x288xf32>
    tpu.vector_store %arg10[%c0_48, %c19], %87 {strides = array<i32>} : memref<8x328xf32, #tpu.memory_space<vmem>>, vector<8x288xf32>,
    %c0_49 = arith.constant 0 : index
    %c0_50 = arith.constant 0 : index
    %91 = vector.load %arg10[%c0_49, %c0_50] : memref<8x328xf32, #tpu.memory_space<vmem>>, vector<8x328xf32>
    %cst_51 = arith.constant 0.000000e+00 : f32
    %92 = vector.broadcast %cst_51 : f32 to vector<8x288xf32>
    %c0_52 = arith.constant 0 : index
    %c0_53 = arith.constant 0 : index
    %c0_54 = arith.constant 0 : index
    %93 = vector.load %arg5[%c0_52, %c0_53, %c0_54] : memref<9x8x8xbf16, #tpu.memory_space<vmem>>, vector<1x8x8xbf16>
    %94 = vector.shape_cast %93 : vector<1x8x8xbf16> to vector<8x8xbf16>
    %95 = vector.extract_strided_slice %91 {offsets = [0, 0], sizes = [8, 288], strides = [1, 1]} : vector<8x328xf32> to vector<8x288xf32>
    %96 = arith.truncf %95 : vector<8x288xf32> to vector<8x288xbf16>
    %cst_55 = arith.constant dense<0.000000e+00> : vector<8x288xf32>
    %97 = tpu.matmul %94, %96, %cst_55 {dimension_numbers = #tpu.dot_dimension_numbers<[1], [0], [0], [1], [0, 0, 1, 1], [], []>} : vector<8x8xbf16>, vector<8x288xbf16>, vector<8x288xf32> -> vector<8x288xf32>
    %98 = arith.addf %92, %97 : vector<8x288xf32>
    %c1_56 = arith.constant 1 : index
    %c0_57 = arith.constant 0 : index
    %c0_58 = arith.constant 0 : index
    %99 = vector.load %arg5[%c1_56, %c0_57, %c0_58] : memref<9x8x8xbf16, #tpu.memory_space<vmem>>, vector<1x8x8xbf16>
    %100 = vector.shape_cast %99 : vector<1x8x8xbf16> to vector<8x8xbf16>
    %101 = vector.extract_strided_slice %91 {offsets = [0, 1], sizes = [8, 288], strides = [1, 1]} : vector<8x328xf32> to vector<8x288xf32>
    %102 = arith.truncf %101 : vector<8x288xf32> to vector<8x288xbf16>
    %cst_59 = arith.constant dense<0.000000e+00> : vector<8x288xf32>
    %103 = tpu.matmul %100, %102, %cst_59 {dimension_numbers = #tpu.dot_dimension_numbers<[1], [0], [0], [1], [0, 0, 1, 1], [], []>} : vector<8x8xbf16>, vector<8x288xbf16>, vector<8x288xf32> -> vector<8x288xf32>
    %104 = arith.addf %98, %103 : vector<8x288xf32>
    %c2_60 = arith.constant 2 : index
    %c0_61 = arith.constant 0 : index
    %c0_62 = arith.constant 0 : index
    %105 = vector.load %arg5[%c2_60, %c0_61, %c0_62] : memref<9x8x8xbf16, #tpu.memory_space<vmem>>, vector<1x8x8xbf16>
    %106 = vector.shape_cast %105 : vector<1x8x8xbf16> to vector<8x8xbf16>
    %107 = vector.extract_strided_slice %91 {offsets = [0, 2], sizes = [8, 288], strides = [1, 1]} : vector<8x328xf32> to vector<8x288xf32>
    %108 = arith.truncf %107 : vector<8x288xf32> to vector<8x288xbf16>
    %cst_63 = arith.constant dense<0.000000e+00> : vector<8x288xf32>
    %109 = tpu.matmul %106, %108, %cst_63 {dimension_numbers = #tpu.dot_dimension_numbers<[1], [0], [0], [1], [0, 0, 1, 1], [], []>} : vector<8x8xbf16>, vector<8x288xbf16>, vector<8x288xf32> -> vector<8x288xf32>
    %110 = arith.addf %104, %109 : vector<8x288xf32>
    %c3_64 = arith.constant 3 : index
    %c0_65 = arith.constant 0 : index
    %c0_66 = arith.constant 0 : index
    %111 = vector.load %arg5[%c3_64, %c0_65, %c0_66] : memref<9x8x8xbf16, #tpu.memory_space<vmem>>, vector<1x8x8xbf16>
    %112 = vector.shape_cast %111 : vector<1x8x8xbf16> to vector<8x8xbf16>
    %113 = vector.extract_strided_slice %91 {offsets = [0, 18], sizes = [8, 288], strides = [1, 1]} : vector<8x328xf32> to vector<8x288xf32>
    %114 = arith.truncf %113 : vector<8x288xf32> to vector<8x288xbf16>
    %cst_67 = arith.constant dense<0.000000e+00> : vector<8x288xf32>
    %115 = tpu.matmul %112, %114, %cst_67 {dimension_numbers = #tpu.dot_dimension_numbers<[1], [0], [0], [1], [0, 0, 1, 1], [], []>} : vector<8x8xbf16>, vector<8x288xbf16>, vector<8x288xf32> -> vector<8x288xf32>
    %116 = arith.addf %110, %115 : vector<8x288xf32>
    %c4_68 = arith.constant 4 : index
    %c0_69 = arith.constant 0 : index
    %c0_70 = arith.constant 0 : index
    %117 = vector.load %arg5[%c4_68, %c0_69, %c0_70] : memref<9x8x8xbf16, #tpu.memory_space<vmem>>, vector<1x8x8xbf16>
    %118 = vector.shape_cast %117 : vector<1x8x8xbf16> to vector<8x8xbf16>
    %119 = vector.extract_strided_slice %91 {offsets = [0, 19], sizes = [8, 288], strides = [1, 1]} : vector<8x328xf32> to vector<8x288xf32>
    %120 = arith.truncf %119 : vector<8x288xf32> to vector<8x288xbf16>
    %cst_71 = arith.constant dense<0.000000e+00> : vector<8x288xf32>
    %121 = tpu.matmul %118, %120, %cst_71 {dimension_numbers = #tpu.dot_dimension_numbers<[1], [0], [0], [1], [0, 0, 1, 1], [], []>} : vector<8x8xbf16>, vector<8x288xbf16>, vector<8x288xf32> -> vector<8x288xf32>
    %122 = arith.addf %116, %121 : vector<8x288xf32>
    %c5_72 = arith.constant 5 : index
    %c0_73 = arith.constant 0 : index
    %c0_74 = arith.constant 0 : index
    %123 = vector.load %arg5[%c5_72, %c0_73, %c0_74] : memref<9x8x8xbf16, #tpu.memory_space<vmem>>, vector<1x8x8xbf16>
    %124 = vector.shape_cast %123 : vector<1x8x8xbf16> to vector<8x8xbf16>
    %125 = vector.extract_strided_slice %91 {offsets = [0, 20], sizes = [8, 288], strides = [1, 1]} : vector<8x328xf32> to vector<8x288xf32>
    %126 = arith.truncf %125 : vector<8x288xf32> to vector<8x288xbf16>
    %cst_75 = arith.constant dense<0.000000e+00> : vector<8x288xf32>
    %127 = tpu.matmul %124, %126, %cst_75 {dimension_numbers = #tpu.dot_dimension_numbers<[1], [0], [0], [1], [0, 0, 1, 1], [], []>} : vector<8x8xbf16>, vector<8x288xbf16>, vector<8x288xf32> -> vector<8x288xf32>
    %128 = arith.addf %122, %127 : vector<8x288xf32>
    %c6_76 = arith.constant 6 : index
    %c0_77 = arith.constant 0 : index
    %c0_78 = arith.constant 0 : index
    %129 = vector.load %arg5[%c6_76, %c0_77, %c0_78] : memref<9x8x8xbf16, #tpu.memory_space<vmem>>, vector<1x8x8xbf16>
    %130 = vector.shape_cast %129 : vector<1x8x8xbf16> to vector<8x8xbf16>
    %131 = vector.extract_strided_slice %91 {offsets = [0, 36], sizes = [8, 288], strides = [1, 1]} : vector<8x328xf32> to vector<8x288xf32>
    %132 = arith.truncf %131 : vector<8x288xf32> to vector<8x288xbf16>
    %cst_79 = arith.constant dense<0.000000e+00> : vector<8x288xf32>
    %133 = tpu.matmul %130, %132, %cst_79 {dimension_numbers = #tpu.dot_dimension_numbers<[1], [0], [0], [1], [0, 0, 1, 1], [], []>} : vector<8x8xbf16>, vector<8x288xbf16>, vector<8x288xf32> -> vector<8x288xf32>
    %134 = arith.addf %128, %133 : vector<8x288xf32>
    %c7_80 = arith.constant 7 : index
    %c0_81 = arith.constant 0 : index
    %c0_82 = arith.constant 0 : index
    %135 = vector.load %arg5[%c7_80, %c0_81, %c0_82] : memref<9x8x8xbf16, #tpu.memory_space<vmem>>, vector<1x8x8xbf16>
    %136 = vector.shape_cast %135 : vector<1x8x8xbf16> to vector<8x8xbf16>
    %137 = vector.extract_strided_slice %91 {offsets = [0, 37], sizes = [8, 288], strides = [1, 1]} : vector<8x328xf32> to vector<8x288xf32>
    %138 = arith.truncf %137 : vector<8x288xf32> to vector<8x288xbf16>
    %cst_83 = arith.constant dense<0.000000e+00> : vector<8x288xf32>
    %139 = tpu.matmul %136, %138, %cst_83 {dimension_numbers = #tpu.dot_dimension_numbers<[1], [0], [0], [1], [0, 0, 1, 1], [], []>} : vector<8x8xbf16>, vector<8x288xbf16>, vector<8x288xf32> -> vector<8x288xf32>
    %140 = arith.addf %134, %139 : vector<8x288xf32>
    %c8_84 = arith.constant 8 : index
    %c0_85 = arith.constant 0 : index
    %c0_86 = arith.constant 0 : index
    %141 = vector.load %arg5[%c8_84, %c0_85, %c0_86] : memref<9x8x8xbf16, #tpu.memory_space<vmem>>, vector<1x8x8xbf16>
    %142 = vector.shape_cast %141 : vector<1x8x8xbf16> to vector<8x8xbf16>
    %143 = vector.extract_strided_slice %91 {offsets = [0, 38], sizes = [8, 288], strides = [1, 1]} : vector<8x328xf32> to vector<8x288xf32>
    %144 = arith.truncf %143 : vector<8x288xf32> to vector<8x288xbf16>
    %cst_87 = arith.constant dense<0.000000e+00> : vector<8x288xf32>
    %145 = tpu.matmul %142, %144, %cst_87 {dimension_numbers = #tpu.dot_dimension_numbers<[1], [0], [0], [1], [0, 0, 1, 1], [], []>} : vector<8x8xbf16>, vector<8x288xbf16>, vector<8x288xf32> -> vector<8x288xf32>
    %146 = arith.addf %140, %145 : vector<8x288xf32>
    %c0_88 = arith.constant 0 : index
    %c0_89 = arith.constant 0 : index
    %147 = vector.load %arg6[%c0_88, %c0_89] : memref<8x1xf32, #tpu.memory_space<vmem>>, vector<8x1xf32>
    %148 = vector.broadcast %147 : vector<8x1xf32> to vector<8x288xf32>
    %149 = arith.addf %146, %148 : vector<8x288xf32>
    %cst_90 = arith.constant 0.000000e+00 : f32
    %cst_91 = arith.constant 1.270000e+02 : f32
    %150 = vector.broadcast %cst_90 : f32 to vector<8x288xf32>
    %151 = arith.maximumf %150, %149 : vector<8x288xf32>
    %152 = vector.broadcast %cst_91 : f32 to vector<8x288xf32>
    %153 = arith.minimumf %152, %151 : vector<8x288xf32>
    %cst_92 = arith.constant 5.000000e-01 : f32
    %154 = vector.broadcast %cst_92 : f32 to vector<8x288xf32>
    %155 = arith.mulf %153, %154 : vector<8x288xf32>
    %156 = math.roundeven %155 : vector<8x288xf32>
    %cst_93 = arith.constant -1.280000e+02 : f32
    %cst_94 = arith.constant 1.270000e+02 : f32
    %157 = vector.broadcast %cst_93 : f32 to vector<8x288xf32>
    %158 = arith.maximumf %157, %156 : vector<8x288xf32>
    %159 = vector.broadcast %cst_94 : f32 to vector<8x288xf32>
    %160 = arith.minimumf %159, %158 : vector<8x288xf32>
    %c0_95 = arith.constant 0 : index
    %c0_96 = arith.constant 0 : index
    %161 = vector.load %arg8[%c0_95, %c0_96] : memref<1x128xf32, #tpu.memory_space<vmem>>, vector<1x128xf32>
    %162 = vector.extract_strided_slice %160 {offsets = [0, 0], sizes = [1, 288], strides = [1, 1]} : vector<8x288xf32> to vector<1x288xf32>
    %163 = arith.truncf %162 : vector<1x288xf32> to vector<1x288xbf16>
    %c0_97 = arith.constant 0 : index
    %c0_98 = arith.constant 0 : index
    %c0_99 = arith.constant 0 : index
    %164 = vector.load %arg7[%c0_97, %c0_98, %c0_99] : memref<8x288x128xbf16, #tpu.memory_space<vmem>>, vector<1x288x128xbf16>
    %165 = vector.shape_cast %164 : vector<1x288x128xbf16> to vector<288x128xbf16>
    %cst_100 = arith.constant dense<0.000000e+00> : vector<1x128xf32>
    %166 = tpu.matmul %163, %165, %cst_100 {dimension_numbers = #tpu.dot_dimension_numbers<[1], [0], [0], [1], [0, 0, 1, 1], [], []>} : vector<1x288xbf16>, vector<288x128xbf16>, vector<1x128xf32> -> vector<1x128xf32>
    %167 = arith.addf %161, %166 : vector<1x128xf32>
    %168 = vector.extract_strided_slice %160 {offsets = [1, 0], sizes = [1, 288], strides = [1, 1]} : vector<8x288xf32> to vector<1x288xf32>
    %169 = arith.truncf %168 : vector<1x288xf32> to vector<1x288xbf16>
    %c1_101 = arith.constant 1 : index
    %c0_102 = arith.constant 0 : index
    %c0_103 = arith.constant 0 : index
    %170 = vector.load %arg7[%c1_101, %c0_102, %c0_103] : memref<8x288x128xbf16, #tpu.memory_space<vmem>>, vector<1x288x128xbf16>
    %171 = vector.shape_cast %170 : vector<1x288x128xbf16> to vector<288x128xbf16>
    %cst_104 = arith.constant dense<0.000000e+00> : vector<1x128xf32>
    %172 = tpu.matmul %169, %171, %cst_104 {dimension_numbers = #tpu.dot_dimension_numbers<[1], [0], [0], [1], [0, 0, 1, 1], [], []>} : vector<1x288xbf16>, vector<288x128xbf16>, vector<1x128xf32> -> vector<1x128xf32>
    %173 = arith.addf %167, %172 : vector<1x128xf32>
    %174 = vector.extract_strided_slice %160 {offsets = [2, 0], sizes = [1, 288], strides = [1, 1]} : vector<8x288xf32> to vector<1x288xf32>
    %175 = arith.truncf %174 : vector<1x288xf32> to vector<1x288xbf16>
    %c2_105 = arith.constant 2 : index
    %c0_106 = arith.constant 0 : index
    %c0_107 = arith.constant 0 : index
    %176 = vector.load %arg7[%c2_105, %c0_106, %c0_107] : memref<8x288x128xbf16, #tpu.memory_space<vmem>>, vector<1x288x128xbf16>
    %177 = vector.shape_cast %176 : vector<1x288x128xbf16> to vector<288x128xbf16>
    %cst_108 = arith.constant dense<0.000000e+00> : vector<1x128xf32>
    %178 = tpu.matmul %175, %177, %cst_108 {dimension_numbers = #tpu.dot_dimension_numbers<[1], [0], [0], [1], [0, 0, 1, 1], [], []>} : vector<1x288xbf16>, vector<288x128xbf16>, vector<1x128xf32> -> vector<1x128xf32>
    %179 = arith.addf %173, %178 : vector<1x128xf32>
    %180 = vector.extract_strided_slice %160 {offsets = [3, 0], sizes = [1, 288], strides = [1, 1]} : vector<8x288xf32> to vector<1x288xf32>
    %181 = arith.truncf %180 : vector<1x288xf32> to vector<1x288xbf16>
    %c3_109 = arith.constant 3 : index
    %c0_110 = arith.constant 0 : index
    %c0_111 = arith.constant 0 : index
    %182 = vector.load %arg7[%c3_109, %c0_110, %c0_111] : memref<8x288x128xbf16, #tpu.memory_space<vmem>>, vector<1x288x128xbf16>
    %183 = vector.shape_cast %182 : vector<1x288x128xbf16> to vector<288x128xbf16>
    %cst_112 = arith.constant dense<0.000000e+00> : vector<1x128xf32>
    %184 = tpu.matmul %181, %183, %cst_112 {dimension_numbers = #tpu.dot_dimension_numbers<[1], [0], [0], [1], [0, 0, 1, 1], [], []>} : vector<1x288xbf16>, vector<288x128xbf16>, vector<1x128xf32> -> vector<1x128xf32>
    %185 = arith.addf %179, %184 : vector<1x128xf32>
    %186 = vector.extract_strided_slice %160 {offsets = [4, 0], sizes = [1, 288], strides = [1, 1]} : vector<8x288xf32> to vector<1x288xf32>
    %187 = arith.truncf %186 : vector<1x288xf32> to vector<1x288xbf16>
    %c4_113 = arith.constant 4 : index
    %c0_114 = arith.constant 0 : index
    %c0_115 = arith.constant 0 : index
    %188 = vector.load %arg7[%c4_113, %c0_114, %c0_115] : memref<8x288x128xbf16, #tpu.memory_space<vmem>>, vector<1x288x128xbf16>
    %189 = vector.shape_cast %188 : vector<1x288x128xbf16> to vector<288x128xbf16>
    %cst_116 = arith.constant dense<0.000000e+00> : vector<1x128xf32>
    %190 = tpu.matmul %187, %189, %cst_116 {dimension_numbers = #tpu.dot_dimension_numbers<[1], [0], [0], [1], [0, 0, 1, 1], [], []>} : vector<1x288xbf16>, vector<288x128xbf16>, vector<1x128xf32> -> vector<1x128xf32>
    %191 = arith.addf %185, %190 : vector<1x128xf32>
    %192 = vector.extract_strided_slice %160 {offsets = [5, 0], sizes = [1, 288], strides = [1, 1]} : vector<8x288xf32> to vector<1x288xf32>
    %193 = arith.truncf %192 : vector<1x288xf32> to vector<1x288xbf16>
    %c5_117 = arith.constant 5 : index
    %c0_118 = arith.constant 0 : index
    %c0_119 = arith.constant 0 : index
    %194 = vector.load %arg7[%c5_117, %c0_118, %c0_119] : memref<8x288x128xbf16, #tpu.memory_space<vmem>>, vector<1x288x128xbf16>
    %195 = vector.shape_cast %194 : vector<1x288x128xbf16> to vector<288x128xbf16>
    %cst_120 = arith.constant dense<0.000000e+00> : vector<1x128xf32>
    %196 = tpu.matmul %193, %195, %cst_120 {dimension_numbers = #tpu.dot_dimension_numbers<[1], [0], [0], [1], [0, 0, 1, 1], [], []>} : vector<1x288xbf16>, vector<288x128xbf16>, vector<1x128xf32> -> vector<1x128xf32>
    %197 = arith.addf %191, %196 : vector<1x128xf32>
    %198 = vector.extract_strided_slice %160 {offsets = [6, 0], sizes = [1, 288], strides = [1, 1]} : vector<8x288xf32> to vector<1x288xf32>
    %199 = arith.truncf %198 : vector<1x288xf32> to vector<1x288xbf16>
    %c6_121 = arith.constant 6 : index
    %c0_122 = arith.constant 0 : index
    %c0_123 = arith.constant 0 : index
    %200 = vector.load %arg7[%c6_121, %c0_122, %c0_123] : memref<8x288x128xbf16, #tpu.memory_space<vmem>>, vector<1x288x128xbf16>
    %201 = vector.shape_cast %200 : vector<1x288x128xbf16> to vector<288x128xbf16>
    %cst_124 = arith.constant dense<0.000000e+00> : vector<1x128xf32>
    %202 = tpu.matmul %199, %201, %cst_124 {dimension_numbers = #tpu.dot_dimension_numbers<[1], [0], [0], [1], [0, 0, 1, 1], [], []>} : vector<1x288xbf16>, vector<288x128xbf16>, vector<1x128xf32> -> vector<1x128xf32>
    %203 = arith.addf %197, %202 : vector<1x128xf32>
    %204 = vector.extract_strided_slice %160 {offsets = [7, 0], sizes = [1, 288], strides = [1, 1]} : vector<8x288xf32> to vector<1x288xf32>
    %205 = arith.truncf %204 : vector<1x288xf32> to vector<1x288xbf16>
    %c7_125 = arith.constant 7 : index
    %c0_126 = arith.constant 0 : index
    %c0_127 = arith.constant 0 : index
    %206 = vector.load %arg7[%c7_125, %c0_126, %c0_127] : memref<8x288x128xbf16, #tpu.memory_space<vmem>>, vector<1x288x128xbf16>
    %207 = vector.shape_cast %206 : vector<1x288x128xbf16> to vector<288x128xbf16>
    %cst_128 = arith.constant dense<0.000000e+00> : vector<1x128xf32>
    %208 = tpu.matmul %205, %207, %cst_128 {dimension_numbers = #tpu.dot_dimension_numbers<[1], [0], [0], [1], [0, 0, 1, 1], [], []>} : vector<1x288xbf16>, vector<288x128xbf16>, vector<1x128xf32> -> vector<1x128xf32>
    %209 = arith.addf %203, %208 : vector<1x128xf32>
    %210 = vector.shape_cast %209 : vector<1x128xf32> to vector<1x128xf32>
    %211 = vector.broadcast %210 : vector<1x128xf32> to vector<8x128xf32>
    %c0_129 = arith.constant 0 : index
    %c0_130 = arith.constant 0 : index
    %c0_131 = arith.constant 0 : index
    %212 = vector.load %arg9[%c0_129, %c0_130, %c0_131] : memref<1x8x128xf32, #tpu.memory_space<vmem>>, vector<1x8x128xf32>
    %213 = vector.shape_cast %212 : vector<1x8x128xf32> to vector<8x128xf32>
    %214 = vector.shape_cast %211 : vector<8x128xf32> to vector<1x8x128xf32>
    tpu.vector_store %arg9[%c0_129, %c0_130, %c0_131], %214 {strides = array<i32>} : memref<1x8x128xf32, #tpu.memory_space<vmem>>, vector<1x8x128xf32>,
    return
  }
  func.func @transform_0(%arg0: i32) -> (i32, i32, i32) {
    %c0_i32 = arith.constant 0 : i32
    %c0_i32_0 = arith.constant 0 : i32
    %c0_i32_1 = arith.constant 0 : i32
    return %arg0, %c0_i32, %c0_i32_0 : i32, i32, i32
  }
  func.func @transform_1(%arg0: i32) -> (i32, i32) {
    %c0_i32 = arith.constant 0 : i32
    %c0_i32_0 = arith.constant 0 : i32
    %c0_i32_1 = arith.constant 0 : i32
    return %c0_i32, %c0_i32_0 : i32, i32
  }
  func.func @transform_2(%arg0: i32) -> (i32, i32, i32) {
    %c0_i32 = arith.constant 0 : i32
    %c0_i32_0 = arith.constant 0 : i32
    %c0_i32_1 = arith.constant 0 : i32
    %c0_i32_2 = arith.constant 0 : i32
    return %c0_i32, %c0_i32_0, %c0_i32_1 : i32, i32, i32
  }
  func.func @transform_3(%arg0: i32) -> (i32, i32) {
    %c0_i32 = arith.constant 0 : i32
    %c0_i32_0 = arith.constant 0 : i32
    %c0_i32_1 = arith.constant 0 : i32
    return %c0_i32, %c0_i32_0 : i32, i32
  }
  func.func @transform_4(%arg0: i32) -> (i32, i32, i32) {
    %c0_i32 = arith.constant 0 : i32
    %c0_i32_0 = arith.constant 0 : i32
    %c0_i32_1 = arith.constant 0 : i32
    %c0_i32_2 = arith.constant 0 : i32
    return %c0_i32, %c0_i32_0, %c0_i32_1 : i32, i32, i32
  }
  func.func @transform_5(%arg0: i32) -> (i32, i32) {
    %c0_i32 = arith.constant 0 : i32
    %c0_i32_0 = arith.constant 0 : i32
    %c0_i32_1 = arith.constant 0 : i32
    return %c0_i32, %c0_i32_0 : i32, i32
  }
  func.func @transform_6(%arg0: i32) -> (i32, i32, i32) {
    %c0_i32 = arith.constant 0 : i32
    %c0_i32_0 = arith.constant 0 : i32
    %c0_i32_1 = arith.constant 0 : i32
    %c0_i32_2 = arith.constant 0 : i32
    return %c0_i32, %c0_i32_0, %c0_i32_1 : i32, i32, i32
  }
  func.func @transform_7(%arg0: i32) -> (i32, i32) {
    %c0_i32 = arith.constant 0 : i32
    %c0_i32_0 = arith.constant 0 : i32
    %c0_i32_1 = arith.constant 0 : i32
    return %c0_i32, %c0_i32_0 : i32, i32
  }
  func.func @transform_8(%arg0: i32) -> (i32, i32, i32) {
    %c0_i32 = arith.constant 0 : i32
    %c0_i32_0 = arith.constant 0 : i32
    %c0_i32_1 = arith.constant 0 : i32
    return %arg0, %c0_i32, %c0_i32_0 : i32, i32, i32
  }
}

</mosaic_0001>

<llo_original>
// kernel: tpu_custom_call.1
$region0: #{tpu_custom_call.1}
  #allocation0 [shape = 'u32[]', space=smem, size = 0x4, offset = 0x4, fixed_abs, tag = 'smem constant byte address 0x4 - core index']
  #allocation1 [shape = 'u32[144,128]{1,0:T(1,128)}', space=vmem, size = 0x12000, scoped, tag = 'internal scratch']
  #allocation2 [shape = 'f32[8,328]{1,0:T(8,128)}', space=vmem, size = 0x3000, scoped, tag = 'scratch operand']
  %s0 = inlined_call_operand.vmem [shape: f32[2,8,328], index: 0, kind: input, shape index: {}]
  %s1 = inlined_call_operand.vmem [shape: f32[1,288], index: 1, kind: input, shape index: {}]
  %s2 = inlined_call_operand.vmem [shape: bf16[9,8,8], index: 2, kind: input, shape index: {}]
  %s3 = inlined_call_operand.vmem [shape: f32[8,1], index: 3, kind: input, shape index: {}]
  %s4 = inlined_call_operand.vmem [shape: bf16[9,8,8], index: 4, kind: input, shape index: {}]
  %s5 = inlined_call_operand.vmem [shape: f32[8,1], index: 5, kind: input, shape index: {}]
  %s6 = inlined_call_operand.hbm [shape: bf16[8,288,128], index: 6, kind: input, shape index: {}]
  %s7 = inlined_call_operand.vmem [shape: f32[1,128], index: 7, kind: input, shape index: {}]
  %s8 = inlined_call_operand.hbm [shape: f32[2,8,128], index: 8, kind: output, shape index: {}]
  %s9 = sld [smem:[#allocation0]]
  $region69: #{tpu_custom_call.1} parent=0
    _
  %s11 = ssub.s32 1, %s9
  %s12 = scalar_select 0, %s11, %s9
  $region1: #{tpu_custom_call.1} parent=0
    #allocation3 [shape = 'u8[589824]{0}', space=vmem, size = 0x90000, scoped, tag = 'input window, operand 6, single buffered']
    #allocation4 [shape = 's32[2]{0}', space=sflag, size = 0x8, scoped, tag = 'scoped memory for tpu_custom_call.1']
    #allocation5 [shape = 's32[2]{0}', space=sflag, size = 0x8, scoped, tag = 'scoped memory for tpu_custom_call.1']
    #allocation6 [shape = 'u8[8192]{0}', space=vmem, size = 0x2000, scoped, tag = 'output window, operand 0']
    %13 = vsyncpa [#allocation4], 0
    %14 = vsyncpa [#allocation5], 0
    %s15 = scalar_lea.sflag [#allocation5], 1
    %16 = vsyncpa %s15, 0
    loop: start=0, step=1, limit=4
    $region2: #{tpu_custom_call.1} parent=1 // loop_pre_header
      _
    $region3: #{tpu_custom_call.1} parent=1 // loop_header
      %s18 = sphi 0, %s22
      %p19 = scmp.ge.s32.totalorder %s18, 4
      %s28 = sphi 0, %s30
      %s31 = sphi 0, %s28
      %s32 = sphi 0, %s31
      %s48 = sphi 0, %s32
      %s52 = sphi 0, %s52
      %s54 = sphi 0, %s52
      %s55 = sphi 0, %s54
      %s69 = sphi 0, %s55
      %s73 = sphi 0, %s73
      %s75 = sphi 0, %s73
      %s76 = sphi 0, %s75
      %s90 = sphi 0, %s76
      %s94 = sphi 0, %s94
      %s96 = sphi 0, %s94
      %s97 = sphi 0, %s96
      %s111 = sphi 0, %s97
      %s115 = sphi 0, %s115
      %s117 = sphi 0, %s115
      %s118 = sphi 0, %s117
      %s132 = sphi 0, %s118
      %s136 = sphi 0, %s136
      %s138 = sphi 0, %s136
      %s139 = sphi 0, %s138
      %s153 = sphi 0, %s139
      %s157 = sphi 0, %s157
      %s159 = sphi 0, %s157
      %s160 = sphi 0, %s159
      %s174 = sphi 0, %s160
      %s178 = sphi 0, %s178
      %s180 = sphi 0, %s178
      %s181 = sphi 0, %s180
      %s195 = sphi 0, %s181
      %s201 = sphi 0, %s203
      %s204 = sphi 0, %s201
      %s205 = sphi 0, %s204
      %s221 = sphi 0, %s205
    $region4: #{tpu_custom_call.1} parent=1 // loop_header_branch
      %21 = sbr.rel (%p19) target = $region8
    $region5: #{tpu_custom_call.1} parent=1 // loop_body
      %s23 = ssub.s32 %s18, 1
      %s24 = ssub.s32 %s18, 2
      %s25 = sadd.s32 %s18, 1
      %s26 = ssub.s32 %s18, %s25
      %p27 = scmp.eq.s32.totalorder %s26, 0
      %s29 = sadd.s32 %s28, 1
      %s30 = scalar_select %p27, %s28, %s29
      %p33 = pneg %p27
      %p34 = scmp.eq.s32.totalorder %s18, 1
      %p35 = por %p33, %p34
      %p36 = scmp.ne.s32.totalorder %s28, %s31
      %p37 = scmp.eq.s32.totalorder %s18, 0
      %p38 = por %p36, %p37
      %p39 = scmp.ne.s32.totalorder %s28, %s31
      %p40 = scmp.eq.s32.totalorder %s23, 1
      %p41 = por %p39, %p40
      %p42 = scmp.ne.s32.totalorder %s31, %s32
      %p43 = scmp.eq.s32.totalorder %s23, 0
      %p44 = por %p42, %p43
      %p45 = scmp.ne.s32.totalorder %s31, %s32
      %p46 = scmp.eq.s32.totalorder %s24, 1
      %p47 = por %p45, %p46
      %p49 = scmp.ne.s32.totalorder %s32, %s48
      %p50 = scmp.eq.s32.totalorder %s24, 0
      %p51 = por %p49, %p50
      %s53 = sadd.s32 %s52, 1
      %p56 = scmp.eq.s32.totalorder %s18, 1
      %p57 = scmp.ne.s32.totalorder %s52, %s54
      %p58 = scmp.eq.s32.totalorder %s18, 0
      %p59 = por %p57, %p58
      %p60 = scmp.ne.s32.totalorder %s52, %s54
      %p61 = scmp.eq.s32.totalorder %s23, 1
      %p62 = por %p60, %p61
      %p63 = scmp.ne.s32.totalorder %s54, %s55
      %p64 = scmp.eq.s32.totalorder %s23, 0
      %p65 = por %p63, %p64
      %p66 = scmp.ne.s32.totalorder %s54, %s55
      %p67 = scmp.eq.s32.totalorder %s24, 1
      %p68 = por %p66, %p67
      %p70 = scmp.ne.s32.totalorder %s55, %s69
      %p71 = scmp.eq.s32.totalorder %s24, 0
      %p72 = por %p70, %p71
      %s74 = sadd.s32 %s73, 1
      %p77 = scmp.eq.s32.totalorder %s18, 1
      %p78 = scmp.ne.s32.totalorder %s73, %s75
      %p79 = scmp.eq.s32.totalorder %s18, 0
      %p80 = por %p78, %p79
      %p81 = scmp.ne.s32.totalorder %s73, %s75
      %p82 = scmp.eq.s32.totalorder %s23, 1
      %p83 = por %p81, %p82
      %p84 = scmp.ne.s32.totalorder %s75, %s76
      %p85 = scmp.eq.s32.totalorder %s23, 0
      %p86 = por %p84, %p85
      %p87 = scmp.ne.s32.totalorder %s75, %s76
      %p88 = scmp.eq.s32.totalorder %s24, 1
      %p89 = por %p87, %p88
      %p91 = scmp.ne.s32.totalorder %s76, %s90
      %p92 = scmp.eq.s32.totalorder %s24, 0
      %p93 = por %p91, %p92
      %s95 = sadd.s32 %s94, 1
      %p98 = scmp.eq.s32.totalorder %s18, 1
      %p99 = scmp.ne.s32.totalorder %s94, %s96
      %p100 = scmp.eq.s32.totalorder %s18, 0
      %p101 = por %p99, %p100
      %p102 = scmp.ne.s32.totalorder %s94, %s96
      %p103 = scmp.eq.s32.totalorder %s23, 1
      %p104 = por %p102, %p103
      %p105 = scmp.ne.s32.totalorder %s96, %s97
      %p106 = scmp.eq.s32.totalorder %s23, 0
      %p107 = por %p105, %p106
      %p108 = scmp.ne.s32.totalorder %s96, %s97
      %p109 = scmp.eq.s32.totalorder %s24, 1
      %p110 = por %p108, %p109
      %p112 = scmp.ne.s32.totalorder %s97, %s111
      %p113 = scmp.eq.s32.totalorder %s24, 0
      %p114 = por %p112, %p113
      %s116 = sadd.s32 %s115, 1
      %p119 = scmp.eq.s32.totalorder %s18, 1
      %p120 = scmp.ne.s32.totalorder %s115, %s117
      %p121 = scmp.eq.s32.totalorder %s18, 0
      %p122 = por %p120, %p121
      %p123 = scmp.ne.s32.totalorder %s115, %s117
      %p124 = scmp.eq.s32.totalorder %s23, 1
      %p125 = por %p123, %p124
      %p126 = scmp.ne.s32.totalorder %s117, %s118
      %p127 = scmp.eq.s32.totalorder %s23, 0
      %p128 = por %p126, %p127
      %p129 = scmp.ne.s32.totalorder %s117, %s118
      %p130 = scmp.eq.s32.totalorder %s24, 1
      %p131 = por %p129, %p130
      %p133 = scmp.ne.s32.totalorder %s118, %s132
      %p134 = scmp.eq.s32.totalorder %s24, 0
      %p135 = por %p133, %p134
      %s137 = sadd.s32 %s136, 1
      %p140 = scmp.eq.s32.totalorder %s18, 1
      %p141 = scmp.ne.s32.totalorder %s136, %s138
      %p142 = scmp.eq.s32.totalorder %s18, 0
      %p143 = por %p141, %p142
      %p144 = scmp.ne.s32.totalorder %s136, %s138
      %p145 = scmp.eq.s32.totalorder %s23, 1
      %p146 = por %p144, %p145
      %p147 = scmp.ne.s32.totalorder %s138, %s139
      %p148 = scmp.eq.s32.totalorder %s23, 0
      %p149 = por %p147, %p148
      %p150 = scmp.ne.s32.totalorder %s138, %s139
      %p151 = scmp.eq.s32.totalorder %s24, 1
      %p152 = por %p150, %p151
      %p154 = scmp.ne.s32.totalorder %s139, %s153
      %p155 = scmp.eq.s32.totalorder %s24, 0
      %p156 = por %p154, %p155
      %s158 = sadd.s32 %s157, 1
      %p161 = scmp.eq.s32.totalorder %s18, 1
      %p162 = scmp.ne.s32.totalorder %s157, %s159
      %p163 = scmp.eq.s32.totalorder %s18, 0
      %p164 = por %p162, %p163
      %p165 = scmp.ne.s32.totalorder %s157, %s159
      %p166 = scmp.eq.s32.totalorder %s23, 1
      %p167 = por %p165, %p166
      %p168 = scmp.ne.s32.totalorder %s159, %s160
      %p169 = scmp.eq.s32.totalorder %s23, 0
      %p170 = por %p168, %p169
      %p171 = scmp.ne.s32.totalorder %s159, %s160
      %p172 = scmp.eq.s32.totalorder %s24, 1
      %p173 = por %p171, %p172
      %p175 = scmp.ne.s32.totalorder %s160, %s174
      %p176 = scmp.eq.s32.totalorder %s24, 0
      %p177 = por %p175, %p176
      %s179 = sadd.s32 %s178, 1
      %p182 = scmp.eq.s32.totalorder %s18, 1
      %p183 = scmp.ne.s32.totalorder %s178, %s180
      %p184 = scmp.eq.s32.totalorder %s18, 0
      %p185 = por %p183, %p184
      %p186 = scmp.ne.s32.totalorder %s178, %s180
      %p187 = scmp.eq.s32.totalorder %s23, 1
      %p188 = por %p186, %p187
      %p189 = scmp.ne.s32.totalorder %s180, %s181
      %p190 = scmp.eq.s32.totalorder %s23, 0
      %p191 = por %p189, %p190
      %p192 = scmp.ne.s32.totalorder %s180, %s181
      %p193 = scmp.eq.s32.totalorder %s24, 1
      %p194 = por %p192, %p193
      %p196 = scmp.ne.s32.totalorder %s181, %s195
      %p197 = scmp.eq.s32.totalorder %s24, 0
      %p198 = por %p196, %p197
      %s199 = ssub.s32 %s18, %s25
      %p200 = scmp.eq.s32.totalorder %s199, 0
      %s202 = sadd.s32 %s201, 1
      %s203 = scalar_select %p200, %s201, %s202
      %p206 = pneg %p200
      %p207 = scmp.eq.s32.totalorder %s18, 1
      %p208 = por %p206, %p207
      %p209 = scmp.ne.s32.totalorder %s201, %s204
      %p210 = scmp.eq.s32.totalorder %s18, 0
      %p211 = por %p209, %p210
      %p212 = scmp.ne.s32.totalorder %s201, %s204
      %p213 = scmp.eq.s32.totalorder %s23, 1
      %p214 = por %p212, %p213
      %p215 = scmp.ne.s32.totalorder %s204, %s205
      %p216 = scmp.eq.s32.totalorder %s23, 0
      %p217 = por %p215, %p216
      %p218 = scmp.ne.s32.totalorder %s204, %s205
      %p219 = scmp.eq.s32.totalorder %s24, 1
      %p220 = por %p218, %p219
      %p222 = scmp.ne.s32.totalorder %s205, %s221
      %p223 = scmp.eq.s32.totalorder %s24, 0
      %p224 = por %p222, %p223
      %p225 = scmp.le.s32.totalorder 1, %s18
      %p226 = scmp.lt.s32.totalorder %s18, 3
      %p227 = pnand %p225, %p226
      %p228 = pneg %p227
      // Predicated region
      $region9: #{tpu_custom_call.1} parent=5 // pred_check
        _
      $region10: #{tpu_custom_call.1} parent=5 // pred_check_branch
        %230 = sbr.rel (%p227) target = $region12
      $region11: #{tpu_custom_call.1} parent=5 // pred_region
        %s231 = ssub.s32 %s18, 1
        // Predicated region
        $region13: #{tpu_custom_call.1} parent=11 // pred_check
          %p232 = pneg %p65
        $region14: #{tpu_custom_call.1} parent=11 // pred_check_branch
          %234 = sbr.rel (%p232) target = $region16
        $region15: #{tpu_custom_call.1} parent=11 // pred_region
          _
        $region16: #{tpu_custom_call.1} parent=11 // pred_fallthru
          _
        // Predicated region
        $region17: #{tpu_custom_call.1} parent=11 // pred_check
          %p235 = pneg %p86
        $region18: #{tpu_custom_call.1} parent=11 // pred_check_branch
          %237 = sbr.rel (%p235) target = $region20
        $region19: #{tpu_custom_call.1} parent=11 // pred_region
          _
        $region20: #{tpu_custom_call.1} parent=11 // pred_fallthru
          _
        // Predicated region
        $region21: #{tpu_custom_call.1} parent=11 // pred_check
          %p238 = pneg %p107
        $region22: #{tpu_custom_call.1} parent=11 // pred_check_branch
          %240 = sbr.rel (%p238) target = $region24
        $region23: #{tpu_custom_call.1} parent=11 // pred_region
          _
        $region24: #{tpu_custom_call.1} parent=11 // pred_fallthru
          _
        // Predicated region
        $region25: #{tpu_custom_call.1} parent=11 // pred_check
          %p241 = pneg %p128
        $region26: #{tpu_custom_call.1} parent=11 // pred_check_branch
          %243 = sbr.rel (%p241) target = $region28
        $region27: #{tpu_custom_call.1} parent=11 // pred_region
          _
        $region28: #{tpu_custom_call.1} parent=11 // pred_fallthru
          _
        // Predicated region
        $region29: #{tpu_custom_call.1} parent=11 // pred_check
          %p244 = pneg %p149
        $region30: #{tpu_custom_call.1} parent=11 // pred_check_branch
          %246 = sbr.rel (%p244) target = $region32
        $region31: #{tpu_custom_call.1} parent=11 // pred_region
          _
        $region32: #{tpu_custom_call.1} parent=11 // pred_fallthru
          _
        // Predicated region
        $region33: #{tpu_custom_call.1} parent=11 // pred_check
          %p247 = pneg %p170
        $region34: #{tpu_custom_call.1} parent=11 // pred_check_branch
          %249 = sbr.rel (%p247) target = $region36
        $region35: #{tpu_custom_call.1} parent=11 // pred_region
          %s251 = ssub.s32 18432, 18432
          %252 = vsyncadd [#allocation4], %s251
          %s253 = sshll.u32 [#allocation3], 4
          %s254 = int_to_ptr.vmem [resolvable:$true] %s253
          %259 = dma.hbm_to_vmem [thread:$0]  %s6, 18432, %s254, [#allocation4], 64, 64, 4
        $region36: #{tpu_custom_call.1} parent=11 // pred_fallthru
          _
        // Predicated region
        $region37: #{tpu_custom_call.1} parent=11 // pred_check
          %p260 = pneg %p191
        $region38: #{tpu_custom_call.1} parent=11 // pred_check_branch
          %262 = sbr.rel (%p260) target = $region40
        $region39: #{tpu_custom_call.1} parent=11 // pred_region
          _
        $region40: #{tpu_custom_call.1} parent=11 // pred_fallthru
          _
      $region12: #{tpu_custom_call.1} parent=5 // pred_fallthru
        _
      %p263 = scmp.lt.s32.totalorder %s18, 2
      // Predicated region
      $region41: #{tpu_custom_call.1} parent=5 // pred_check
        %p264 = pneg %p263
      $region42: #{tpu_custom_call.1} parent=5 // pred_check_branch
        %266 = sbr.rel (%p264) target = $region44
      $region43: #{tpu_custom_call.1} parent=5 // pred_region
        // Predicated region
        $region45: #{tpu_custom_call.1} parent=43 // pred_check
          %p267 = pneg %p38
        $region46: #{tpu_custom_call.1} parent=43 // pred_check_branch
          %269 = sbr.rel (%p267) target = $region48
        $region47: #{tpu_custom_call.1} parent=43 // pred_region
          %p270 = scmp.lt.s32.totalorder %s18, 1
          %s271 = scalar_select %p270, %s18, 1
          %s272 = smul.addr %s271, 3
          %s273 = smul.addr %s272, 8
          %s274 = scalar_lea.vmem %s0, %s273
        $region48: #{tpu_custom_call.1} parent=43 // pred_fallthru
          _
      $region44: #{tpu_custom_call.1} parent=5 // pred_fallthru
        _
      %p275 = scmp.le.s32.totalorder 1, %s18
      %p276 = scmp.lt.s32.totalorder %s18, 3
      %p277 = pnand %p275, %p276
      %p278 = pneg %p277
      // Predicated region
      $region49: #{tpu_custom_call.1} parent=5 // pred_check
        _
      $region50: #{tpu_custom_call.1} parent=5 // pred_check_branch
        %280 = sbr.rel (%p277) target = $region52
      $region51: #{tpu_custom_call.1} parent=5 // pred_region
        %s281 = ssub.s32 %s18, 1
        // Predicated region
        $region53: #{tpu_custom_call.1} parent=51 // pred_check
          %p282 = pneg %p170
        $region54: #{tpu_custom_call.1} parent=51 // pred_check_branch
          %284 = sbr.rel (%p282) target = $region56
        $region55: #{tpu_custom_call.1} parent=51 // pred_region
          %285 = dma.done [#allocation4], 18432
        $region56: #{tpu_custom_call.1} parent=51 // pred_fallthru
          _
        %p286 = scmp.lt.s32.totalorder %s23, 1
        %s287 = scalar_select %p286, %s23, 1
        %s288 = smul.addr %s287, 3
        %s289 = smul.addr %s288, 8
        %s290 = scalar_lea.vmem %s0, %s289
        %p291 = pneg %p44
        %p292 = pneg %p41
        %p293 = pneg %p65
        %p294 = pneg %p62
        %p295 = pneg %p86
        %p296 = pneg %p83
        %p297 = pneg %p107
        %p298 = pneg %p104
        %p299 = pneg %p128
        %p300 = pneg %p125
        %p301 = pneg %p149
        %p302 = pneg %p146
        %p303 = pneg %p170
        %p304 = pneg %p167
        %p305 = pneg %p191
        %p306 = pneg %p188
        %p307 = pneg %p217
        %p308 = pneg %p214
        %s309 = sand.u32 %s204, 1
        %s310 = scalar_lea.sflag [#allocation5], %s309
        %s311 = sand.u32 %s204, 1
        %s312 = smul.addr %s311, 8
        %s313 = scalar_lea.vmem [#allocation6], %s312
        %p314 = scmp.lt.s32.totalorder %s23, 1
        %s315 = scalar_select %p314, %s23, 1
        %s316 = smul.addr %s315, 3
        %s317 = smul.addr %s316, 8
        %s318 = scalar_lea.vmem %s0, %s317
        %v320 = vld [vmem:[%s318] sm:$0xff]
        %v321 = vld [vmem:[%s318 + $0x8] sm:$0xff]
        %v322 = vld [vmem:[%s318 + $0x10] sm:$0xff]
        %v323 = vmul.f32 %v320, 255.0
        %v324 = vmul.f32 %v321, 255.0
        %v325 = vmul.f32 %v322, 255.0
        %v326 = vround.ne.pseudo %v323
        %v327 = vround.ne.pseudo %v324
        %v328 = vround.ne.pseudo %v325
        %v329 = vmax.f32 %v326, -128.0
        %v330 = vmax.f32 %v327, -128.0
        %v331 = vmax.f32 %v328, -128.0
        %v332 = vmin.f32 %v329, 127.0
        %v333 = vmin.f32 %v330, 127.0
        %v334 = vmin.f32 %v331, 127.0
        %v335 = vmul.f32 %v332, 0.5
        %v336 = vmul.f32 %v333, 0.5
        %v337 = vmul.f32 %v334, 0.5
        %v338 = vround.ne.pseudo %v335
        %v339 = vround.ne.pseudo %v336
        %v340 = vround.ne.pseudo %v337
        %v341 = vmax.f32 %v338, -128.0
        %v342 = vmax.f32 %v339, -128.0
        %v343 = vmax.f32 %v340, -128.0
        %v344 = vmin.f32 %v341, 127.0
        %v345 = vmin.f32 %v342, 127.0
        %v346 = vmin.f32 %v343, 127.0
        %v347 = vld [vmem:[%s2] sm:$0xf]
        %v348 = vpack.c.bf16 %v344, %v344
        %v349 = vpack.c.bf16 %v345, %v345
        %v350 = vpack.c.bf16 %v346, %v346
        %s351 = scalar_lea.vmem %s2, 4
        %v352 = vld [vmem:[%s351] sm:$0xf]
        %356 = vrot.lane.b32.xlu0 %v348, 127
        %v357 = vpop.permute.xlu0 %356
        %358 = vrot.lane.b32.xlu0 %v349, 127
        %v359 = vpop.permute.xlu0 %358
        %360 = vrot.lane.b32.xlu0 %v350, 127
        %v361 = vpop.permute.xlu0 %360
        %vm362 = vcmask 1039360
        %v363 = vsel %vm362, %v357, %v359
        %v364 = vsel %vm362, %v359, %v361
        %vm365 = vcmask 64512
        %v367 = vsel %vm365, %v352, 0
        %vm369 = vcmask 1043456
        %v371 = vsel %vm369, %v363, 0
        %v374 = vsel %vm369, %v364, 0
        %v377 = vsel %vm369, %v361, 0
        %379 = vmatprep.subr.bf16.mxu0 0
        %380 = vmatpush1.bf16.msra.mxu0 0
        %381 = vmatprep.subr.bf16.mxu0 0
        %382 = vmatpush1.bf16.msra.mxu0 0
        %383 = vmatprep.subr.bf16.mxu0 0
        %384 = vmatpush1.bf16.msra.mxu0 0
        %385 = vmatprep.subr.bf16.mxu0 0
        %386 = vmatpush1.bf16.msra.mxu0 0
        %387 = vmatprep.subr.bf16.mxu0 0
        %388 = vmatpush1.bf16.msra.mxu0 0
        %389 = vmatprep.subr.bf16.mxu0 0
        %390 = vmatpush1.bf16.msra.mxu0 0
        %391 = vmatprep.subr.bf16.mxu0 0
        %392 = vmatpush1.bf16.msra.mxu0 0
        %393 = vmatprep.subr.bf16.mxu0 %v374
        %394 = vmatpush1.bf16.msra.mxu0 %v371
        %395 = vmatprep.subr.bf16.mxu0 0
        %396 = vmatpush2.bf16.msra.mxu0 0
        %397 = vmatprep.subr.bf16.mxu0 0
        %398 = vmatpush2.bf16.msra.mxu0 0
        %399 = vmatprep.subr.bf16.mxu0 0
        %400 = vmatpush2.bf16.msra.mxu0 0
        %401 = vmatprep.subr.bf16.mxu0 0
        %402 = vmatpush2.bf16.msra.mxu0 0
        %403 = vmatprep.subr.bf16.mxu0 0
        %404 = vmatpush2.bf16.msra.mxu0 0
        %405 = vmatprep.subr.bf16.mxu0 0
        %406 = vmatpush2.bf16.msra.mxu0 0
        %407 = vmatprep.subr.bf16.mxu0 0
        %408 = vmatpush2.bf16.msra.mxu0 0
        %409 = vmatprep.subr.bf16.mxu0 0
        %410 = vmatpush2.bf16.msra.mxu0 0
        %411 = vmatprep.mubr.bf16.mxu0 0
        %412 = vmatmul.mubr.bf16.gmra.mxu0 %v367
        %v413 = vpop.f32.mrf.mxu0
        %v414 = vadd.f32 0.0, %v413
        %v415 = vpop.f32.mrf.mxu0
        %v416 = vadd.f32 0.0, %v415
        %v417 = vpop.f32.mrf.mxu0
        %v418 = vpop.f32.mrf.mxu0
        %419 = vdwg.mxu0
        %420 = vmatprep.subr.bf16.mxu0 0
        %421 = vmatpush1.bf16.msra.mxu0 0
        %422 = vmatprep.subr.bf16.mxu0 0
        %423 = vmatpush1.bf16.msra.mxu0 0
        %424 = vmatprep.subr.bf16.mxu0 0
        %425 = vmatpush1.bf16.msra.mxu0 0
        %426 = vmatprep.subr.bf16.mxu0 0
        %427 = vmatpush1.bf16.msra.mxu0 0
        %428 = vmatprep.subr.bf16.mxu0 0
        %429 = vmatpush1.bf16.msra.mxu0 0
        %430 = vmatprep.subr.bf16.mxu0 0
        %431 = vmatpush1.bf16.msra.mxu0 0
        %432 = vmatprep.subr.bf16.mxu0 0
        %433 = vmatpush1.bf16.msra.mxu0 0
        %434 = vmatprep.subr.bf16.mxu0 0
        %435 = vmatpush1.bf16.msra.mxu0 %v377
        %436 = vmatprep.subr.bf16.mxu0 0
        %437 = vmatpush2.bf16.msra.mxu0 0
        %438 = vmatprep.subr.bf16.mxu0 0
        %439 = vmatpush2.bf16.msra.mxu0 0
        %440 = vmatprep.subr.bf16.mxu0 0
        %441 = vmatpush2.bf16.msra.mxu0 0
        %442 = vmatprep.subr.bf16.mxu0 0
        %443 = vmatpush2.bf16.msra.mxu0 0
        %444 = vmatprep.subr.bf16.mxu0 0
        %445 = vmatpush2.bf16.msra.mxu0 0
        %446 = vmatprep.subr.bf16.mxu0 0
        %447 = vmatpush2.bf16.msra.mxu0 0
        %448 = vmatprep.subr.bf16.mxu0 0
        %449 = vmatpush2.bf16.msra.mxu0 0
        %450 = vmatprep.subr.bf16.mxu0 0
        %451 = vmatpush2.bf16.msra.mxu0 0
        %452 = vmatprep.mubr.bf16.mxu0 0
        %453 = vmatmul.mubr.bf16.gmra.mxu0 %v367
        %v454 = vpop.f32.mrf.mxu0
        %v455 = vadd.f32 0.0, %v454
        %v456 = vpop.f32.mrf.mxu0
        %v457 = vpop.f32.mrf.mxu0
        %v458 = vpop.f32.mrf.mxu0
        %459 = vdwg.mxu0
        %v461 = vsel %vm365, %v347, 0
        %v464 = vsel %vm369, %v348, 0
        %v467 = vsel %vm369, %v349, 0
        %v470 = vsel %vm369, %v350, 0
        %472 = vmatprep.subr.bf16.mxu0 0
        %473 = vmatpush1.bf16.msra.mxu0 0
        %474 = vmatprep.subr.bf16.mxu0 0
        %475 = vmatpush1.bf16.msra.mxu0 0
        %476 = vmatprep.subr.bf16.mxu0 0
        %477 = vmatpush1.bf16.msra.mxu0 0
        %478 = vmatprep.subr.bf16.mxu0 0
        %479 = vmatpush1.bf16.msra.mxu0 0
        %480 = vmatprep.subr.bf16.mxu0 0
        %481 = vmatpush1.bf16.msra.mxu0 0
        %482 = vmatprep.subr.bf16.mxu0 0
        %483 = vmatpush1.bf16.msra.mxu0 0
        %484 = vmatprep.subr.bf16.mxu0 0
        %485 = vmatpush1.bf16.msra.mxu0 0
        %486 = vmatprep.subr.bf16.mxu0 %v467
        %487 = vmatpush1.bf16.msra.mxu0 %v464
        %488 = vmatprep.subr.bf16.mxu0 0
        %489 = vmatpush2.bf16.msra.mxu0 0
        %490 = vmatprep.subr.bf16.mxu0 0
        %491 = vmatpush2.bf16.msra.mxu0 0
        %492 = vmatprep.subr.bf16.mxu0 0
        %493 = vmatpush2.bf16.msra.mxu0 0
        %494 = vmatprep.subr.bf16.mxu0 0
        %495 = vmatpush2.bf16.msra.mxu0 0
        %496 = vmatprep.subr.bf16.mxu0 0
        %497 = vmatpush2.bf16.msra.mxu0 0
        %498 = vmatprep.subr.bf16.mxu0 0
        %499 = vmatpush2.bf16.msra.mxu0 0
        %500 = vmatprep.subr.bf16.mxu0 0
        %501 = vmatpush2.bf16.msra.mxu0 0
        %502 = vmatprep.subr.bf16.mxu0 0
        %503 = vmatpush2.bf16.msra.mxu0 0
        %504 = vmatprep.mubr.bf16.mxu0 0
        %505 = vmatmul.mubr.bf16.gmra.mxu0 %v461
        %v506 = vpop.f32.mrf.mxu0
        %v507 = vadd.f32 %v414, %v506
        %v508 = vpop.f32.mrf.mxu0
        %v509 = vadd.f32 %v416, %v508
        %v510 = vpop.f32.mrf.mxu0
        %v511 = vpop.f32.mrf.mxu0
        %512 = vdwg.mxu0
        %513 = vmatprep.subr.bf16.mxu0 0
        %514 = vmatpush1.bf16.msra.mxu0 0
        %515 = vmatprep.subr.bf16.mxu0 0
        %516 = vmatpush1.bf16.msra.mxu0 0
        %517 = vmatprep.subr.bf16.mxu0 0
        %518 = vmatpush1.bf16.msra.mxu0 0
        %519 = vmatprep.subr.bf16.mxu0 0
        %520 = vmatpush1.bf16.msra.mxu0 0
        %521 = vmatprep.subr.bf16.mxu0 0
        %522 = vmatpush1.bf16.msra.mxu0 0
        %523 = vmatprep.subr.bf16.mxu0 0
        %524 = vmatpush1.bf16.msra.mxu0 0
        %525 = vmatprep.subr.bf16.mxu0 0
        %526 = vmatpush1.bf16.msra.mxu0 0
        %527 = vmatprep.subr.bf16.mxu0 0
        %528 = vmatpush1.bf16.msra.mxu0 %v470
        %529 = vmatprep.subr.bf16.mxu0 0
        %530 = vmatpush2.bf16.msra.mxu0 0
        %531 = vmatprep.subr.bf16.mxu0 0
        %532 = vmatpush2.bf16.msra.mxu0 0
        %533 = vmatprep.subr.bf16.mxu0 0
        %534 = vmatpush2.bf16.msra.mxu0 0
        %535 = vmatprep.subr.bf16.mxu0 0
        %536 = vmatpush2.bf16.msra.mxu0 0
        %537 = vmatprep.subr.bf16.mxu0 0
        %538 = vmatpush2.bf16.msra.mxu0 0
        %539 = vmatprep.subr.bf16.mxu0 0
        %540 = vmatpush2.bf16.msra.mxu0 0
        %541 = vmatprep.subr.bf16.mxu0 0
        %542 = vmatpush2.bf16.msra.mxu0 0
        %543 = vmatprep.subr.bf16.mxu0 0
        %544 = vmatpush2.bf16.msra.mxu0 0
        %545 = vmatprep.mubr.bf16.mxu0 0
        %546 = vmatmul.mubr.bf16.gmra.mxu0 %v461
        %v547 = vpop.f32.mrf.mxu0
        %v548 = vadd.f32 %v455, %v547
        %v549 = vpop.f32.mrf.mxu0
        %v550 = vpop.f32.mrf.mxu0
        %v551 = vpop.f32.mrf.mxu0
        %552 = vdwg.mxu0
        %s553 = scalar_lea.vmem %s2, 8
        %v554 = vld [vmem:[%s553] sm:$0xf]
        %555 = vrot.lane.b32.xlu0 %v348, 126
        %v556 = vpop.permute.xlu0 %555
        %557 = vrot.lane.b32.xlu0 %v349, 126
        %v558 = vpop.permute.xlu0 %557
        %559 = vrot.lane.b32.xlu0 %v350, 126
        %v560 = vpop.permute.xlu0 %559
        %vm561 = vcmask 1031168
        %v562 = vsel %vm561, %v556, %v558
        %v563 = vsel %vm561, %v558, %v560
        %v565 = vsel %vm365, %v554, 0
        %v568 = vsel %vm369, %v562, 0
        %v571 = vsel %vm369, %v563, 0
        %v574 = vsel %vm369, %v560, 0
        %576 = vmatprep.subr.bf16.mxu0 0
        %577 = vmatpush1.bf16.msra.mxu0 0
        %578 = vmatprep.subr.bf16.mxu0 0
        %579 = vmatpush1.bf16.msra.mxu0 0
        %580 = vmatprep.subr.bf16.mxu0 0
        %581 = vmatpush1.bf16.msra.mxu0 0
        %582 = vmatprep.subr.bf16.mxu0 0
        %583 = vmatpush1.bf16.msra.mxu0 0
        %584 = vmatprep.subr.bf16.mxu0 0
        %585 = vmatpush1.bf16.msra.mxu0 0
        %586 = vmatprep.subr.bf16.mxu0 0
        %587 = vmatpush1.bf16.msra.mxu0 0
        %588 = vmatprep.subr.bf16.mxu0 0
        %589 = vmatpush1.bf16.msra.mxu0 0
        %590 = vmatprep.subr.bf16.mxu0 %v571
        %591 = vmatpush1.bf16.msra.mxu0 %v568
        %592 = vmatprep.subr.bf16.mxu0 0
        %593 = vmatpush2.bf16.msra.mxu0 0
        %594 = vmatprep.subr.bf16.mxu0 0
        %595 = vmatpush2.bf16.msra.mxu0 0
        %596 = vmatprep.subr.bf16.mxu0 0
        %597 = vmatpush2.bf16.msra.mxu0 0
        %598 = vmatprep.subr.bf16.mxu0 0
        %599 = vmatpush2.bf16.msra.mxu0 0
        %600 = vmatprep.subr.bf16.mxu0 0
        %601 = vmatpush2.bf16.msra.mxu0 0
        %602 = vmatprep.subr.bf16.mxu0 0
        %603 = vmatpush2.bf16.msra.mxu0 0
        %604 = vmatprep.subr.bf16.mxu0 0
        %605 = vmatpush2.bf16.msra.mxu0 0
        %606 = vmatprep.subr.bf16.mxu0 0
        %607 = vmatpush2.bf16.msra.mxu0 0
        %608 = vmatprep.mubr.bf16.mxu0 0
        %609 = vmatmul.mubr.bf16.gmra.mxu0 %v565
        %v610 = vpop.f32.mrf.mxu0
        %v611 = vadd.f32 0.0, %v610
        %v612 = vpop.f32.mrf.mxu0
        %v613 = vadd.f32 0.0, %v612
        %v614 = vpop.f32.mrf.mxu0
        %v615 = vpop.f32.mrf.mxu0
        %616 = vdwg.mxu0
        %617 = vmatprep.subr.bf16.mxu0 0
        %618 = vmatpush1.bf16.msra.mxu0 0
        %619 = vmatprep.subr.bf16.mxu0 0
        %620 = vmatpush1.bf16.msra.mxu0 0
        %621 = vmatprep.subr.bf16.mxu0 0
        %622 = vmatpush1.bf16.msra.mxu0 0
        %623 = vmatprep.subr.bf16.mxu0 0
        %624 = vmatpush1.bf16.msra.mxu0 0
        %625 = vmatprep.subr.bf16.mxu0 0
        %626 = vmatpush1.bf16.msra.mxu0 0
        %627 = vmatprep.subr.bf16.mxu0 0
        %628 = vmatpush1.bf16.msra.mxu0 0
        %629 = vmatprep.subr.bf16.mxu0 0
        %630 = vmatpush1.bf16.msra.mxu0 0
        %631 = vmatprep.subr.bf16.mxu0 0
        %632 = vmatpush1.bf16.msra.mxu0 %v574
        %633 = vmatprep.subr.bf16.mxu0 0
        %634 = vmatpush2.bf16.msra.mxu0 0
        %635 = vmatprep.subr.bf16.mxu0 0
        %636 = vmatpush2.bf16.msra.mxu0 0
        %637 = vmatprep.subr.bf16.mxu0 0
        %638 = vmatpush2.bf16.msra.mxu0 0
        %639 = vmatprep.subr.bf16.mxu0 0
        %640 = vmatpush2.bf16.msra.mxu0 0
        %641 = vmatprep.subr.bf16.mxu0 0
        %642 = vmatpush2.bf16.msra.mxu0 0
        %643 = vmatprep.subr.bf16.mxu0 0
        %644 = vmatpush2.bf16.msra.mxu0 0
        %645 = vmatprep.subr.bf16.mxu0 0
        %646 = vmatpush2.bf16.msra.mxu0 0
        %647 = vmatprep.subr.bf16.mxu0 0
        %648 = vmatpush2.bf16.msra.mxu0 0
        %649 = vmatprep.mubr.bf16.mxu0 0
        %650 = vmatmul.mubr.bf16.gmra.mxu0 %v565
        %v651 = vpop.f32.mrf.mxu0
        %v652 = vadd.f32 0.0, %v651
        %v653 = vpop.f32.mrf.mxu0
        %v654 = vpop.f32.mrf.mxu0
        %v655 = vpop.f32.mrf.mxu0
        %656 = vdwg.mxu0
        %v657 = vadd.f32 %v507, %v611
        %v658 = vadd.f32 %v509, %v613
        %v659 = vadd.f32 %v548, %v652
        %s660 = scalar_lea.vmem %s2, 12
        %v661 = vld [vmem:[%s660] sm:$0xf]
        %662 = vrot.lane.b32.xlu0 %v348, 110
        %v663 = vpop.permute.xlu0 %662
        %664 = vrot.lane.b32.xlu0 %v349, 110
        %v665 = vpop.permute.xlu0 %664
        %666 = vrot.lane.b32.xlu0 %v350, 110
        %v667 = vpop.permute.xlu0 %666
        %vm668 = vcmask 900096
        %v669 = vsel %vm668, %v663, %v665
        %v670 = vsel %vm668, %v665, %v667
        %v672 = vsel %vm365, %v661, 0
        %v675 = vsel %vm369, %v669, 0
        %v678 = vsel %vm369, %v670, 0
        %v681 = vsel %vm369, %v667, 0
        %683 = vmatprep.subr.bf16.mxu0 0
        %684 = vmatpush1.bf16.msra.mxu0 0
        %685 = vmatprep.subr.bf16.mxu0 0
        %686 = vmatpush1.bf16.msra.mxu0 0
        %687 = vmatprep.subr.bf16.mxu0 0
        %688 = vmatpush1.bf16.msra.mxu0 0
        %689 = vmatprep.subr.bf16.mxu0 0
        %690 = vmatpush1.bf16.msra.mxu0 0
        %691 = vmatprep.subr.bf16.mxu0 0
        %692 = vmatpush1.bf16.msra.mxu0 0
        %693 = vmatprep.subr.bf16.mxu0 0
        %694 = vmatpush1.bf16.msra.mxu0 0
        %695 = vmatprep.subr.bf16.mxu0 0
        %696 = vmatpush1.bf16.msra.mxu0 0
        %697 = vmatprep.subr.bf16.mxu0 %v678
        %698 = vmatpush1.bf16.msra.mxu0 %v675
        %699 = vmatprep.subr.bf16.mxu0 0
        %700 = vmatpush2.bf16.msra.mxu0 0
        %701 = vmatprep.subr.bf16.mxu0 0
        %702 = vmatpush2.bf16.msra.mxu0 0
        %703 = vmatprep.subr.bf16.mxu0 0
        %704 = vmatpush2.bf16.msra.mxu0 0
        %705 = vmatprep.subr.bf16.mxu0 0
        %706 = vmatpush2.bf16.msra.mxu0 0
        %707 = vmatprep.subr.bf16.mxu0 0
        %708 = vmatpush2.bf16.msra.mxu0 0
        %709 = vmatprep.subr.bf16.mxu0 0
        %710 = vmatpush2.bf16.msra.mxu0 0
        %711 = vmatprep.subr.bf16.mxu0 0
        %712 = vmatpush2.bf16.msra.mxu0 0
        %713 = vmatprep.subr.bf16.mxu0 0
        %714 = vmatpush2.bf16.msra.mxu0 0
        %715 = vmatprep.mubr.bf16.mxu0 0
        %716 = vmatmul.mubr.bf16.gmra.mxu0 %v672
        %v717 = vpop.f32.mrf.mxu0
        %v718 = vadd.f32 0.0, %v717
        %v719 = vpop.f32.mrf.mxu0
        %v720 = vadd.f32 0.0, %v719
        %v721 = vpop.f32.mrf.mxu0
        %v722 = vpop.f32.mrf.mxu0
        %723 = vdwg.mxu0
        %724 = vmatprep.subr.bf16.mxu0 0
        %725 = vmatpush1.bf16.msra.mxu0 0
        %726 = vmatprep.subr.bf16.mxu0 0
        %727 = vmatpush1.bf16.msra.mxu0 0
        %728 = vmatprep.subr.bf16.mxu0 0
        %729 = vmatpush1.bf16.msra.mxu0 0
        %730 = vmatprep.subr.bf16.mxu0 0
        %731 = vmatpush1.bf16.msra.mxu0 0
        %732 = vmatprep.subr.bf16.mxu0 0
        %733 = vmatpush1.bf16.msra.mxu0 0
        %734 = vmatprep.subr.bf16.mxu0 0
        %735 = vmatpush1.bf16.msra.mxu0 0
        %736 = vmatprep.subr.bf16.mxu0 0
        %737 = vmatpush1.bf16.msra.mxu0 0
        %738 = vmatprep.subr.bf16.mxu0 0
        %739 = vmatpush1.bf16.msra.mxu0 %v681
        %740 = vmatprep.subr.bf16.mxu0 0
        %741 = vmatpush2.bf16.msra.mxu0 0
        %742 = vmatprep.subr.bf16.mxu0 0
        %743 = vmatpush2.bf16.msra.mxu0 0
        %744 = vmatprep.subr.bf16.mxu0 0
        %745 = vmatpush2.bf16.msra.mxu0 0
        %746 = vmatprep.subr.bf16.mxu0 0
        %747 = vmatpush2.bf16.msra.mxu0 0
        %748 = vmatprep.subr.bf16.mxu0 0
        %749 = vmatpush2.bf16.msra.mxu0 0
        %750 = vmatprep.subr.bf16.mxu0 0
        %751 = vmatpush2.bf16.msra.mxu0 0
        %752 = vmatprep.subr.bf16.mxu0 0
        %753 = vmatpush2.bf16.msra.mxu0 0
        %754 = vmatprep.subr.bf16.mxu0 0
        %755 = vmatpush2.bf16.msra.mxu0 0
        %756 = vmatprep.mubr.bf16.mxu0 0
        %757 = vmatmul.mubr.bf16.gmra.mxu0 %v672
        %v758 = vpop.f32.mrf.mxu0
        %v759 = vadd.f32 0.0, %v758
        %v760 = vpop.f32.mrf.mxu0
        %v761 = vpop.f32.mrf.mxu0
        %v762 = vpop.f32.mrf.mxu0
        %763 = vdwg.mxu0
        %v764 = vadd.f32 %v657, %v718
        %v765 = vadd.f32 %v658, %v720
        %v766 = vadd.f32 %v659, %v759
        %s767 = scalar_lea.vmem %s2, 16
        %v768 = vld [vmem:[%s767] sm:$0xf]
        %769 = vrot.lane.b32.xlu0 %v348, 109
        %v770 = vpop.permute.xlu0 %769
        %771 = vrot.lane.b32.xlu0 %v349, 109
        %v772 = vpop.permute.xlu0 %771
        %773 = vrot.lane.b32.xlu0 %v350, 109
        %v774 = vpop.permute.xlu0 %773
        %vm775 = vcmask 891904
        %v776 = vsel %vm775, %v770, %v772
        %v777 = vsel %vm775, %v772, %v774
        %v779 = vsel %vm365, %v768, 0
        %v782 = vsel %vm369, %v776, 0
        %v785 = vsel %vm369, %v777, 0
        %v788 = vsel %vm369, %v774, 0
        %790 = vmatprep.subr.bf16.mxu0 0
        %791 = vmatpush1.bf16.msra.mxu0 0
        %792 = vmatprep.subr.bf16.mxu0 0
        %793 = vmatpush1.bf16.msra.mxu0 0
        %794 = vmatprep.subr.bf16.mxu0 0
        %795 = vmatpush1.bf16.msra.mxu0 0
        %796 = vmatprep.subr.bf16.mxu0 0
        %797 = vmatpush1.bf16.msra.mxu0 0
        %798 = vmatprep.subr.bf16.mxu0 0
        %799 = vmatpush1.bf16.msra.mxu0 0
        %800 = vmatprep.subr.bf16.mxu0 0
        %801 = vmatpush1.bf16.msra.mxu0 0
        %802 = vmatprep.subr.bf16.mxu0 0
        %803 = vmatpush1.bf16.msra.mxu0 0
        %804 = vmatprep.subr.bf16.mxu0 %v785
        %805 = vmatpush1.bf16.msra.mxu0 %v782
        %806 = vmatprep.subr.bf16.mxu0 0
        %807 = vmatpush2.bf16.msra.mxu0 0
        %808 = vmatprep.subr.bf16.mxu0 0
        %809 = vmatpush2.bf16.msra.mxu0 0
        %810 = vmatprep.subr.bf16.mxu0 0
        %811 = vmatpush2.bf16.msra.mxu0 0
        %812 = vmatprep.subr.bf16.mxu0 0
        %813 = vmatpush2.bf16.msra.mxu0 0
        %814 = vmatprep.subr.bf16.mxu0 0
        %815 = vmatpush2.bf16.msra.mxu0 0
        %816 = vmatprep.subr.bf16.mxu0 0
        %817 = vmatpush2.bf16.msra.mxu0 0
        %818 = vmatprep.subr.bf16.mxu0 0
        %819 = vmatpush2.bf16.msra.mxu0 0
        %820 = vmatprep.subr.bf16.mxu0 0
        %821 = vmatpush2.bf16.msra.mxu0 0
        %822 = vmatprep.mubr.bf16.mxu0 0
        %823 = vmatmul.mubr.bf16.gmra.mxu0 %v779
        %v824 = vpop.f32.mrf.mxu0
        %v825 = vadd.f32 0.0, %v824
        %v826 = vpop.f32.mrf.mxu0
        %v827 = vadd.f32 0.0, %v826
        %v828 = vpop.f32.mrf.mxu0
        %v829 = vpop.f32.mrf.mxu0
        %830 = vdwg.mxu0
        %831 = vmatprep.subr.bf16.mxu0 0
        %832 = vmatpush1.bf16.msra.mxu0 0
        %833 = vmatprep.subr.bf16.mxu0 0
        %834 = vmatpush1.bf16.msra.mxu0 0
        %835 = vmatprep.subr.bf16.mxu0 0
        %836 = vmatpush1.bf16.msra.mxu0 0
        %837 = vmatprep.subr.bf16.mxu0 0
        %838 = vmatpush1.bf16.msra.mxu0 0
        %839 = vmatprep.subr.bf16.mxu0 0
        %840 = vmatpush1.bf16.msra.mxu0 0
        %841 = vmatprep.subr.bf16.mxu0 0
        %842 = vmatpush1.bf16.msra.mxu0 0
        %843 = vmatprep.subr.bf16.mxu0 0
        %844 = vmatpush1.bf16.msra.mxu0 0
        %845 = vmatprep.subr.bf16.mxu0 0
        %846 = vmatpush1.bf16.msra.mxu0 %v788
        %847 = vmatprep.subr.bf16.mxu0 0
        %848 = vmatpush2.bf16.msra.mxu0 0
        %849 = vmatprep.subr.bf16.mxu0 0
        %850 = vmatpush2.bf16.msra.mxu0 0
        %851 = vmatprep.subr.bf16.mxu0 0
        %852 = vmatpush2.bf16.msra.mxu0 0
        %853 = vmatprep.subr.bf16.mxu0 0
        %854 = vmatpush2.bf16.msra.mxu0 0
        %855 = vmatprep.subr.bf16.mxu0 0
        %856 = vmatpush2.bf16.msra.mxu0 0
        %857 = vmatprep.subr.bf16.mxu0 0
        %858 = vmatpush2.bf16.msra.mxu0 0
        %859 = vmatprep.subr.bf16.mxu0 0
        %860 = vmatpush2.bf16.msra.mxu0 0
        %861 = vmatprep.subr.bf16.mxu0 0
        %862 = vmatpush2.bf16.msra.mxu0 0
        %863 = vmatprep.mubr.bf16.mxu0 0
        %864 = vmatmul.mubr.bf16.gmra.mxu0 %v779
        %v865 = vpop.f32.mrf.mxu0
        %v866 = vadd.f32 0.0, %v865
        %v867 = vpop.f32.mrf.mxu0
        %v868 = vpop.f32.mrf.mxu0
        %v869 = vpop.f32.mrf.mxu0
        %870 = vdwg.mxu0
        %v871 = vadd.f32 %v764, %v825
        %v872 = vadd.f32 %v765, %v827
        %v873 = vadd.f32 %v766, %v866
        %s874 = scalar_lea.vmem %s2, 20
        %v875 = vld [vmem:[%s874] sm:$0xf]
        %876 = vrot.lane.b32.xlu0 %v348, 108
        %v877 = vpop.permute.xlu0 %876
        %878 = vrot.lane.b32.xlu0 %v349, 108
        %v879 = vpop.permute.xlu0 %878
        %880 = vrot.lane.b32.xlu0 %v350, 108
        %v881 = vpop.permute.xlu0 %880
        %vm882 = vcmask 883712
        %v883 = vsel %vm882, %v877, %v879
        %v884 = vsel %vm882, %v879, %v881
        %v886 = vsel %vm365, %v875, 0
        %v889 = vsel %vm369, %v883, 0
        %v892 = vsel %vm369, %v884, 0
        %v895 = vsel %vm369, %v881, 0
        %897 = vmatprep.subr.bf16.mxu0 0
        %898 = vmatpush1.bf16.msra.mxu0 0
        %899 = vmatprep.subr.bf16.mxu0 0
        %900 = vmatpush1.bf16.msra.mxu0 0
        %901 = vmatprep.subr.bf16.mxu0 0
        %902 = vmatpush1.bf16.msra.mxu0 0
        %903 = vmatprep.subr.bf16.mxu0 0
        %904 = vmatpush1.bf16.msra.mxu0 0
        %905 = vmatprep.subr.bf16.mxu0 0
        %906 = vmatpush1.bf16.msra.mxu0 0
        %907 = vmatprep.subr.bf16.mxu0 0
        %908 = vmatpush1.bf16.msra.mxu0 0
        %909 = vmatprep.subr.bf16.mxu0 0
        %910 = vmatpush1.bf16.msra.mxu0 0
        %911 = vmatprep.subr.bf16.mxu0 %v892
        %912 = vmatpush1.bf16.msra.mxu0 %v889
        %913 = vmatprep.subr.bf16.mxu0 0
        %914 = vmatpush2.bf16.msra.mxu0 0
        %915 = vmatprep.subr.bf16.mxu0 0
        %916 = vmatpush2.bf16.msra.mxu0 0
        %917 = vmatprep.subr.bf16.mxu0 0
        %918 = vmatpush2.bf16.msra.mxu0 0
        %919 = vmatprep.subr.bf16.mxu0 0
        %920 = vmatpush2.bf16.msra.mxu0 0
        %921 = vmatprep.subr.bf16.mxu0 0
        %922 = vmatpush2.bf16.msra.mxu0 0
        %923 = vmatprep.subr.bf16.mxu0 0
        %924 = vmatpush2.bf16.msra.mxu0 0
        %925 = vmatprep.subr.bf16.mxu0 0
        %926 = vmatpush2.bf16.msra.mxu0 0
        %927 = vmatprep.subr.bf16.mxu0 0
        %928 = vmatpush2.bf16.msra.mxu0 0
        %929 = vmatprep.mubr.bf16.mxu0 0
        %930 = vmatmul.mubr.bf16.gmra.mxu0 %v886
        %v931 = vpop.f32.mrf.mxu0
        %v932 = vadd.f32 0.0, %v931
        %v933 = vpop.f32.mrf.mxu0
        %v934 = vadd.f32 0.0, %v933
        %v935 = vpop.f32.mrf.mxu0
        %v936 = vpop.f32.mrf.mxu0
        %937 = vdwg.mxu0
        %938 = vmatprep.subr.bf16.mxu0 0
        %939 = vmatpush1.bf16.msra.mxu0 0
        %940 = vmatprep.subr.bf16.mxu0 0
        %941 = vmatpush1.bf16.msra.mxu0 0
        %942 = vmatprep.subr.bf16.mxu0 0
        %943 = vmatpush1.bf16.msra.mxu0 0
        %944 = vmatprep.subr.bf16.mxu0 0
        %945 = vmatpush1.bf16.msra.mxu0 0
        %946 = vmatprep.subr.bf16.mxu0 0
        %947 = vmatpush1.bf16.msra.mxu0 0
        %948 = vmatprep.subr.bf16.mxu0 0
        %949 = vmatpush1.bf16.msra.mxu0 0
        %950 = vmatprep.subr.bf16.mxu0 0
        %951 = vmatpush1.bf16.msra.mxu0 0
        %952 = vmatprep.subr.bf16.mxu0 0
        %953 = vmatpush1.bf16.msra.mxu0 %v895
        %954 = vmatprep.subr.bf16.mxu0 0
        %955 = vmatpush2.bf16.msra.mxu0 0
        %956 = vmatprep.subr.bf16.mxu0 0
        %957 = vmatpush2.bf16.msra.mxu0 0
        %958 = vmatprep.subr.bf16.mxu0 0
        %959 = vmatpush2.bf16.msra.mxu0 0
        %960 = vmatprep.subr.bf16.mxu0 0
        %961 = vmatpush2.bf16.msra.mxu0 0
        %962 = vmatprep.subr.bf16.mxu0 0
        %963 = vmatpush2.bf16.msra.mxu0 0
        %964 = vmatprep.subr.bf16.mxu0 0
        %965 = vmatpush2.bf16.msra.mxu0 0
        %966 = vmatprep.subr.bf16.mxu0 0
        %967 = vmatpush2.bf16.msra.mxu0 0
        %968 = vmatprep.subr.bf16.mxu0 0
        %969 = vmatpush2.bf16.msra.mxu0 0
        %970 = vmatprep.mubr.bf16.mxu0 0
        %971 = vmatmul.mubr.bf16.gmra.mxu0 %v886
        %v972 = vpop.f32.mrf.mxu0
        %v973 = vadd.f32 0.0, %v972
        %v974 = vpop.f32.mrf.mxu0
        %v975 = vpop.f32.mrf.mxu0
        %v976 = vpop.f32.mrf.mxu0
        %977 = vdwg.mxu0
        %v978 = vadd.f32 %v871, %v932
        %v979 = vadd.f32 %v872, %v934
        %v980 = vadd.f32 %v873, %v973
        %s981 = scalar_lea.vmem %s2, 24
        %v982 = vld [vmem:[%s981] sm:$0xf]
        %983 = vrot.lane.b32.xlu0 %v348, 92
        %v984 = vpop.permute.xlu0 %983
        %985 = vrot.lane.b32.xlu0 %v349, 92
        %v986 = vpop.permute.xlu0 %985
        %987 = vrot.lane.b32.xlu0 %v350, 92
        %v988 = vpop.permute.xlu0 %987
        %vm989 = vcmask 752640
        %v990 = vsel %vm989, %v984, %v986
        %v991 = vsel %vm989, %v986, %v988
        %v993 = vsel %vm365, %v982, 0
        %v996 = vsel %vm369, %v990, 0
        %v999 = vsel %vm369, %v991, 0
        %v1002 = vsel %vm369, %v988, 0
        %1004 = vmatprep.subr.bf16.mxu0 0
        %1005 = vmatpush1.bf16.msra.mxu0 0
        %1006 = vmatprep.subr.bf16.mxu0 0
        %1007 = vmatpush1.bf16.msra.mxu0 0
        %1008 = vmatprep.subr.bf16.mxu0 0
        %1009 = vmatpush1.bf16.msra.mxu0 0
        %1010 = vmatprep.subr.bf16.mxu0 0
        %1011 = vmatpush1.bf16.msra.mxu0 0
        %1012 = vmatprep.subr.bf16.mxu0 0
        %1013 = vmatpush1.bf16.msra.mxu0 0
        %1014 = vmatprep.subr.bf16.mxu0 0
        %1015 = vmatpush1.bf16.msra.mxu0 0
        %1016 = vmatprep.subr.bf16.mxu0 0
        %1017 = vmatpush1.bf16.msra.mxu0 0
        %1018 = vmatprep.subr.bf16.mxu0 %v999
        %1019 = vmatpush1.bf16.msra.mxu0 %v996
        %1020 = vmatprep.subr.bf16.mxu0 0
        %1021 = vmatpush2.bf16.msra.mxu0 0
        %1022 = vmatprep.subr.bf16.mxu0 0
        %1023 = vmatpush2.bf16.msra.mxu0 0
        %1024 = vmatprep.subr.bf16.mxu0 0
        %1025 = vmatpush2.bf16.msra.mxu0 0
        %1026 = vmatprep.subr.bf16.mxu0 0
        %1027 = vmatpush2.bf16.msra.mxu0 0
        %1028 = vmatprep.subr.bf16.mxu0 0
        %1029 = vmatpush2.bf16.msra.mxu0 0
        %1030 = vmatprep.subr.bf16.mxu0 0
        %1031 = vmatpush2.bf16.msra.mxu0 0
        %1032 = vmatprep.subr.bf16.mxu0 0
        %1033 = vmatpush2.bf16.msra.mxu0 0
        %1034 = vmatprep.subr.bf16.mxu0 0
        %1035 = vmatpush2.bf16.msra.mxu0 0
        %1036 = vmatprep.mubr.bf16.mxu0 0
        %1037 = vmatmul.mubr.bf16.gmra.mxu0 %v993
        %v1038 = vpop.f32.mrf.mxu0
        %v1039 = vadd.f32 0.0, %v1038
        %v1040 = vpop.f32.mrf.mxu0
        %v1041 = vadd.f32 0.0, %v1040
        %v1042 = vpop.f32.mrf.mxu0
        %v1043 = vpop.f32.mrf.mxu0
        %1044 = vdwg.mxu0
        %1045 = vmatprep.subr.bf16.mxu0 0
        %1046 = vmatpush1.bf16.msra.mxu0 0
        %1047 = vmatprep.subr.bf16.mxu0 0
        %1048 = vmatpush1.bf16.msra.mxu0 0
        %1049 = vmatprep.subr.bf16.mxu0 0
        %1050 = vmatpush1.bf16.msra.mxu0 0
        %1051 = vmatprep.subr.bf16.mxu0 0
        %1052 = vmatpush1.bf16.msra.mxu0 0
        %1053 = vmatprep.subr.bf16.mxu0 0
        %1054 = vmatpush1.bf16.msra.mxu0 0
        %1055 = vmatprep.subr.bf16.mxu0 0
        %1056 = vmatpush1.bf16.msra.mxu0 0
        %1057 = vmatprep.subr.bf16.mxu0 0
        %1058 = vmatpush1.bf16.msra.mxu0 0
        %1059 = vmatprep.subr.bf16.mxu0 0
        %1060 = vmatpush1.bf16.msra.mxu0 %v1002
        %1061 = vmatprep.subr.bf16.mxu0 0
        %1062 = vmatpush2.bf16.msra.mxu0 0
        %1063 = vmatprep.subr.bf16.mxu0 0
        %1064 = vmatpush2.bf16.msra.mxu0 0
        %1065 = vmatprep.subr.bf16.mxu0 0
        %1066 = vmatpush2.bf16.msra.mxu0 0
        %1067 = vmatprep.subr.bf16.mxu0 0
        %1068 = vmatpush2.bf16.msra.mxu0 0
        %1069 = vmatprep.subr.bf16.mxu0 0
        %1070 = vmatpush2.bf16.msra.mxu0 0
        %1071 = vmatprep.subr.bf16.mxu0 0
        %1072 = vmatpush2.bf16.msra.mxu0 0
        %1073 = vmatprep.subr.bf16.mxu0 0
        %1074 = vmatpush2.bf16.msra.mxu0 0
        %1075 = vmatprep.subr.bf16.mxu0 0
        %1076 = vmatpush2.bf16.msra.mxu0 0
        %1077 = vmatprep.mubr.bf16.mxu0 0
        %1078 = vmatmul.mubr.bf16.gmra.mxu0 %v993
        %v1079 = vpop.f32.mrf.mxu0
        %v1080 = vadd.f32 0.0, %v1079
        %v1081 = vpop.f32.mrf.mxu0
        %v1082 = vpop.f32.mrf.mxu0
        %v1083 = vpop.f32.mrf.mxu0
        %1084 = vdwg.mxu0
        %v1085 = vadd.f32 %v978, %v1039
        %v1086 = vadd.f32 %v979, %v1041
        %v1087 = vadd.f32 %v980, %v1080
        %s1088 = scalar_lea.vmem %s2, 28
        %v1089 = vld [vmem:[%s1088] sm:$0xf]
        %1090 = vrot.lane.b32.xlu0 %v348, 91
        %v1091 = vpop.permute.xlu0 %1090
        %1092 = vrot.lane.b32.xlu0 %v349, 91
        %v1093 = vpop.permute.xlu0 %1092
        %1094 = vrot.lane.b32.xlu0 %v350, 91
        %v1095 = vpop.permute.xlu0 %1094
        %vm1096 = vcmask 744448
        %v1097 = vsel %vm1096, %v1091, %v1093
        %v1098 = vsel %vm1096, %v1093, %v1095
        %v1100 = vsel %vm365, %v1089, 0
        %v1103 = vsel %vm369, %v1097, 0
        %v1106 = vsel %vm369, %v1098, 0
        %v1109 = vsel %vm369, %v1095, 0
        %1111 = vmatprep.subr.bf16.mxu0 0
        %1112 = vmatpush1.bf16.msra.mxu0 0
        %1113 = vmatprep.subr.bf16.mxu0 0
        %1114 = vmatpush1.bf16.msra.mxu0 0
        %1115 = vmatprep.subr.bf16.mxu0 0
        %1116 = vmatpush1.bf16.msra.mxu0 0
        %1117 = vmatprep.subr.bf16.mxu0 0
        %1118 = vmatpush1.bf16.msra.mxu0 0
        %1119 = vmatprep.subr.bf16.mxu0 0
        %1120 = vmatpush1.bf16.msra.mxu0 0
        %1121 = vmatprep.subr.bf16.mxu0 0
        %1122 = vmatpush1.bf16.msra.mxu0 0
        %1123 = vmatprep.subr.bf16.mxu0 0
        %1124 = vmatpush1.bf16.msra.mxu0 0
        %1125 = vmatprep.subr.bf16.mxu0 %v1106
        %1126 = vmatpush1.bf16.msra.mxu0 %v1103
        %1127 = vmatprep.subr.bf16.mxu0 0
        %1128 = vmatpush2.bf16.msra.mxu0 0
        %1129 = vmatprep.subr.bf16.mxu0 0
        %1130 = vmatpush2.bf16.msra.mxu0 0
        %1131 = vmatprep.subr.bf16.mxu0 0
        %1132 = vmatpush2.bf16.msra.mxu0 0
        %1133 = vmatprep.subr.bf16.mxu0 0
        %1134 = vmatpush2.bf16.msra.mxu0 0
        %1135 = vmatprep.subr.bf16.mxu0 0
        %1136 = vmatpush2.bf16.msra.mxu0 0
        %1137 = vmatprep.subr.bf16.mxu0 0
        %1138 = vmatpush2.bf16.msra.mxu0 0
        %1139 = vmatprep.subr.bf16.mxu0 0
        %1140 = vmatpush2.bf16.msra.mxu0 0
        %1141 = vmatprep.subr.bf16.mxu0 0
        %1142 = vmatpush2.bf16.msra.mxu0 0
        %1143 = vmatprep.mubr.bf16.mxu0 0
        %1144 = vmatmul.mubr.bf16.gmra.mxu0 %v1100
        %v1145 = vpop.f32.mrf.mxu0
        %v1146 = vadd.f32 0.0, %v1145
        %v1147 = vpop.f32.mrf.mxu0
        %v1148 = vadd.f32 0.0, %v1147
        %v1149 = vpop.f32.mrf.mxu0
        %v1150 = vpop.f32.mrf.mxu0
        %1151 = vdwg.mxu0
        %1152 = vmatprep.subr.bf16.mxu0 0
        %1153 = vmatpush1.bf16.msra.mxu0 0
        %1154 = vmatprep.subr.bf16.mxu0 0
        %1155 = vmatpush1.bf16.msra.mxu0 0
        %1156 = vmatprep.subr.bf16.mxu0 0
        %1157 = vmatpush1.bf16.msra.mxu0 0
        %1158 = vmatprep.subr.bf16.mxu0 0
        %1159 = vmatpush1.bf16.msra.mxu0 0
        %1160 = vmatprep.subr.bf16.mxu0 0
        %1161 = vmatpush1.bf16.msra.mxu0 0
        %1162 = vmatprep.subr.bf16.mxu0 0
        %1163 = vmatpush1.bf16.msra.mxu0 0
        %1164 = vmatprep.subr.bf16.mxu0 0
        %1165 = vmatpush1.bf16.msra.mxu0 0
        %1166 = vmatprep.subr.bf16.mxu0 0
        %1167 = vmatpush1.bf16.msra.mxu0 %v1109
        %1168 = vmatprep.subr.bf16.mxu0 0
        %1169 = vmatpush2.bf16.msra.mxu0 0
        %1170 = vmatprep.subr.bf16.mxu0 0
        %1171 = vmatpush2.bf16.msra.mxu0 0
        %1172 = vmatprep.subr.bf16.mxu0 0
        %1173 = vmatpush2.bf16.msra.mxu0 0
        %1174 = vmatprep.subr.bf16.mxu0 0
        %1175 = vmatpush2.bf16.msra.mxu0 0
        %1176 = vmatprep.subr.bf16.mxu0 0
        %1177 = vmatpush2.bf16.msra.mxu0 0
        %1178 = vmatprep.subr.bf16.mxu0 0
        %1179 = vmatpush2.bf16.msra.mxu0 0
        %1180 = vmatprep.subr.bf16.mxu0 0
        %1181 = vmatpush2.bf16.msra.mxu0 0
        %1182 = vmatprep.subr.bf16.mxu0 0
        %1183 = vmatpush2.bf16.msra.mxu0 0
        %1184 = vmatprep.mubr.bf16.mxu0 0
        %1185 = vmatmul.mubr.bf16.gmra.mxu0 %v1100
        %v1186 = vpop.f32.mrf.mxu0
        %v1187 = vadd.f32 0.0, %v1186
        %v1188 = vpop.f32.mrf.mxu0
        %v1189 = vpop.f32.mrf.mxu0
        %v1190 = vpop.f32.mrf.mxu0
        %1191 = vdwg.mxu0
        %v1192 = vadd.f32 %v1085, %v1146
        %v1193 = vadd.f32 %v1086, %v1148
        %v1194 = vadd.f32 %v1087, %v1187
        %s1195 = scalar_lea.vmem %s2, 32
        %v1196 = vld [vmem:[%s1195] sm:$0xf]
        %1197 = vrot.lane.b32.xlu0 %v348, 90
        %v1198 = vpop.permute.xlu0 %1197
        %1199 = vrot.lane.b32.xlu0 %v349, 90
        %v1200 = vpop.permute.xlu0 %1199
        %1201 = vrot.lane.b32.xlu0 %v350, 90
        %v1202 = vpop.permute.xlu0 %1201
        %vm1203 = vcmask 736256
        %v1204 = vsel %vm1203, %v1198, %v1200
        %v1205 = vsel %vm1203, %v1200, %v1202
        %v1207 = vsel %vm365, %v1196, 0
        %v1210 = vsel %vm369, %v1204, 0
        %v1213 = vsel %vm369, %v1205, 0
        %v1216 = vsel %vm369, %v1202, 0
        %1218 = vmatprep.subr.bf16.mxu0 0
        %1219 = vmatpush1.bf16.msra.mxu0 0
        %1220 = vmatprep.subr.bf16.mxu0 0
        %1221 = vmatpush1.bf16.msra.mxu0 0
        %1222 = vmatprep.subr.bf16.mxu0 0
        %1223 = vmatpush1.bf16.msra.mxu0 0
        %1224 = vmatprep.subr.bf16.mxu0 0
        %1225 = vmatpush1.bf16.msra.mxu0 0
        %1226 = vmatprep.subr.bf16.mxu0 0
        %1227 = vmatpush1.bf16.msra.mxu0 0
        %1228 = vmatprep.subr.bf16.mxu0 0
        %1229 = vmatpush1.bf16.msra.mxu0 0
        %1230 = vmatprep.subr.bf16.mxu0 0
        %1231 = vmatpush1.bf16.msra.mxu0 0
        %1232 = vmatprep.subr.bf16.mxu0 %v1213
        %1233 = vmatpush1.bf16.msra.mxu0 %v1210
        %1234 = vmatprep.subr.bf16.mxu0 0
        %1235 = vmatpush2.bf16.msra.mxu0 0
        %1236 = vmatprep.subr.bf16.mxu0 0
        %1237 = vmatpush2.bf16.msra.mxu0 0
        %1238 = vmatprep.subr.bf16.mxu0 0
        %1239 = vmatpush2.bf16.msra.mxu0 0
        %1240 = vmatprep.subr.bf16.mxu0 0
        %1241 = vmatpush2.bf16.msra.mxu0 0
        %1242 = vmatprep.subr.bf16.mxu0 0
        %1243 = vmatpush2.bf16.msra.mxu0 0
        %1244 = vmatprep.subr.bf16.mxu0 0
        %1245 = vmatpush2.bf16.msra.mxu0 0
        %1246 = vmatprep.subr.bf16.mxu0 0
        %1247 = vmatpush2.bf16.msra.mxu0 0
        %1248 = vmatprep.subr.bf16.mxu0 0
        %1249 = vmatpush2.bf16.msra.mxu0 0
        %1250 = vmatprep.mubr.bf16.mxu0 0
        %1251 = vmatmul.mubr.bf16.gmra.mxu0 %v1207
        %v1252 = vpop.f32.mrf.mxu0
        %v1253 = vadd.f32 0.0, %v1252
        %v1254 = vpop.f32.mrf.mxu0
        %v1255 = vadd.f32 0.0, %v1254
        %v1256 = vpop.f32.mrf.mxu0
        %v1257 = vpop.f32.mrf.mxu0
        %1258 = vdwg.mxu0
        %1259 = vmatprep.subr.bf16.mxu0 0
        %1260 = vmatpush1.bf16.msra.mxu0 0
        %1261 = vmatprep.subr.bf16.mxu0 0
        %1262 = vmatpush1.bf16.msra.mxu0 0
        %1263 = vmatprep.subr.bf16.mxu0 0
        %1264 = vmatpush1.bf16.msra.mxu0 0
        %1265 = vmatprep.subr.bf16.mxu0 0
        %1266 = vmatpush1.bf16.msra.mxu0 0
        %1267 = vmatprep.subr.bf16.mxu0 0
        %1268 = vmatpush1.bf16.msra.mxu0 0
        %1269 = vmatprep.subr.bf16.mxu0 0
        %1270 = vmatpush1.bf16.msra.mxu0 0
        %1271 = vmatprep.subr.bf16.mxu0 0
        %1272 = vmatpush1.bf16.msra.mxu0 0
        %1273 = vmatprep.subr.bf16.mxu0 0
        %1274 = vmatpush1.bf16.msra.mxu0 %v1216
        %1275 = vmatprep.subr.bf16.mxu0 0
        %1276 = vmatpush2.bf16.msra.mxu0 0
        %1277 = vmatprep.subr.bf16.mxu0 0
        %1278 = vmatpush2.bf16.msra.mxu0 0
        %1279 = vmatprep.subr.bf16.mxu0 0
        %1280 = vmatpush2.bf16.msra.mxu0 0
        %1281 = vmatprep.subr.bf16.mxu0 0
        %1282 = vmatpush2.bf16.msra.mxu0 0
        %1283 = vmatprep.subr.bf16.mxu0 0
        %1284 = vmatpush2.bf16.msra.mxu0 0
        %1285 = vmatprep.subr.bf16.mxu0 0
        %1286 = vmatpush2.bf16.msra.mxu0 0
        %1287 = vmatprep.subr.bf16.mxu0 0
        %1288 = vmatpush2.bf16.msra.mxu0 0
        %1289 = vmatprep.subr.bf16.mxu0 0
        %1290 = vmatpush2.bf16.msra.mxu0 0
        %1291 = vmatprep.mubr.bf16.mxu0 0
        %1292 = vmatmul.mubr.bf16.gmra.mxu0 %v1207
        %v1293 = vpop.f32.mrf.mxu0
        %v1294 = vadd.f32 0.0, %v1293
        %v1295 = vpop.f32.mrf.mxu0
        %v1296 = vpop.f32.mrf.mxu0
        %v1297 = vpop.f32.mrf.mxu0
        %1298 = vdwg.mxu0
        %v1299 = vadd.f32 %v1192, %v1253
        %v1300 = vadd.f32 %v1193, %v1255
        %v1301 = vadd.f32 %v1194, %v1294
        %v1302 = vld [vmem:[%s3] sm:$0xff]
        %1304 = vset.pattern.permute.xlu0 0
        %1305 = vperm.xlu0 %1304, %v1302
        %v1306 = vpop.permute.xlu0 %1305
        %v1308 = vadd.f32 %v1299, %v1306
        %v1309 = vadd.f32 %v1300, %v1306
        %v1310 = vadd.f32 %v1301, %v1306
        %v1311 = vmax.f32 %v1308, 0.0
        %v1312 = vmax.f32 %v1309, 0.0
        %v1313 = vmax.f32 %v1310, 0.0
        %v1314 = vmin.f32 %v1311, 127.0
        %v1315 = vmin.f32 %v1312, 127.0
        %v1316 = vmin.f32 %v1313, 127.0
        %v1317 = vmul.f32 %v1314, 0.5
        %v1318 = vmul.f32 %v1315, 0.5
        %v1319 = vmul.f32 %v1316, 0.5
        %v1320 = vround.ne.pseudo %v1317
        %v1321 = vround.ne.pseudo %v1318
        %v1322 = vround.ne.pseudo %v1319
        %v1323 = vmax.f32 %v1320, -128.0
        %v1324 = vmax.f32 %v1321, -128.0
        %v1325 = vmax.f32 %v1322, -128.0
        %v1326 = vmin.f32 %v1323, 127.0
        %v1327 = vmin.f32 %v1324, 127.0
        %v1328 = vmin.f32 %v1325, 127.0
        %v1329 = vld [vmem:[%s1] sm:$0x7]
        %v1331 = vlaneseq
        %v1332 = vshrl.u32 %v1331, 7
        %v1333 = vsub.s32 0, %v1332
        %v1334 = vrot.slane %v1329, %v1333
        %v1335 = vlaneseq
        %v1336 = vshrl.u32 %v1335, 7
        %v1337 = vsub.s32 1, %v1336
        %v1338 = vrot.slane %v1329, %v1337
        %v1339 = vlaneseq
        %v1340 = vshrl.u32 %v1339, 7
        %v1341 = vsub.s32 2, %v1340
        %v1342 = vrot.slane %v1329, %v1341
        %v1346 = vmul.f32 %v1326, %v1334
        %v1347 = vmul.f32 %v1327, %v1338
        %v1348 = vmul.f32 %v1328, %v1342
        %1349 = vst [vmem:[#allocation2] sm:$0xff] 0.0
        %1350 = vst [vmem:[#allocation2 + $0x8] sm:$0xff] 0.0
        %vm1351 = vcmask 588800
        %1352 = vst.msk [vmem:[#allocation2 + $0x10] sm:$0xff] %vm1351, 0.0
        %1356 = vrot.lane.b32.xlu0 %v1346, 19
        %v1357 = vpop.permute.xlu0 %1356
        %1358 = vrot.lane.b32.xlu0 %v1347, 19
        %v1359 = vpop.permute.xlu0 %1358
        %1360 = vrot.lane.b32.xlu0 %v1348, 19
        %v1361 = vpop.permute.xlu0 %1360
        %vm1362 = vcmask 154624
        %v1363 = vsel %vm1362, %v1357, %v1359
        %v1364 = vsel %vm1362, %v1359, %v1361
        %vm1368 = vcmask 1047704
        %1369 = vst.msk [vmem:[#allocation2] sm:$0xff] %vm1368, %v1357
        %1370 = vst [vmem:[#allocation2 + $0x8] sm:$0xff] %v1363
        %vm1371 = vcmask 416768
        %1372 = vst.msk [vmem:[#allocation2 + $0x10] sm:$0xff] %vm1371, %v1364
        %v1373 = vld [vmem:[#allocation2] sm:$0xff]
        %v1374 = vld [vmem:[#allocation2 + $0x8] sm:$0xff]
        %v1375 = vld [vmem:[#allocation2 + $0x10] sm:$0xff]
        %v1376 = vld [vmem:[%s4] sm:$0xf]
        %v1377 = vpack.c.bf16 %v1373, %v1373
        %v1378 = vpack.c.bf16 %v1374, %v1374
        %v1379 = vpack.c.bf16 %v1375, %v1375
        %s1380 = scalar_lea.vmem %s4, 4
        %v1381 = vld [vmem:[%s1380] sm:$0xf]
        %1385 = vrot.lane.b32.xlu0 %v1377, 127
        %v1386 = vpop.permute.xlu0 %1385
        %1387 = vrot.lane.b32.xlu0 %v1378, 127
        %v1388 = vpop.permute.xlu0 %1387
        %1389 = vrot.lane.b32.xlu0 %v1379, 127
        %v1390 = vpop.permute.xlu0 %1389
        %v1391 = vsel %vm362, %v1386, %v1388
        %v1392 = vsel %vm362, %v1388, %v1390
        %v1394 = vsel %vm365, %v1381, 0
        %v1397 = vsel %vm369, %v1391, 0
        %v1400 = vsel %vm369, %v1392, 0
        %v1403 = vsel %vm369, %v1390, 0
        %1405 = vmatprep.subr.bf16.mxu0 0
        %1406 = vmatpush1.bf16.msra.mxu0 0
        %1407 = vmatprep.subr.bf16.mxu0 0
        %1408 = vmatpush1.bf16.msra.mxu0 0
        %1409 = vmatprep.subr.bf16.mxu0 0
        %1410 = vmatpush1.bf16.msra.mxu0 0
        %1411 = vmatprep.subr.bf16.mxu0 0
        %1412 = vmatpush1.bf16.msra.mxu0 0
        %1413 = vmatprep.subr.bf16.mxu0 0
        %1414 = vmatpush1.bf16.msra.mxu0 0
        %1415 = vmatprep.subr.bf16.mxu0 0
        %1416 = vmatpush1.bf16.msra.mxu0 0
        %1417 = vmatprep.subr.bf16.mxu0 0
        %1418 = vmatpush1.bf16.msra.mxu0 0
        %1419 = vmatprep.subr.bf16.mxu0 %v1400
        %1420 = vmatpush1.bf16.msra.mxu0 %v1397
        %1421 = vmatprep.subr.bf16.mxu0 0
        %1422 = vmatpush2.bf16.msra.mxu0 0
        %1423 = vmatprep.subr.bf16.mxu0 0
        %1424 = vmatpush2.bf16.msra.mxu0 0
        %1425 = vmatprep.subr.bf16.mxu0 0
        %1426 = vmatpush2.bf16.msra.mxu0 0
        %1427 = vmatprep.subr.bf16.mxu0 0
        %1428 = vmatpush2.bf16.msra.mxu0 0
        %1429 = vmatprep.subr.bf16.mxu0 0
        %1430 = vmatpush2.bf16.msra.mxu0 0
        %1431 = vmatprep.subr.bf16.mxu0 0
        %1432 = vmatpush2.bf16.msra.mxu0 0
        %1433 = vmatprep.subr.bf16.mxu0 0
        %1434 = vmatpush2.bf16.msra.mxu0 0
        %1435 = vmatprep.subr.bf16.mxu0 0
        %1436 = vmatpush2.bf16.msra.mxu0 0
        %1437 = vmatprep.mubr.bf16.mxu0 0
        %1438 = vmatmul.mubr.bf16.gmra.mxu0 %v1394
        %v1439 = vpop.f32.mrf.mxu0
        %v1440 = vadd.f32 0.0, %v1439
        %v1441 = vpop.f32.mrf.mxu0
        %v1442 = vadd.f32 0.0, %v1441
        %v1443 = vpop.f32.mrf.mxu0
        %v1444 = vpop.f32.mrf.mxu0
        %1445 = vdwg.mxu0
        %1446 = vmatprep.subr.bf16.mxu0 0
        %1447 = vmatpush1.bf16.msra.mxu0 0
        %1448 = vmatprep.subr.bf16.mxu0 0
        %1449 = vmatpush1.bf16.msra.mxu0 0
        %1450 = vmatprep.subr.bf16.mxu0 0
        %1451 = vmatpush1.bf16.msra.mxu0 0
        %1452 = vmatprep.subr.bf16.mxu0 0
        %1453 = vmatpush1.bf16.msra.mxu0 0
        %1454 = vmatprep.subr.bf16.mxu0 0
        %1455 = vmatpush1.bf16.msra.mxu0 0
        %1456 = vmatprep.subr.bf16.mxu0 0
        %1457 = vmatpush1.bf16.msra.mxu0 0
        %1458 = vmatprep.subr.bf16.mxu0 0
        %1459 = vmatpush1.bf16.msra.mxu0 0
        %1460 = vmatprep.subr.bf16.mxu0 0
        %1461 = vmatpush1.bf16.msra.mxu0 %v1403
        %1462 = vmatprep.subr.bf16.mxu0 0
        %1463 = vmatpush2.bf16.msra.mxu0 0
        %1464 = vmatprep.subr.bf16.mxu0 0
        %1465 = vmatpush2.bf16.msra.mxu0 0
        %1466 = vmatprep.subr.bf16.mxu0 0
        %1467 = vmatpush2.bf16.msra.mxu0 0
        %1468 = vmatprep.subr.bf16.mxu0 0
        %1469 = vmatpush2.bf16.msra.mxu0 0
        %1470 = vmatprep.subr.bf16.mxu0 0
        %1471 = vmatpush2.bf16.msra.mxu0 0
        %1472 = vmatprep.subr.bf16.mxu0 0
        %1473 = vmatpush2.bf16.msra.mxu0 0
        %1474 = vmatprep.subr.bf16.mxu0 0
        %1475 = vmatpush2.bf16.msra.mxu0 0
        %1476 = vmatprep.subr.bf16.mxu0 0
        %1477 = vmatpush2.bf16.msra.mxu0 0
        %1478 = vmatprep.mubr.bf16.mxu0 0
        %1479 = vmatmul.mubr.bf16.gmra.mxu0 %v1394
        %v1480 = vpop.f32.mrf.mxu0
        %v1481 = vadd.f32 0.0, %v1480
        %v1482 = vpop.f32.mrf.mxu0
        %v1483 = vpop.f32.mrf.mxu0
        %v1484 = vpop.f32.mrf.mxu0
        %1485 = vdwg.mxu0
        %v1487 = vsel %vm365, %v1376, 0
        %v1490 = vsel %vm369, %v1377, 0
        %v1493 = vsel %vm369, %v1378, 0
        %v1496 = vsel %vm369, %v1379, 0
        %1498 = vmatprep.subr.bf16.mxu0 0
        %1499 = vmatpush1.bf16.msra.mxu0 0
        %1500 = vmatprep.subr.bf16.mxu0 0
        %1501 = vmatpush1.bf16.msra.mxu0 0
        %1502 = vmatprep.subr.bf16.mxu0 0
        %1503 = vmatpush1.bf16.msra.mxu0 0
        %1504 = vmatprep.subr.bf16.mxu0 0
        %1505 = vmatpush1.bf16.msra.mxu0 0
        %1506 = vmatprep.subr.bf16.mxu0 0
        %1507 = vmatpush1.bf16.msra.mxu0 0
        %1508 = vmatprep.subr.bf16.mxu0 0
        %1509 = vmatpush1.bf16.msra.mxu0 0
        %1510 = vmatprep.subr.bf16.mxu0 0
        %1511 = vmatpush1.bf16.msra.mxu0 0
        %1512 = vmatprep.subr.bf16.mxu0 %v1493
        %1513 = vmatpush1.bf16.msra.mxu0 %v1490
        %1514 = vmatprep.subr.bf16.mxu0 0
        %1515 = vmatpush2.bf16.msra.mxu0 0
        %1516 = vmatprep.subr.bf16.mxu0 0
        %1517 = vmatpush2.bf16.msra.mxu0 0
        %1518 = vmatprep.subr.bf16.mxu0 0
        %1519 = vmatpush2.bf16.msra.mxu0 0
        %1520 = vmatprep.subr.bf16.mxu0 0
        %1521 = vmatpush2.bf16.msra.mxu0 0
        %1522 = vmatprep.subr.bf16.mxu0 0
        %1523 = vmatpush2.bf16.msra.mxu0 0
        %1524 = vmatprep.subr.bf16.mxu0 0
        %1525 = vmatpush2.bf16.msra.mxu0 0
        %1526 = vmatprep.subr.bf16.mxu0 0
        %1527 = vmatpush2.bf16.msra.mxu0 0
        %1528 = vmatprep.subr.bf16.mxu0 0
        %1529 = vmatpush2.bf16.msra.mxu0 0
        %1530 = vmatprep.mubr.bf16.mxu0 0
        %1531 = vmatmul.mubr.bf16.gmra.mxu0 %v1487
        %v1532 = vpop.f32.mrf.mxu0
        %v1533 = vadd.f32 %v1440, %v1532
        %v1534 = vpop.f32.mrf.mxu0
        %v1535 = vadd.f32 %v1442, %v1534
        %v1536 = vpop.f32.mrf.mxu0
        %v1537 = vpop.f32.mrf.mxu0
        %1538 = vdwg.mxu0
        %1539 = vmatprep.subr.bf16.mxu0 0
        %1540 = vmatpush1.bf16.msra.mxu0 0
        %1541 = vmatprep.subr.bf16.mxu0 0
        %1542 = vmatpush1.bf16.msra.mxu0 0
        %1543 = vmatprep.subr.bf16.mxu0 0
        %1544 = vmatpush1.bf16.msra.mxu0 0
        %1545 = vmatprep.subr.bf16.mxu0 0
        %1546 = vmatpush1.bf16.msra.mxu0 0
        %1547 = vmatprep.subr.bf16.mxu0 0
        %1548 = vmatpush1.bf16.msra.mxu0 0
        %1549 = vmatprep.subr.bf16.mxu0 0
        %1550 = vmatpush1.bf16.msra.mxu0 0
        %1551 = vmatprep.subr.bf16.mxu0 0
        %1552 = vmatpush1.bf16.msra.mxu0 0
        %1553 = vmatprep.subr.bf16.mxu0 0
        %1554 = vmatpush1.bf16.msra.mxu0 %v1496
        %1555 = vmatprep.subr.bf16.mxu0 0
        %1556 = vmatpush2.bf16.msra.mxu0 0
        %1557 = vmatprep.subr.bf16.mxu0 0
        %1558 = vmatpush2.bf16.msra.mxu0 0
        %1559 = vmatprep.subr.bf16.mxu0 0
        %1560 = vmatpush2.bf16.msra.mxu0 0
        %1561 = vmatprep.subr.bf16.mxu0 0
        %1562 = vmatpush2.bf16.msra.mxu0 0
        %1563 = vmatprep.subr.bf16.mxu0 0
        %1564 = vmatpush2.bf16.msra.mxu0 0
        %1565 = vmatprep.subr.bf16.mxu0 0
        %1566 = vmatpush2.bf16.msra.mxu0 0
        %1567 = vmatprep.subr.bf16.mxu0 0
        %1568 = vmatpush2.bf16.msra.mxu0 0
        %1569 = vmatprep.subr.bf16.mxu0 0
        %1570 = vmatpush2.bf16.msra.mxu0 0
        %1571 = vmatprep.mubr.bf16.mxu0 0
        %1572 = vmatmul.mubr.bf16.gmra.mxu0 %v1487
        %v1573 = vpop.f32.mrf.mxu0
        %v1574 = vadd.f32 %v1481, %v1573
        %v1575 = vpop.f32.mrf.mxu0
        %v1576 = vpop.f32.mrf.mxu0
        %v1577 = vpop.f32.mrf.mxu0
        %1578 = vdwg.mxu0
        %s1579 = scalar_lea.vmem %s4, 8
        %v1580 = vld [vmem:[%s1579] sm:$0xf]
        %1581 = vrot.lane.b32.xlu0 %v1377, 126
        %v1582 = vpop.permute.xlu0 %1581
        %1583 = vrot.lane.b32.xlu0 %v1378, 126
        %v1584 = vpop.permute.xlu0 %1583
        %1585 = vrot.lane.b32.xlu0 %v1379, 126
        %v1586 = vpop.permute.xlu0 %1585
        %v1587 = vsel %vm561, %v1582, %v1584
        %v1588 = vsel %vm561, %v1584, %v1586
        %v1590 = vsel %vm365, %v1580, 0
        %v1593 = vsel %vm369, %v1587, 0
        %v1596 = vsel %vm369, %v1588, 0
        %v1599 = vsel %vm369, %v1586, 0
        %1601 = vmatprep.subr.bf16.mxu0 0
        %1602 = vmatpush1.bf16.msra.mxu0 0
        %1603 = vmatprep.subr.bf16.mxu0 0
        %1604 = vmatpush1.bf16.msra.mxu0 0
        %1605 = vmatprep.subr.bf16.mxu0 0
        %1606 = vmatpush1.bf16.msra.mxu0 0
        %1607 = vmatprep.subr.bf16.mxu0 0
        %1608 = vmatpush1.bf16.msra.mxu0 0
        %1609 = vmatprep.subr.bf16.mxu0 0
        %1610 = vmatpush1.bf16.msra.mxu0 0
        %1611 = vmatprep.subr.bf16.mxu0 0
        %1612 = vmatpush1.bf16.msra.mxu0 0
        %1613 = vmatprep.subr.bf16.mxu0 0
        %1614 = vmatpush1.bf16.msra.mxu0 0
        %1615 = vmatprep.subr.bf16.mxu0 %v1596
        %1616 = vmatpush1.bf16.msra.mxu0 %v1593
        %1617 = vmatprep.subr.bf16.mxu0 0
        %1618 = vmatpush2.bf16.msra.mxu0 0
        %1619 = vmatprep.subr.bf16.mxu0 0
        %1620 = vmatpush2.bf16.msra.mxu0 0
        %1621 = vmatprep.subr.bf16.mxu0 0
        %1622 = vmatpush2.bf16.msra.mxu0 0
        %1623 = vmatprep.subr.bf16.mxu0 0
        %1624 = vmatpush2.bf16.msra.mxu0 0
        %1625 = vmatprep.subr.bf16.mxu0 0
        %1626 = vmatpush2.bf16.msra.mxu0 0
        %1627 = vmatprep.subr.bf16.mxu0 0
        %1628 = vmatpush2.bf16.msra.mxu0 0
        %1629 = vmatprep.subr.bf16.mxu0 0
        %1630 = vmatpush2.bf16.msra.mxu0 0
        %1631 = vmatprep.subr.bf16.mxu0 0
        %1632 = vmatpush2.bf16.msra.mxu0 0
        %1633 = vmatprep.mubr.bf16.mxu0 0
        %1634 = vmatmul.mubr.bf16.gmra.mxu0 %v1590
        %v1635 = vpop.f32.mrf.mxu0
        %v1636 = vadd.f32 0.0, %v1635
        %v1637 = vpop.f32.mrf.mxu0
        %v1638 = vadd.f32 0.0, %v1637
        %v1639 = vpop.f32.mrf.mxu0
        %v1640 = vpop.f32.mrf.mxu0
        %1641 = vdwg.mxu0
        %1642 = vmatprep.subr.bf16.mxu0 0
        %1643 = vmatpush1.bf16.msra.mxu0 0
        %1644 = vmatprep.subr.bf16.mxu0 0
        %1645 = vmatpush1.bf16.msra.mxu0 0
        %1646 = vmatprep.subr.bf16.mxu0 0
        %1647 = vmatpush1.bf16.msra.mxu0 0
        %1648 = vmatprep.subr.bf16.mxu0 0
        %1649 = vmatpush1.bf16.msra.mxu0 0
        %1650 = vmatprep.subr.bf16.mxu0 0
        %1651 = vmatpush1.bf16.msra.mxu0 0
        %1652 = vmatprep.subr.bf16.mxu0 0
        %1653 = vmatpush1.bf16.msra.mxu0 0
        %1654 = vmatprep.subr.bf16.mxu0 0
        %1655 = vmatpush1.bf16.msra.mxu0 0
        %1656 = vmatprep.subr.bf16.mxu0 0
        %1657 = vmatpush1.bf16.msra.mxu0 %v1599
        %1658 = vmatprep.subr.bf16.mxu0 0
        %1659 = vmatpush2.bf16.msra.mxu0 0
        %1660 = vmatprep.subr.bf16.mxu0 0
        %1661 = vmatpush2.bf16.msra.mxu0 0
        %1662 = vmatprep.subr.bf16.mxu0 0
        %1663 = vmatpush2.bf16.msra.mxu0 0
        %1664 = vmatprep.subr.bf16.mxu0 0
        %1665 = vmatpush2.bf16.msra.mxu0 0
        %1666 = vmatprep.subr.bf16.mxu0 0
        %1667 = vmatpush2.bf16.msra.mxu0 0
        %1668 = vmatprep.subr.bf16.mxu0 0
        %1669 = vmatpush2.bf16.msra.mxu0 0
        %1670 = vmatprep.subr.bf16.mxu0 0
        %1671 = vmatpush2.bf16.msra.mxu0 0
        %1672 = vmatprep.subr.bf16.mxu0 0
        %1673 = vmatpush2.bf16.msra.mxu0 0
        %1674 = vmatprep.mubr.bf16.mxu0 0
        %1675 = vmatmul.mubr.bf16.gmra.mxu0 %v1590
        %v1676 = vpop.f32.mrf.mxu0
        %v1677 = vadd.f32 0.0, %v1676
        %v1678 = vpop.f32.mrf.mxu0
        %v1679 = vpop.f32.mrf.mxu0
        %v1680 = vpop.f32.mrf.mxu0
        %1681 = vdwg.mxu0
        %v1682 = vadd.f32 %v1533, %v1636
        %v1683 = vadd.f32 %v1535, %v1638
        %v1684 = vadd.f32 %v1574, %v1677
        %s1685 = scalar_lea.vmem %s4, 12
        %v1686 = vld [vmem:[%s1685] sm:$0xf]
        %1687 = vrot.lane.b32.xlu0 %v1377, 110
        %v1688 = vpop.permute.xlu0 %1687
        %1689 = vrot.lane.b32.xlu0 %v1378, 110
        %v1690 = vpop.permute.xlu0 %1689
        %1691 = vrot.lane.b32.xlu0 %v1379, 110
        %v1692 = vpop.permute.xlu0 %1691
        %v1693 = vsel %vm668, %v1688, %v1690
        %v1694 = vsel %vm668, %v1690, %v1692
        %v1696 = vsel %vm365, %v1686, 0
        %v1699 = vsel %vm369, %v1693, 0
        %v1702 = vsel %vm369, %v1694, 0
        %v1705 = vsel %vm369, %v1692, 0
        %1707 = vmatprep.subr.bf16.mxu0 0
        %1708 = vmatpush1.bf16.msra.mxu0 0
        %1709 = vmatprep.subr.bf16.mxu0 0
        %1710 = vmatpush1.bf16.msra.mxu0 0
        %1711 = vmatprep.subr.bf16.mxu0 0
        %1712 = vmatpush1.bf16.msra.mxu0 0
        %1713 = vmatprep.subr.bf16.mxu0 0
        %1714 = vmatpush1.bf16.msra.mxu0 0
        %1715 = vmatprep.subr.bf16.mxu0 0
        %1716 = vmatpush1.bf16.msra.mxu0 0
        %1717 = vmatprep.subr.bf16.mxu0 0
        %1718 = vmatpush1.bf16.msra.mxu0 0
        %1719 = vmatprep.subr.bf16.mxu0 0
        %1720 = vmatpush1.bf16.msra.mxu0 0
        %1721 = vmatprep.subr.bf16.mxu0 %v1702
        %1722 = vmatpush1.bf16.msra.mxu0 %v1699
        %1723 = vmatprep.subr.bf16.mxu0 0
        %1724 = vmatpush2.bf16.msra.mxu0 0
        %1725 = vmatprep.subr.bf16.mxu0 0
        %1726 = vmatpush2.bf16.msra.mxu0 0
        %1727 = vmatprep.subr.bf16.mxu0 0
        %1728 = vmatpush2.bf16.msra.mxu0 0
        %1729 = vmatprep.subr.bf16.mxu0 0
        %1730 = vmatpush2.bf16.msra.mxu0 0
        %1731 = vmatprep.subr.bf16.mxu0 0
        %1732 = vmatpush2.bf16.msra.mxu0 0
        %1733 = vmatprep.subr.bf16.mxu0 0
        %1734 = vmatpush2.bf16.msra.mxu0 0
        %1735 = vmatprep.subr.bf16.mxu0 0
        %1736 = vmatpush2.bf16.msra.mxu0 0
        %1737 = vmatprep.subr.bf16.mxu0 0
        %1738 = vmatpush2.bf16.msra.mxu0 0
        %1739 = vmatprep.mubr.bf16.mxu0 0
        %1740 = vmatmul.mubr.bf16.gmra.mxu0 %v1696
        %v1741 = vpop.f32.mrf.mxu0
        %v1742 = vadd.f32 0.0, %v1741
        %v1743 = vpop.f32.mrf.mxu0
        %v1744 = vadd.f32 0.0, %v1743
        %v1745 = vpop.f32.mrf.mxu0
        %v1746 = vpop.f32.mrf.mxu0
        %1747 = vdwg.mxu0
        %1748 = vmatprep.subr.bf16.mxu0 0
        %1749 = vmatpush1.bf16.msra.mxu0 0
        %1750 = vmatprep.subr.bf16.mxu0 0
        %1751 = vmatpush1.bf16.msra.mxu0 0
        %1752 = vmatprep.subr.bf16.mxu0 0
        %1753 = vmatpush1.bf16.msra.mxu0 0
        %1754 = vmatprep.subr.bf16.mxu0 0
        %1755 = vmatpush1.bf16.msra.mxu0 0
        %1756 = vmatprep.subr.bf16.mxu0 0
        %1757 = vmatpush1.bf16.msra.mxu0 0
        %1758 = vmatprep.subr.bf16.mxu0 0
        %1759 = vmatpush1.bf16.msra.mxu0 0
        %1760 = vmatprep.subr.bf16.mxu0 0
        %1761 = vmatpush1.bf16.msra.mxu0 0
        %1762 = vmatprep.subr.bf16.mxu0 0
        %1763 = vmatpush1.bf16.msra.mxu0 %v1705
        %1764 = vmatprep.subr.bf16.mxu0 0
        %1765 = vmatpush2.bf16.msra.mxu0 0
        %1766 = vmatprep.subr.bf16.mxu0 0
        %1767 = vmatpush2.bf16.msra.mxu0 0
        %1768 = vmatprep.subr.bf16.mxu0 0
        %1769 = vmatpush2.bf16.msra.mxu0 0
        %1770 = vmatprep.subr.bf16.mxu0 0
        %1771 = vmatpush2.bf16.msra.mxu0 0
        %1772 = vmatprep.subr.bf16.mxu0 0
        %1773 = vmatpush2.bf16.msra.mxu0 0
        %1774 = vmatprep.subr.bf16.mxu0 0
        %1775 = vmatpush2.bf16.msra.mxu0 0
        %1776 = vmatprep.subr.bf16.mxu0 0
        %1777 = vmatpush2.bf16.msra.mxu0 0
        %1778 = vmatprep.subr.bf16.mxu0 0
        %1779 = vmatpush2.bf16.msra.mxu0 0
        %1780 = vmatprep.mubr.bf16.mxu0 0
        %1781 = vmatmul.mubr.bf16.gmra.mxu0 %v1696
        %v1782 = vpop.f32.mrf.mxu0
        %v1783 = vadd.f32 0.0, %v1782
        %v1784 = vpop.f32.mrf.mxu0
        %v1785 = vpop.f32.mrf.mxu0
        %v1786 = vpop.f32.mrf.mxu0
        %1787 = vdwg.mxu0
        %v1788 = vadd.f32 %v1682, %v1742
        %v1789 = vadd.f32 %v1683, %v1744
        %v1790 = vadd.f32 %v1684, %v1783
        %s1791 = scalar_lea.vmem %s4, 16
        %v1792 = vld [vmem:[%s1791] sm:$0xf]
        %1793 = vrot.lane.b32.xlu0 %v1377, 109
        %v1794 = vpop.permute.xlu0 %1793
        %1795 = vrot.lane.b32.xlu0 %v1378, 109
        %v1796 = vpop.permute.xlu0 %1795
        %1797 = vrot.lane.b32.xlu0 %v1379, 109
        %v1798 = vpop.permute.xlu0 %1797
        %v1799 = vsel %vm775, %v1794, %v1796
        %v1800 = vsel %vm775, %v1796, %v1798
        %v1802 = vsel %vm365, %v1792, 0
        %v1805 = vsel %vm369, %v1799, 0
        %v1808 = vsel %vm369, %v1800, 0
        %v1811 = vsel %vm369, %v1798, 0
        %1813 = vmatprep.subr.bf16.mxu0 0
        %1814 = vmatpush1.bf16.msra.mxu0 0
        %1815 = vmatprep.subr.bf16.mxu0 0
        %1816 = vmatpush1.bf16.msra.mxu0 0
        %1817 = vmatprep.subr.bf16.mxu0 0
        %1818 = vmatpush1.bf16.msra.mxu0 0
        %1819 = vmatprep.subr.bf16.mxu0 0
        %1820 = vmatpush1.bf16.msra.mxu0 0
        %1821 = vmatprep.subr.bf16.mxu0 0
        %1822 = vmatpush1.bf16.msra.mxu0 0
        %1823 = vmatprep.subr.bf16.mxu0 0
        %1824 = vmatpush1.bf16.msra.mxu0 0
        %1825 = vmatprep.subr.bf16.mxu0 0
        %1826 = vmatpush1.bf16.msra.mxu0 0
        %1827 = vmatprep.subr.bf16.mxu0 %v1808
        %1828 = vmatpush1.bf16.msra.mxu0 %v1805
        %1829 = vmatprep.subr.bf16.mxu0 0
        %1830 = vmatpush2.bf16.msra.mxu0 0
        %1831 = vmatprep.subr.bf16.mxu0 0
        %1832 = vmatpush2.bf16.msra.mxu0 0
        %1833 = vmatprep.subr.bf16.mxu0 0
        %1834 = vmatpush2.bf16.msra.mxu0 0
        %1835 = vmatprep.subr.bf16.mxu0 0
        %1836 = vmatpush2.bf16.msra.mxu0 0
        %1837 = vmatprep.subr.bf16.mxu0 0
        %1838 = vmatpush2.bf16.msra.mxu0 0
        %1839 = vmatprep.subr.bf16.mxu0 0
        %1840 = vmatpush2.bf16.msra.mxu0 0
        %1841 = vmatprep.subr.bf16.mxu0 0
        %1842 = vmatpush2.bf16.msra.mxu0 0
        %1843 = vmatprep.subr.bf16.mxu0 0
        %1844 = vmatpush2.bf16.msra.mxu0 0
        %1845 = vmatprep.mubr.bf16.mxu0 0
        %1846 = vmatmul.mubr.bf16.gmra.mxu0 %v1802
        %v1847 = vpop.f32.mrf.mxu0
        %v1848 = vadd.f32 0.0, %v1847
        %v1849 = vpop.f32.mrf.mxu0
        %v1850 = vadd.f32 0.0, %v1849
        %v1851 = vpop.f32.mrf.mxu0
        %v1852 = vpop.f32.mrf.mxu0
        %1853 = vdwg.mxu0
        %1854 = vmatprep.subr.bf16.mxu0 0
        %1855 = vmatpush1.bf16.msra.mxu0 0
        %1856 = vmatprep.subr.bf16.mxu0 0
        %1857 = vmatpush1.bf16.msra.mxu0 0
        %1858 = vmatprep.subr.bf16.mxu0 0
        %1859 = vmatpush1.bf16.msra.mxu0 0
        %1860 = vmatprep.subr.bf16.mxu0 0
        %1861 = vmatpush1.bf16.msra.mxu0 0
        %1862 = vmatprep.subr.bf16.mxu0 0
        %1863 = vmatpush1.bf16.msra.mxu0 0
        %1864 = vmatprep.subr.bf16.mxu0 0
        %1865 = vmatpush1.bf16.msra.mxu0 0
        %1866 = vmatprep.subr.bf16.mxu0 0
        %1867 = vmatpush1.bf16.msra.mxu0 0
        %1868 = vmatprep.subr.bf16.mxu0 0
        %1869 = vmatpush1.bf16.msra.mxu0 %v1811
        %1870 = vmatprep.subr.bf16.mxu0 0
        %1871 = vmatpush2.bf16.msra.mxu0 0
        %1872 = vmatprep.subr.bf16.mxu0 0
        %1873 = vmatpush2.bf16.msra.mxu0 0
        %1874 = vmatprep.subr.bf16.mxu0 0
        %1875 = vmatpush2.bf16.msra.mxu0 0
        %1876 = vmatprep.subr.bf16.mxu0 0
        %1877 = vmatpush2.bf16.msra.mxu0 0
        %1878 = vmatprep.subr.bf16.mxu0 0
        %1879 = vmatpush2.bf16.msra.mxu0 0
        %1880 = vmatprep.subr.bf16.mxu0 0
        %1881 = vmatpush2.bf16.msra.mxu0 0
        %1882 = vmatprep.subr.bf16.mxu0 0
        %1883 = vmatpush2.bf16.msra.mxu0 0
        %1884 = vmatprep.subr.bf16.mxu0 0
        %1885 = vmatpush2.bf16.msra.mxu0 0
        %1886 = vmatprep.mubr.bf16.mxu0 0
        %1887 = vmatmul.mubr.bf16.gmra.mxu0 %v1802
        %v1888 = vpop.f32.mrf.mxu0
        %v1889 = vadd.f32 0.0, %v1888
        %v1890 = vpop.f32.mrf.mxu0
        %v1891 = vpop.f32.mrf.mxu0
        %v1892 = vpop.f32.mrf.mxu0
        %1893 = vdwg.mxu0
        %v1894 = vadd.f32 %v1788, %v1848
        %v1895 = vadd.f32 %v1789, %v1850
        %v1896 = vadd.f32 %v1790, %v1889
        %s1897 = scalar_lea.vmem %s4, 20
        %v1898 = vld [vmem:[%s1897] sm:$0xf]
        %1899 = vrot.lane.b32.xlu0 %v1377, 108
        %v1900 = vpop.permute.xlu0 %1899
        %1901 = vrot.lane.b32.xlu0 %v1378, 108
        %v1902 = vpop.permute.xlu0 %1901
        %1903 = vrot.lane.b32.xlu0 %v1379, 108
        %v1904 = vpop.permute.xlu0 %1903
        %v1905 = vsel %vm882, %v1900, %v1902
        %v1906 = vsel %vm882, %v1902, %v1904
        %v1908 = vsel %vm365, %v1898, 0
        %v1911 = vsel %vm369, %v1905, 0
        %v1914 = vsel %vm369, %v1906, 0
        %v1917 = vsel %vm369, %v1904, 0
        %1919 = vmatprep.subr.bf16.mxu0 0
        %1920 = vmatpush1.bf16.msra.mxu0 0
        %1921 = vmatprep.subr.bf16.mxu0 0
        %1922 = vmatpush1.bf16.msra.mxu0 0
        %1923 = vmatprep.subr.bf16.mxu0 0
        %1924 = vmatpush1.bf16.msra.mxu0 0
        %1925 = vmatprep.subr.bf16.mxu0 0
        %1926 = vmatpush1.bf16.msra.mxu0 0
        %1927 = vmatprep.subr.bf16.mxu0 0
        %1928 = vmatpush1.bf16.msra.mxu0 0
        %1929 = vmatprep.subr.bf16.mxu0 0
        %1930 = vmatpush1.bf16.msra.mxu0 0
        %1931 = vmatprep.subr.bf16.mxu0 0
        %1932 = vmatpush1.bf16.msra.mxu0 0
        %1933 = vmatprep.subr.bf16.mxu0 %v1914
        %1934 = vmatpush1.bf16.msra.mxu0 %v1911
        %1935 = vmatprep.subr.bf16.mxu0 0
        %1936 = vmatpush2.bf16.msra.mxu0 0
        %1937 = vmatprep.subr.bf16.mxu0 0
        %1938 = vmatpush2.bf16.msra.mxu0 0
        %1939 = vmatprep.subr.bf16.mxu0 0
        %1940 = vmatpush2.bf16.msra.mxu0 0
        %1941 = vmatprep.subr.bf16.mxu0 0
        %1942 = vmatpush2.bf16.msra.mxu0 0
        %1943 = vmatprep.subr.bf16.mxu0 0
        %1944 = vmatpush2.bf16.msra.mxu0 0
        %1945 = vmatprep.subr.bf16.mxu0 0
        %1946 = vmatpush2.bf16.msra.mxu0 0
        %1947 = vmatprep.subr.bf16.mxu0 0
        %1948 = vmatpush2.bf16.msra.mxu0 0
        %1949 = vmatprep.subr.bf16.mxu0 0
        %1950 = vmatpush2.bf16.msra.mxu0 0
        %1951 = vmatprep.mubr.bf16.mxu0 0
        %1952 = vmatmul.mubr.bf16.gmra.mxu0 %v1908
        %v1953 = vpop.f32.mrf.mxu0
        %v1954 = vadd.f32 0.0, %v1953
        %v1955 = vpop.f32.mrf.mxu0
        %v1956 = vadd.f32 0.0, %v1955
        %v1957 = vpop.f32.mrf.mxu0
        %v1958 = vpop.f32.mrf.mxu0
        %1959 = vdwg.mxu0
        %1960 = vmatprep.subr.bf16.mxu0 0
        %1961 = vmatpush1.bf16.msra.mxu0 0
        %1962 = vmatprep.subr.bf16.mxu0 0
        %1963 = vmatpush1.bf16.msra.mxu0 0
        %1964 = vmatprep.subr.bf16.mxu0 0
        %1965 = vmatpush1.bf16.msra.mxu0 0
        %1966 = vmatprep.subr.bf16.mxu0 0
        %1967 = vmatpush1.bf16.msra.mxu0 0
        %1968 = vmatprep.subr.bf16.mxu0 0
        %1969 = vmatpush1.bf16.msra.mxu0 0
        %1970 = vmatprep.subr.bf16.mxu0 0
        %1971 = vmatpush1.bf16.msra.mxu0 0
        %1972 = vmatprep.subr.bf16.mxu0 0
        %1973 = vmatpush1.bf16.msra.mxu0 0
        %1974 = vmatprep.subr.bf16.mxu0 0
        %1975 = vmatpush1.bf16.msra.mxu0 %v1917
        %1976 = vmatprep.subr.bf16.mxu0 0
        %1977 = vmatpush2.bf16.msra.mxu0 0
        %1978 = vmatprep.subr.bf16.mxu0 0
        %1979 = vmatpush2.bf16.msra.mxu0 0
        %1980 = vmatprep.subr.bf16.mxu0 0
        %1981 = vmatpush2.bf16.msra.mxu0 0
        %1982 = vmatprep.subr.bf16.mxu0 0
        %1983 = vmatpush2.bf16.msra.mxu0 0
        %1984 = vmatprep.subr.bf16.mxu0 0
        %1985 = vmatpush2.bf16.msra.mxu0 0
        %1986 = vmatprep.subr.bf16.mxu0 0
        %1987 = vmatpush2.bf16.msra.mxu0 0
        %1988 = vmatprep.subr.bf16.mxu0 0
        %1989 = vmatpush2.bf16.msra.mxu0 0
        %1990 = vmatprep.subr.bf16.mxu0 0
        %1991 = vmatpush2.bf16.msra.mxu0 0
        %1992 = vmatprep.mubr.bf16.mxu0 0
        %1993 = vmatmul.mubr.bf16.gmra.mxu0 %v1908
        %v1994 = vpop.f32.mrf.mxu0
        %v1995 = vadd.f32 0.0, %v1994
        %v1996 = vpop.f32.mrf.mxu0
        %v1997 = vpop.f32.mrf.mxu0
        %v1998 = vpop.f32.mrf.mxu0
        %1999 = vdwg.mxu0
        %v2000 = vadd.f32 %v1894, %v1954
        %v2001 = vadd.f32 %v1895, %v1956
        %v2002 = vadd.f32 %v1896, %v1995
        %s2003 = scalar_lea.vmem %s4, 24
        %v2004 = vld [vmem:[%s2003] sm:$0xf]
        %2005 = vrot.lane.b32.xlu0 %v1377, 92
        %v2006 = vpop.permute.xlu0 %2005
        %2007 = vrot.lane.b32.xlu0 %v1378, 92
        %v2008 = vpop.permute.xlu0 %2007
        %2009 = vrot.lane.b32.xlu0 %v1379, 92
        %v2010 = vpop.permute.xlu0 %2009
        %v2011 = vsel %vm989, %v2006, %v2008
        %v2012 = vsel %vm989, %v2008, %v2010
        %v2014 = vsel %vm365, %v2004, 0
        %v2017 = vsel %vm369, %v2011, 0
        %v2020 = vsel %vm369, %v2012, 0
        %v2023 = vsel %vm369, %v2010, 0
        %2025 = vmatprep.subr.bf16.mxu0 0
        %2026 = vmatpush1.bf16.msra.mxu0 0
        %2027 = vmatprep.subr.bf16.mxu0 0
        %2028 = vmatpush1.bf16.msra.mxu0 0
        %2029 = vmatprep.subr.bf16.mxu0 0
        %2030 = vmatpush1.bf16.msra.mxu0 0
        %2031 = vmatprep.subr.bf16.mxu0 0
        %2032 = vmatpush1.bf16.msra.mxu0 0
        %2033 = vmatprep.subr.bf16.mxu0 0
        %2034 = vmatpush1.bf16.msra.mxu0 0
        %2035 = vmatprep.subr.bf16.mxu0 0
        %2036 = vmatpush1.bf16.msra.mxu0 0
        %2037 = vmatprep.subr.bf16.mxu0 0
        %2038 = vmatpush1.bf16.msra.mxu0 0
        %2039 = vmatprep.subr.bf16.mxu0 %v2020
        %2040 = vmatpush1.bf16.msra.mxu0 %v2017
        %2041 = vmatprep.subr.bf16.mxu0 0
        %2042 = vmatpush2.bf16.msra.mxu0 0
        %2043 = vmatprep.subr.bf16.mxu0 0
        %2044 = vmatpush2.bf16.msra.mxu0 0
        %2045 = vmatprep.subr.bf16.mxu0 0
        %2046 = vmatpush2.bf16.msra.mxu0 0
        %2047 = vmatprep.subr.bf16.mxu0 0
        %2048 = vmatpush2.bf16.msra.mxu0 0
        %2049 = vmatprep.subr.bf16.mxu0 0
        %2050 = vmatpush2.bf16.msra.mxu0 0
        %2051 = vmatprep.subr.bf16.mxu0 0
        %2052 = vmatpush2.bf16.msra.mxu0 0
        %2053 = vmatprep.subr.bf16.mxu0 0
        %2054 = vmatpush2.bf16.msra.mxu0 0
        %2055 = vmatprep.subr.bf16.mxu0 0
        %2056 = vmatpush2.bf16.msra.mxu0 0
        %2057 = vmatprep.mubr.bf16.mxu0 0
        %2058 = vmatmul.mubr.bf16.gmra.mxu0 %v2014
        %v2059 = vpop.f32.mrf.mxu0
        %v2060 = vadd.f32 0.0, %v2059
        %v2061 = vpop.f32.mrf.mxu0
        %v2062 = vadd.f32 0.0, %v2061
        %v2063 = vpop.f32.mrf.mxu0
        %v2064 = vpop.f32.mrf.mxu0
        %2065 = vdwg.mxu0
        %2066 = vmatprep.subr.bf16.mxu0 0
        %2067 = vmatpush1.bf16.msra.mxu0 0
        %2068 = vmatprep.subr.bf16.mxu0 0
        %2069 = vmatpush1.bf16.msra.mxu0 0
        %2070 = vmatprep.subr.bf16.mxu0 0
        %2071 = vmatpush1.bf16.msra.mxu0 0
        %2072 = vmatprep.subr.bf16.mxu0 0
        %2073 = vmatpush1.bf16.msra.mxu0 0
        %2074 = vmatprep.subr.bf16.mxu0 0
        %2075 = vmatpush1.bf16.msra.mxu0 0
        %2076 = vmatprep.subr.bf16.mxu0 0
        %2077 = vmatpush1.bf16.msra.mxu0 0
        %2078 = vmatprep.subr.bf16.mxu0 0
        %2079 = vmatpush1.bf16.msra.mxu0 0
        %2080 = vmatprep.subr.bf16.mxu0 0
        %2081 = vmatpush1.bf16.msra.mxu0 %v2023
        %2082 = vmatprep.subr.bf16.mxu0 0
        %2083 = vmatpush2.bf16.msra.mxu0 0
        %2084 = vmatprep.subr.bf16.mxu0 0
        %2085 = vmatpush2.bf16.msra.mxu0 0
        %2086 = vmatprep.subr.bf16.mxu0 0
        %2087 = vmatpush2.bf16.msra.mxu0 0
        %2088 = vmatprep.subr.bf16.mxu0 0
        %2089 = vmatpush2.bf16.msra.mxu0 0
        %2090 = vmatprep.subr.bf16.mxu0 0
        %2091 = vmatpush2.bf16.msra.mxu0 0
        %2092 = vmatprep.subr.bf16.mxu0 0
        %2093 = vmatpush2.bf16.msra.mxu0 0
        %2094 = vmatprep.subr.bf16.mxu0 0
        %2095 = vmatpush2.bf16.msra.mxu0 0
        %2096 = vmatprep.subr.bf16.mxu0 0
        %2097 = vmatpush2.bf16.msra.mxu0 0
        %2098 = vmatprep.mubr.bf16.mxu0 0
        %2099 = vmatmul.mubr.bf16.gmra.mxu0 %v2014
        %v2100 = vpop.f32.mrf.mxu0
        %v2101 = vadd.f32 0.0, %v2100
        %v2102 = vpop.f32.mrf.mxu0
        %v2103 = vpop.f32.mrf.mxu0
        %v2104 = vpop.f32.mrf.mxu0
        %2105 = vdwg.mxu0
        %v2106 = vadd.f32 %v2000, %v2060
        %v2107 = vadd.f32 %v2001, %v2062
        %v2108 = vadd.f32 %v2002, %v2101
        %s2109 = scalar_lea.vmem %s4, 28
        %v2110 = vld [vmem:[%s2109] sm:$0xf]
        %2111 = vrot.lane.b32.xlu0 %v1377, 91
        %v2112 = vpop.permute.xlu0 %2111
        %2113 = vrot.lane.b32.xlu0 %v1378, 91
        %v2114 = vpop.permute.xlu0 %2113
        %2115 = vrot.lane.b32.xlu0 %v1379, 91
        %v2116 = vpop.permute.xlu0 %2115
        %v2117 = vsel %vm1096, %v2112, %v2114
        %v2118 = vsel %vm1096, %v2114, %v2116
        %v2120 = vsel %vm365, %v2110, 0
        %v2123 = vsel %vm369, %v2117, 0
        %v2126 = vsel %vm369, %v2118, 0
        %v2129 = vsel %vm369, %v2116, 0
        %2131 = vmatprep.subr.bf16.mxu0 0
        %2132 = vmatpush1.bf16.msra.mxu0 0
        %2133 = vmatprep.subr.bf16.mxu0 0
        %2134 = vmatpush1.bf16.msra.mxu0 0
        %2135 = vmatprep.subr.bf16.mxu0 0
        %2136 = vmatpush1.bf16.msra.mxu0 0
        %2137 = vmatprep.subr.bf16.mxu0 0
        %2138 = vmatpush1.bf16.msra.mxu0 0
        %2139 = vmatprep.subr.bf16.mxu0 0
        %2140 = vmatpush1.bf16.msra.mxu0 0
        %2141 = vmatprep.subr.bf16.mxu0 0
        %2142 = vmatpush1.bf16.msra.mxu0 0
        %2143 = vmatprep.subr.bf16.mxu0 0
        %2144 = vmatpush1.bf16.msra.mxu0 0
        %2145 = vmatprep.subr.bf16.mxu0 %v2126
        %2146 = vmatpush1.bf16.msra.mxu0 %v2123
        %2147 = vmatprep.subr.bf16.mxu0 0
        %2148 = vmatpush2.bf16.msra.mxu0 0
        %2149 = vmatprep.subr.bf16.mxu0 0
        %2150 = vmatpush2.bf16.msra.mxu0 0
        %2151 = vmatprep.subr.bf16.mxu0 0
        %2152 = vmatpush2.bf16.msra.mxu0 0
        %2153 = vmatprep.subr.bf16.mxu0 0
        %2154 = vmatpush2.bf16.msra.mxu0 0
        %2155 = vmatprep.subr.bf16.mxu0 0
        %2156 = vmatpush2.bf16.msra.mxu0 0
        %2157 = vmatprep.subr.bf16.mxu0 0
        %2158 = vmatpush2.bf16.msra.mxu0 0
        %2159 = vmatprep.subr.bf16.mxu0 0
        %2160 = vmatpush2.bf16.msra.mxu0 0
        %2161 = vmatprep.subr.bf16.mxu0 0
        %2162 = vmatpush2.bf16.msra.mxu0 0
        %2163 = vmatprep.mubr.bf16.mxu0 0
        %2164 = vmatmul.mubr.bf16.gmra.mxu0 %v2120
        %v2165 = vpop.f32.mrf.mxu0
        %v2166 = vadd.f32 0.0, %v2165
        %v2167 = vpop.f32.mrf.mxu0
        %v2168 = vadd.f32 0.0, %v2167
        %v2169 = vpop.f32.mrf.mxu0
        %v2170 = vpop.f32.mrf.mxu0
        %2171 = vdwg.mxu0
        %2172 = vmatprep.subr.bf16.mxu0 0
        %2173 = vmatpush1.bf16.msra.mxu0 0
        %2174 = vmatprep.subr.bf16.mxu0 0
        %2175 = vmatpush1.bf16.msra.mxu0 0
        %2176 = vmatprep.subr.bf16.mxu0 0
        %2177 = vmatpush1.bf16.msra.mxu0 0
        %2178 = vmatprep.subr.bf16.mxu0 0
        %2179 = vmatpush1.bf16.msra.mxu0 0
        %2180 = vmatprep.subr.bf16.mxu0 0
        %2181 = vmatpush1.bf16.msra.mxu0 0
        %2182 = vmatprep.subr.bf16.mxu0 0
        %2183 = vmatpush1.bf16.msra.mxu0 0
        %2184 = vmatprep.subr.bf16.mxu0 0
        %2185 = vmatpush1.bf16.msra.mxu0 0
        %2186 = vmatprep.subr.bf16.mxu0 0
        %2187 = vmatpush1.bf16.msra.mxu0 %v2129
        %2188 = vmatprep.subr.bf16.mxu0 0
        %2189 = vmatpush2.bf16.msra.mxu0 0
        %2190 = vmatprep.subr.bf16.mxu0 0
        %2191 = vmatpush2.bf16.msra.mxu0 0
        %2192 = vmatprep.subr.bf16.mxu0 0
        %2193 = vmatpush2.bf16.msra.mxu0 0
        %2194 = vmatprep.subr.bf16.mxu0 0
        %2195 = vmatpush2.bf16.msra.mxu0 0
        %2196 = vmatprep.subr.bf16.mxu0 0
        %2197 = vmatpush2.bf16.msra.mxu0 0
        %2198 = vmatprep.subr.bf16.mxu0 0
        %2199 = vmatpush2.bf16.msra.mxu0 0
        %2200 = vmatprep.subr.bf16.mxu0 0
        %2201 = vmatpush2.bf16.msra.mxu0 0
        %2202 = vmatprep.subr.bf16.mxu0 0
        %2203 = vmatpush2.bf16.msra.mxu0 0
        %2204 = vmatprep.mubr.bf16.mxu0 0
        %2205 = vmatmul.mubr.bf16.gmra.mxu0 %v2120
        %v2206 = vpop.f32.mrf.mxu0
        %v2207 = vadd.f32 0.0, %v2206
        %v2208 = vpop.f32.mrf.mxu0
        %v2209 = vpop.f32.mrf.mxu0
        %v2210 = vpop.f32.mrf.mxu0
        %2211 = vdwg.mxu0
        %v2212 = vadd.f32 %v2106, %v2166
        %v2213 = vadd.f32 %v2107, %v2168
        %v2214 = vadd.f32 %v2108, %v2207
        %s2215 = scalar_lea.vmem %s4, 32
        %v2216 = vld [vmem:[%s2215] sm:$0xf]
        %2217 = vrot.lane.b32.xlu0 %v1377, 90
        %v2218 = vpop.permute.xlu0 %2217
        %2219 = vrot.lane.b32.xlu0 %v1378, 90
        %v2220 = vpop.permute.xlu0 %2219
        %2221 = vrot.lane.b32.xlu0 %v1379, 90
        %v2222 = vpop.permute.xlu0 %2221
        %v2223 = vsel %vm1203, %v2218, %v2220
        %v2224 = vsel %vm1203, %v2220, %v2222
        %v2226 = vsel %vm365, %v2216, 0
        %v2229 = vsel %vm369, %v2223, 0
        %v2232 = vsel %vm369, %v2224, 0
        %v2235 = vsel %vm369, %v2222, 0
        %2237 = vmatprep.subr.bf16.mxu0 0
        %2238 = vmatpush1.bf16.msra.mxu0 0
        %2239 = vmatprep.subr.bf16.mxu0 0
        %2240 = vmatpush1.bf16.msra.mxu0 0
        %2241 = vmatprep.subr.bf16.mxu0 0
        %2242 = vmatpush1.bf16.msra.mxu0 0
        %2243 = vmatprep.subr.bf16.mxu0 0
        %2244 = vmatpush1.bf16.msra.mxu0 0
        %2245 = vmatprep.subr.bf16.mxu0 0
        %2246 = vmatpush1.bf16.msra.mxu0 0
        %2247 = vmatprep.subr.bf16.mxu0 0
        %2248 = vmatpush1.bf16.msra.mxu0 0
        %2249 = vmatprep.subr.bf16.mxu0 0
        %2250 = vmatpush1.bf16.msra.mxu0 0
        %2251 = vmatprep.subr.bf16.mxu0 %v2232
        %2252 = vmatpush1.bf16.msra.mxu0 %v2229
        %2253 = vmatprep.subr.bf16.mxu0 0
        %2254 = vmatpush2.bf16.msra.mxu0 0
        %2255 = vmatprep.subr.bf16.mxu0 0
        %2256 = vmatpush2.bf16.msra.mxu0 0
        %2257 = vmatprep.subr.bf16.mxu0 0
        %2258 = vmatpush2.bf16.msra.mxu0 0
        %2259 = vmatprep.subr.bf16.mxu0 0
        %2260 = vmatpush2.bf16.msra.mxu0 0
        %2261 = vmatprep.subr.bf16.mxu0 0
        %2262 = vmatpush2.bf16.msra.mxu0 0
        %2263 = vmatprep.subr.bf16.mxu0 0
        %2264 = vmatpush2.bf16.msra.mxu0 0
        %2265 = vmatprep.subr.bf16.mxu0 0
        %2266 = vmatpush2.bf16.msra.mxu0 0
        %2267 = vmatprep.subr.bf16.mxu0 0
        %2268 = vmatpush2.bf16.msra.mxu0 0
        %2269 = vmatprep.mubr.bf16.mxu0 0
        %2270 = vmatmul.mubr.bf16.gmra.mxu0 %v2226
        %v2271 = vpop.f32.mrf.mxu0
        %v2272 = vadd.f32 0.0, %v2271
        %v2273 = vpop.f32.mrf.mxu0
        %v2274 = vadd.f32 0.0, %v2273
        %v2275 = vpop.f32.mrf.mxu0
        %v2276 = vpop.f32.mrf.mxu0
        %2277 = vdwg.mxu0
        %2278 = vmatprep.subr.bf16.mxu0 0
        %2279 = vmatpush1.bf16.msra.mxu0 0
        %2280 = vmatprep.subr.bf16.mxu0 0
        %2281 = vmatpush1.bf16.msra.mxu0 0
        %2282 = vmatprep.subr.bf16.mxu0 0
        %2283 = vmatpush1.bf16.msra.mxu0 0
        %2284 = vmatprep.subr.bf16.mxu0 0
        %2285 = vmatpush1.bf16.msra.mxu0 0
        %2286 = vmatprep.subr.bf16.mxu0 0
        %2287 = vmatpush1.bf16.msra.mxu0 0
        %2288 = vmatprep.subr.bf16.mxu0 0
        %2289 = vmatpush1.bf16.msra.mxu0 0
        %2290 = vmatprep.subr.bf16.mxu0 0
        %2291 = vmatpush1.bf16.msra.mxu0 0
        %2292 = vmatprep.subr.bf16.mxu0 0
        %2293 = vmatpush1.bf16.msra.mxu0 %v2235
        %2294 = vmatprep.subr.bf16.mxu0 0
        %2295 = vmatpush2.bf16.msra.mxu0 0
        %2296 = vmatprep.subr.bf16.mxu0 0
        %2297 = vmatpush2.bf16.msra.mxu0 0
        %2298 = vmatprep.subr.bf16.mxu0 0
        %2299 = vmatpush2.bf16.msra.mxu0 0
        %2300 = vmatprep.subr.bf16.mxu0 0
        %2301 = vmatpush2.bf16.msra.mxu0 0
        %2302 = vmatprep.subr.bf16.mxu0 0
        %2303 = vmatpush2.bf16.msra.mxu0 0
        %2304 = vmatprep.subr.bf16.mxu0 0
        %2305 = vmatpush2.bf16.msra.mxu0 0
        %2306 = vmatprep.subr.bf16.mxu0 0
        %2307 = vmatpush2.bf16.msra.mxu0 0
        %2308 = vmatprep.subr.bf16.mxu0 0
        %2309 = vmatpush2.bf16.msra.mxu0 0
        %2310 = vmatprep.mubr.bf16.mxu0 0
        %2311 = vmatmul.mubr.bf16.gmra.mxu0 %v2226
        %v2312 = vpop.f32.mrf.mxu0
        %v2313 = vadd.f32 0.0, %v2312
        %v2314 = vpop.f32.mrf.mxu0
        %v2315 = vpop.f32.mrf.mxu0
        %v2316 = vpop.f32.mrf.mxu0
        %2317 = vdwg.mxu0
        %v2318 = vadd.f32 %v2212, %v2272
        %v2319 = vadd.f32 %v2213, %v2274
        %v2320 = vadd.f32 %v2214, %v2313
        %v2321 = vld [vmem:[%s5] sm:$0xff]
        %2323 = vset.pattern.permute.xlu0 0
        %2324 = vperm.xlu0 %2323, %v2321
        %v2325 = vpop.permute.xlu0 %2324
        %v2327 = vadd.f32 %v2318, %v2325
        %v2328 = vadd.f32 %v2319, %v2325
        %v2329 = vadd.f32 %v2320, %v2325
        %v2330 = vmax.f32 %v2327, 0.0
        %v2331 = vmax.f32 %v2328, 0.0
        %v2332 = vmax.f32 %v2329, 0.0
        %v2333 = vmin.f32 %v2330, 127.0
        %v2334 = vmin.f32 %v2331, 127.0
        %v2335 = vmin.f32 %v2332, 127.0
        %v2336 = vmul.f32 %v2333, 0.5
        %v2337 = vmul.f32 %v2334, 0.5
        %v2338 = vmul.f32 %v2335, 0.5
        %v2339 = vround.ne.pseudo %v2336
        %v2340 = vround.ne.pseudo %v2337
        %v2341 = vround.ne.pseudo %v2338
        %v2342 = vmax.f32 %v2339, -128.0
        %v2343 = vmax.f32 %v2340, -128.0
        %v2344 = vmax.f32 %v2341, -128.0
        %v2345 = vmin.f32 %v2342, 127.0
        %v2346 = vmin.f32 %v2343, 127.0
        %v2347 = vmin.f32 %v2344, 127.0
        %v2348 = vld [vmem:[%s7] sm:$0x1]
        %v2349 = vpack.c.bf16 %v2345, %v2345
        %v2350 = vpack.c.bf16 %v2346, %v2346
        %v2351 = vpack.c.bf16 %v2347, %v2347
        %v2352 = vld [vmem:[#allocation3] sm:$0xf]
        %v2353 = vld [vmem:[#allocation3 + $0x4] sm:$0xf]
        %v2354 = vld [vmem:[#allocation3 + $0x8] sm:$0xf]
        %v2355 = vld [vmem:[#allocation3 + $0xc] sm:$0xf]
        %v2356 = vld [vmem:[#allocation3 + $0x10] sm:$0xf]
        %v2357 = vld [vmem:[#allocation3 + $0x14] sm:$0xf]
        %v2358 = vld [vmem:[#allocation3 + $0x18] sm:$0xf]
        %v2359 = vld [vmem:[#allocation3 + $0x1c] sm:$0xf]
        %v2360 = vld [vmem:[#allocation3 + $0x20] sm:$0xf]
        %v2361 = vld [vmem:[#allocation3 + $0x24] sm:$0xf]
        %v2362 = vld [vmem:[#allocation3 + $0x28] sm:$0xf]
        %v2363 = vld [vmem:[#allocation3 + $0x2c] sm:$0xf]
        %v2364 = vld [vmem:[#allocation3 + $0x30] sm:$0xf]
        %v2365 = vld [vmem:[#allocation3 + $0x34] sm:$0xf]
        %v2366 = vld [vmem:[#allocation3 + $0x38] sm:$0xf]
        %v2367 = vld [vmem:[#allocation3 + $0x3c] sm:$0xf]
        %v2368 = vld [vmem:[#allocation3 + $0x40] sm:$0xf]
        %v2369 = vld [vmem:[#allocation3 + $0x44] sm:$0xf]
        %v2370 = vld [vmem:[#allocation3 + $0x48] sm:$0xf]
        %v2371 = vld [vmem:[#allocation3 + $0x4c] sm:$0xf]
        %v2372 = vld [vmem:[#allocation3 + $0x50] sm:$0xf]
        %v2373 = vld [vmem:[#allocation3 + $0x54] sm:$0xf]
        %v2374 = vld [vmem:[#allocation3 + $0x58] sm:$0xf]
        %v2375 = vld [vmem:[#allocation3 + $0x5c] sm:$0xf]
        %v2376 = vld [vmem:[#allocation3 + $0x60] sm:$0xf]
        %v2377 = vld [vmem:[#allocation3 + $0x64] sm:$0xf]
        %v2378 = vld [vmem:[#allocation3 + $0x68] sm:$0xf]
        %v2379 = vld [vmem:[#allocation3 + $0x6c] sm:$0xf]
        %v2380 = vld [vmem:[#allocation3 + $0x70] sm:$0xf]
        %v2381 = vld [vmem:[#allocation3 + $0x74] sm:$0xf]
        %v2382 = vld [vmem:[#allocation3 + $0x78] sm:$0xf]
        %v2383 = vld [vmem:[#allocation3 + $0x7c] sm:$0xf]
        %v2384 = vld [vmem:[#allocation3 + $0x80] sm:$0xf]
        %v2385 = vld [vmem:[#allocation3 + $0x84] sm:$0xf]
        %v2386 = vld [vmem:[#allocation3 + $0x88] sm:$0xf]
        %v2387 = vld [vmem:[#allocation3 + $0x8c] sm:$0xf]
        %v2424 = vunpack.c.l.b16 %v2352
        %v2425 = vunpack.c.l.b16 %v2353
        %v2426 = vunpack.c.l.b16 %v2354
        %v2427 = vunpack.c.l.b16 %v2355
        %v2428 = vunpack.c.l.b16 %v2356
        %v2429 = vunpack.c.l.b16 %v2357
        %v2430 = vunpack.c.l.b16 %v2358
        %v2431 = vunpack.c.l.b16 %v2359
        %v2432 = vunpack.c.l.b16 %v2360
        %v2433 = vunpack.c.l.b16 %v2361
        %v2434 = vunpack.c.l.b16 %v2362
        %v2435 = vunpack.c.l.b16 %v2363
        %v2436 = vunpack.c.l.b16 %v2364
        %v2437 = vunpack.c.l.b16 %v2365
        %v2438 = vunpack.c.l.b16 %v2366
        %v2439 = vunpack.c.l.b16 %v2367
        %v2440 = vunpack.c.l.b16 %v2368
        %v2441 = vunpack.c.l.b16 %v2369
        %v2442 = vunpack.c.l.b16 %v2370
        %v2443 = vunpack.c.l.b16 %v2371
        %v2444 = vunpack.c.l.b16 %v2372
        %v2445 = vunpack.c.l.b16 %v2373
        %v2446 = vunpack.c.l.b16 %v2374
        %v2447 = vunpack.c.l.b16 %v2375
        %v2448 = vunpack.c.l.b16 %v2376
        %v2449 = vunpack.c.l.b16 %v2377
        %v2450 = vunpack.c.l.b16 %v2378
        %v2451 = vunpack.c.l.b16 %v2379
        %v2452 = vunpack.c.l.b16 %v2380
        %v2453 = vunpack.c.l.b16 %v2381
        %v2454 = vunpack.c.l.b16 %v2382
        %v2455 = vunpack.c.l.b16 %v2383
        %v2456 = vunpack.c.l.b16 %v2384
        %v2457 = vunpack.c.l.b16 %v2385
        %v2458 = vunpack.c.l.b16 %v2386
        %v2459 = vunpack.c.l.b16 %v2387
        %v2460 = vpack.c.b16 %v2425, %v2424
        %v2461 = vpack.c.b16 %v2427, %v2426
        %v2462 = vpack.c.b16 %v2429, %v2428
        %v2463 = vpack.c.b16 %v2431, %v2430
        %v2464 = vpack.c.b16 %v2433, %v2432
        %v2465 = vpack.c.b16 %v2435, %v2434
        %v2466 = vpack.c.b16 %v2437, %v2436
        %v2467 = vpack.c.b16 %v2439, %v2438
        %v2468 = vpack.c.b16 %v2441, %v2440
        %v2469 = vpack.c.b16 %v2443, %v2442
        %v2470 = vpack.c.b16 %v2445, %v2444
        %v2471 = vpack.c.b16 %v2447, %v2446
        %v2472 = vpack.c.b16 %v2449, %v2448
        %v2473 = vpack.c.b16 %v2451, %v2450
        %v2474 = vpack.c.b16 %v2453, %v2452
        %v2475 = vpack.c.b16 %v2455, %v2454
        %v2476 = vpack.c.b16 %v2457, %v2456
        %v2477 = vpack.c.b16 %v2459, %v2458
        %vm2496 = vcmask 261120
        %v2498 = vsel %vm2496, %v2351, 0
        %2500 = vmatprep.subr.bf16.mxu0 0
        %2501 = vmatpush1.bf16.msra.mxu0 %v2467
        %2502 = vmatprep.subr.bf16.mxu0 0
        %2503 = vmatpush1.bf16.msra.mxu0 %v2466
        %2504 = vmatprep.subr.bf16.mxu0 0
        %2505 = vmatpush1.bf16.msra.mxu0 %v2465
        %2506 = vmatprep.subr.bf16.mxu0 0
        %2507 = vmatpush1.bf16.msra.mxu0 %v2464
        %2508 = vmatprep.subr.bf16.mxu0 0
        %2509 = vmatpush1.bf16.msra.mxu0 %v2463
        %2510 = vmatprep.subr.bf16.mxu0 0
        %2511 = vmatpush1.bf16.msra.mxu0 %v2462
        %2512 = vmatprep.subr.bf16.mxu0 0
        %2513 = vmatpush1.bf16.msra.mxu0 %v2461
        %2514 = vmatprep.subr.bf16.mxu0 0
        %2515 = vmatpush1.bf16.msra.mxu0 %v2460
        %2516 = vmatprep.subr.bf16.mxu0 0
        %2517 = vmatpush2.bf16.msra.mxu0 %v2475
        %2518 = vmatprep.subr.bf16.mxu0 0
        %2519 = vmatpush2.bf16.msra.mxu0 %v2474
        %2520 = vmatprep.subr.bf16.mxu0 0
        %2521 = vmatpush2.bf16.msra.mxu0 %v2473
        %2522 = vmatprep.subr.bf16.mxu0 0
        %2523 = vmatpush2.bf16.msra.mxu0 %v2472
        %2524 = vmatprep.subr.bf16.mxu0 0
        %2525 = vmatpush2.bf16.msra.mxu0 %v2471
        %2526 = vmatprep.subr.bf16.mxu0 0
        %2527 = vmatpush2.bf16.msra.mxu0 %v2470
        %2528 = vmatprep.subr.bf16.mxu0 0
        %2529 = vmatpush2.bf16.msra.mxu0 %v2469
        %2530 = vmatprep.subr.bf16.mxu0 0
        %2531 = vmatpush2.bf16.msra.mxu0 %v2468
        %2532 = vmatprep.mubr.bf16.mxu0 %v2350
        %2533 = vmatmul.mubr.bf16.gmra.mxu0 %v2349
        %v2534 = vpop.f32.mrf.mxu0
        %v2535 = vadd.f32 0.0, %v2534
        %v2536 = vpop.f32.mrf.mxu0
        %v2537 = vpop.f32.mrf.mxu0
        %v2538 = vpop.f32.mrf.mxu0
        %2539 = vdwg.mxu0
        %2540 = vmatprep.subr.bf16.mxu0 0
        %2541 = vmatpush1.bf16.msra.mxu0 0
        %2542 = vmatprep.subr.bf16.mxu0 0
        %2543 = vmatpush1.bf16.msra.mxu0 0
        %2544 = vmatprep.subr.bf16.mxu0 0
        %2545 = vmatpush1.bf16.msra.mxu0 0
        %2546 = vmatprep.subr.bf16.mxu0 0
        %2547 = vmatpush1.bf16.msra.mxu0 0
        %2548 = vmatprep.subr.bf16.mxu0 0
        %2549 = vmatpush1.bf16.msra.mxu0 0
        %2550 = vmatprep.subr.bf16.mxu0 0
        %2551 = vmatpush1.bf16.msra.mxu0 0
        %2552 = vmatprep.subr.bf16.mxu0 0
        %2553 = vmatpush1.bf16.msra.mxu0 %v2477
        %2554 = vmatprep.subr.bf16.mxu0 0
        %2555 = vmatpush1.bf16.msra.mxu0 %v2476
        %2556 = vmatprep.subr.bf16.mxu0 0
        %2557 = vmatpush2.bf16.msra.mxu0 0
        %2558 = vmatprep.subr.bf16.mxu0 0
        %2559 = vmatpush2.bf16.msra.mxu0 0
        %2560 = vmatprep.subr.bf16.mxu0 0
        %2561 = vmatpush2.bf16.msra.mxu0 0
        %2562 = vmatprep.subr.bf16.mxu0 0
        %2563 = vmatpush2.bf16.msra.mxu0 0
        %2564 = vmatprep.subr.bf16.mxu0 0
        %2565 = vmatpush2.bf16.msra.mxu0 0
        %2566 = vmatprep.subr.bf16.mxu0 0
        %2567 = vmatpush2.bf16.msra.mxu0 0
        %2568 = vmatprep.subr.bf16.mxu0 0
        %2569 = vmatpush2.bf16.msra.mxu0 0
        %2570 = vmatprep.subr.bf16.mxu0 0
        %2571 = vmatpush2.bf16.msra.mxu0 0
        %2572 = vmatprep.mubr.bf16.mxu0 0
        %2573 = vmatmul.mubr.bf16.gmra.mxu0 %v2498
        %v2574 = vpop.f32.mrf.mxu0
        %v2575 = vadd.f32 %v2535, %v2574
        %v2576 = vpop.f32.mrf.mxu0
        %v2577 = vpop.f32.mrf.mxu0
        %v2578 = vpop.f32.mrf.mxu0
        %2579 = vdwg.mxu0
        %v2580 = vadd.f32 %v2348, %v2575
        %s2581 = scalar_lea.vmem [#allocation3], 144
        %v2582 = vld [vmem:[%s2581] sm:$0xf]
        %v2583 = vld [vmem:[%s2581 + $0x4] sm:$0xf]
        %v2584 = vld [vmem:[%s2581 + $0x8] sm:$0xf]
        %v2585 = vld [vmem:[%s2581 + $0xc] sm:$0xf]
        %v2586 = vld [vmem:[%s2581 + $0x10] sm:$0xf]
        %v2587 = vld [vmem:[%s2581 + $0x14] sm:$0xf]
        %v2588 = vld [vmem:[%s2581 + $0x18] sm:$0xf]
        %v2589 = vld [vmem:[%s2581 + $0x1c] sm:$0xf]
        %v2590 = vld [vmem:[%s2581 + $0x20] sm:$0xf]
        %v2591 = vld [vmem:[%s2581 + $0x24] sm:$0xf]
        %v2592 = vld [vmem:[%s2581 + $0x28] sm:$0xf]
        %v2593 = vld [vmem:[%s2581 + $0x2c] sm:$0xf]
        %v2594 = vld [vmem:[%s2581 + $0x30] sm:$0xf]
        %v2595 = vld [vmem:[%s2581 + $0x34] sm:$0xf]
        %v2596 = vld [vmem:[%s2581 + $0x38] sm:$0xf]
        %v2597 = vld [vmem:[%s2581 + $0x3c] sm:$0xf]
        %v2598 = vld [vmem:[%s2581 + $0x40] sm:$0xf]
        %v2599 = vld [vmem:[%s2581 + $0x44] sm:$0xf]
        %v2600 = vld [vmem:[%s2581 + $0x48] sm:$0xf]
        %v2601 = vld [vmem:[%s2581 + $0x4c] sm:$0xf]
        %v2602 = vld [vmem:[%s2581 + $0x50] sm:$0xf]
        %v2603 = vld [vmem:[%s2581 + $0x54] sm:$0xf]
        %v2604 = vld [vmem:[%s2581 + $0x58] sm:$0xf]
        %v2605 = vld [vmem:[%s2581 + $0x5c] sm:$0xf]
        %v2606 = vld [vmem:[%s2581 + $0x60] sm:$0xf]
        %v2607 = vld [vmem:[%s2581 + $0x64] sm:$0xf]
        %v2608 = vld [vmem:[%s2581 + $0x68] sm:$0xf]
        %v2609 = vld [vmem:[%s2581 + $0x6c] sm:$0xf]
        %v2610 = vld [vmem:[%s2581 + $0x70] sm:$0xf]
        %v2611 = vld [vmem:[%s2581 + $0x74] sm:$0xf]
        %v2612 = vld [vmem:[%s2581 + $0x78] sm:$0xf]
        %v2613 = vld [vmem:[%s2581 + $0x7c] sm:$0xf]
        %v2614 = vld [vmem:[%s2581 + $0x80] sm:$0xf]
        %v2615 = vld [vmem:[%s2581 + $0x84] sm:$0xf]
        %v2616 = vld [vmem:[%s2581 + $0x88] sm:$0xf]
        %v2617 = vld [vmem:[%s2581 + $0x8c] sm:$0xf]
        %v2619 = vshrl.u32 %v2349, 16
        %v2622 = vshrl.u32 %v2350, 16
        %v2624 = vshrl.u32 %v2351, 16
        %v2664 = vunpack.c.l.b16 %v2582
        %v2665 = vunpack.c.l.b16 %v2583
        %v2666 = vunpack.c.l.b16 %v2584
        %v2667 = vunpack.c.l.b16 %v2585
        %v2668 = vunpack.c.l.b16 %v2586
        %v2669 = vunpack.c.l.b16 %v2587
        %v2670 = vunpack.c.l.b16 %v2588
        %v2671 = vunpack.c.l.b16 %v2589
        %v2672 = vunpack.c.l.b16 %v2590
        %v2673 = vunpack.c.l.b16 %v2591
        %v2674 = vunpack.c.l.b16 %v2592
        %v2675 = vunpack.c.l.b16 %v2593
        %v2676 = vunpack.c.l.b16 %v2594
        %v2677 = vunpack.c.l.b16 %v2595
        %v2678 = vunpack.c.l.b16 %v2596
        %v2679 = vunpack.c.l.b16 %v2597
        %v2680 = vunpack.c.l.b16 %v2598
        %v2681 = vunpack.c.l.b16 %v2599
        %v2682 = vunpack.c.l.b16 %v2600
        %v2683 = vunpack.c.l.b16 %v2601
        %v2684 = vunpack.c.l.b16 %v2602
        %v2685 = vunpack.c.l.b16 %v2603
        %v2686 = vunpack.c.l.b16 %v2604
        %v2687 = vunpack.c.l.b16 %v2605
        %v2688 = vunpack.c.l.b16 %v2606
        %v2689 = vunpack.c.l.b16 %v2607
        %v2690 = vunpack.c.l.b16 %v2608
        %v2691 = vunpack.c.l.b16 %v2609
        %v2692 = vunpack.c.l.b16 %v2610
        %v2693 = vunpack.c.l.b16 %v2611
        %v2694 = vunpack.c.l.b16 %v2612
        %v2695 = vunpack.c.l.b16 %v2613
        %v2696 = vunpack.c.l.b16 %v2614
        %v2697 = vunpack.c.l.b16 %v2615
        %v2698 = vunpack.c.l.b16 %v2616
        %v2699 = vunpack.c.l.b16 %v2617
        %v2700 = vpack.c.b16 %v2665, %v2664
        %v2701 = vpack.c.b16 %v2667, %v2666
        %v2702 = vpack.c.b16 %v2669, %v2668
        %v2703 = vpack.c.b16 %v2671, %v2670
        %v2704 = vpack.c.b16 %v2673, %v2672
        %v2705 = vpack.c.b16 %v2675, %v2674
        %v2706 = vpack.c.b16 %v2677, %v2676
        %v2707 = vpack.c.b16 %v2679, %v2678
        %v2708 = vpack.c.b16 %v2681, %v2680
        %v2709 = vpack.c.b16 %v2683, %v2682
        %v2710 = vpack.c.b16 %v2685, %v2684
        %v2711 = vpack.c.b16 %v2687, %v2686
        %v2712 = vpack.c.b16 %v2689, %v2688
        %v2713 = vpack.c.b16 %v2691, %v2690
        %v2714 = vpack.c.b16 %v2693, %v2692
        %v2715 = vpack.c.b16 %v2695, %v2694
        %v2716 = vpack.c.b16 %v2697, %v2696
        %v2717 = vpack.c.b16 %v2699, %v2698
        %v2737 = vsel %vm2496, %v2624, 0
        %2739 = vmatprep.subr.bf16.mxu0 0
        %2740 = vmatpush1.bf16.msra.mxu0 %v2707
        %2741 = vmatprep.subr.bf16.mxu0 0
        %2742 = vmatpush1.bf16.msra.mxu0 %v2706
        %2743 = vmatprep.subr.bf16.mxu0 0
        %2744 = vmatpush1.bf16.msra.mxu0 %v2705
        %2745 = vmatprep.subr.bf16.mxu0 0
        %2746 = vmatpush1.bf16.msra.mxu0 %v2704
        %2747 = vmatprep.subr.bf16.mxu0 0
        %2748 = vmatpush1.bf16.msra.mxu0 %v2703
        %2749 = vmatprep.subr.bf16.mxu0 0
        %2750 = vmatpush1.bf16.msra.mxu0 %v2702
        %2751 = vmatprep.subr.bf16.mxu0 0
        %2752 = vmatpush1.bf16.msra.mxu0 %v2701
        %2753 = vmatprep.subr.bf16.mxu0 0
        %2754 = vmatpush1.bf16.msra.mxu0 %v2700
        %2755 = vmatprep.subr.bf16.mxu0 0
        %2756 = vmatpush2.bf16.msra.mxu0 %v2715
        %2757 = vmatprep.subr.bf16.mxu0 0
        %2758 = vmatpush2.bf16.msra.mxu0 %v2714
        %2759 = vmatprep.subr.bf16.mxu0 0
        %2760 = vmatpush2.bf16.msra.mxu0 %v2713
        %2761 = vmatprep.subr.bf16.mxu0 0
        %2762 = vmatpush2.bf16.msra.mxu0 %v2712
        %2763 = vmatprep.subr.bf16.mxu0 0
        %2764 = vmatpush2.bf16.msra.mxu0 %v2711
        %2765 = vmatprep.subr.bf16.mxu0 0
        %2766 = vmatpush2.bf16.msra.mxu0 %v2710
        %2767 = vmatprep.subr.bf16.mxu0 0
        %2768 = vmatpush2.bf16.msra.mxu0 %v2709
        %2769 = vmatprep.subr.bf16.mxu0 0
        %2770 = vmatpush2.bf16.msra.mxu0 %v2708
        %2771 = vmatprep.mubr.bf16.mxu0 %v2622
        %2772 = vmatmul.mubr.bf16.gmra.mxu0 %v2619
        %v2773 = vpop.f32.mrf.mxu0
        %v2774 = vadd.f32 0.0, %v2773
        %v2775 = vpop.f32.mrf.mxu0
        %v2776 = vpop.f32.mrf.mxu0
        %v2777 = vpop.f32.mrf.mxu0
        %2778 = vdwg.mxu0
        %2779 = vmatprep.subr.bf16.mxu0 0
        %2780 = vmatpush1.bf16.msra.mxu0 0
        %2781 = vmatprep.subr.bf16.mxu0 0
        %2782 = vmatpush1.bf16.msra.mxu0 0
        %2783 = vmatprep.subr.bf16.mxu0 0
        %2784 = vmatpush1.bf16.msra.mxu0 0
        %2785 = vmatprep.subr.bf16.mxu0 0
        %2786 = vmatpush1.bf16.msra.mxu0 0
        %2787 = vmatprep.subr.bf16.mxu0 0
        %2788 = vmatpush1.bf16.msra.mxu0 0
        %2789 = vmatprep.subr.bf16.mxu0 0
        %2790 = vmatpush1.bf16.msra.mxu0 0
        %2791 = vmatprep.subr.bf16.mxu0 0
        %2792 = vmatpush1.bf16.msra.mxu0 %v2717
        %2793 = vmatprep.subr.bf16.mxu0 0
        %2794 = vmatpush1.bf16.msra.mxu0 %v2716
        %2795 = vmatprep.subr.bf16.mxu0 0
        %2796 = vmatpush2.bf16.msra.mxu0 0
        %2797 = vmatprep.subr.bf16.mxu0 0
        %2798 = vmatpush2.bf16.msra.mxu0 0
        %2799 = vmatprep.subr.bf16.mxu0 0
        %2800 = vmatpush2.bf16.msra.mxu0 0
        %2801 = vmatprep.subr.bf16.mxu0 0
        %2802 = vmatpush2.bf16.msra.mxu0 0
        %2803 = vmatprep.subr.bf16.mxu0 0
        %2804 = vmatpush2.bf16.msra.mxu0 0
        %2805 = vmatprep.subr.bf16.mxu0 0
        %2806 = vmatpush2.bf16.msra.mxu0 0
        %2807 = vmatprep.subr.bf16.mxu0 0
        %2808 = vmatpush2.bf16.msra.mxu0 0
        %2809 = vmatprep.subr.bf16.mxu0 0
        %2810 = vmatpush2.bf16.msra.mxu0 0
        %2811 = vmatprep.mubr.bf16.mxu0 0
        %2812 = vmatmul.mubr.bf16.gmra.mxu0 %v2737
        %v2813 = vpop.f32.mrf.mxu0
        %v2814 = vadd.f32 %v2774, %v2813
        %v2815 = vpop.f32.mrf.mxu0
        %v2816 = vpop.f32.mrf.mxu0
        %v2817 = vpop.f32.mrf.mxu0
        %2818 = vdwg.mxu0
        %v2819 = vadd.f32 %v2580, %v2814
        %s2820 = scalar_lea.vmem [#allocation3], 288
        %v2821 = vld [vmem:[%s2820] sm:$0xf]
        %v2822 = vld [vmem:[%s2820 + $0x4] sm:$0xf]
        %v2823 = vld [vmem:[%s2820 + $0x8] sm:$0xf]
        %v2824 = vld [vmem:[%s2820 + $0xc] sm:$0xf]
        %v2825 = vld [vmem:[%s2820 + $0x10] sm:$0xf]
        %v2826 = vld [vmem:[%s2820 + $0x14] sm:$0xf]
        %v2827 = vld [vmem:[%s2820 + $0x18] sm:$0xf]
        %v2828 = vld [vmem:[%s2820 + $0x1c] sm:$0xf]
        %v2829 = vld [vmem:[%s2820 + $0x20] sm:$0xf]
        %v2830 = vld [vmem:[%s2820 + $0x24] sm:$0xf]
        %v2831 = vld [vmem:[%s2820 + $0x28] sm:$0xf]
        %v2832 = vld [vmem:[%s2820 + $0x2c] sm:$0xf]
        %v2833 = vld [vmem:[%s2820 + $0x30] sm:$0xf]
        %v2834 = vld [vmem:[%s2820 + $0x34] sm:$0xf]
        %v2835 = vld [vmem:[%s2820 + $0x38] sm:$0xf]
        %v2836 = vld [vmem:[%s2820 + $0x3c] sm:$0xf]
        %v2837 = vld [vmem:[%s2820 + $0x40] sm:$0xf]
        %v2838 = vld [vmem:[%s2820 + $0x44] sm:$0xf]
        %v2839 = vld [vmem:[%s2820 + $0x48] sm:$0xf]
        %v2840 = vld [vmem:[%s2820 + $0x4c] sm:$0xf]
        %v2841 = vld [vmem:[%s2820 + $0x50] sm:$0xf]
        %v2842 = vld [vmem:[%s2820 + $0x54] sm:$0xf]
        %v2843 = vld [vmem:[%s2820 + $0x58] sm:$0xf]
        %v2844 = vld [vmem:[%s2820 + $0x5c] sm:$0xf]
        %v2845 = vld [vmem:[%s2820 + $0x60] sm:$0xf]
        %v2846 = vld [vmem:[%s2820 + $0x64] sm:$0xf]
        %v2847 = vld [vmem:[%s2820 + $0x68] sm:$0xf]
        %v2848 = vld [vmem:[%s2820 + $0x6c] sm:$0xf]
        %v2849 = vld [vmem:[%s2820 + $0x70] sm:$0xf]
        %v2850 = vld [vmem:[%s2820 + $0x74] sm:$0xf]
        %v2851 = vld [vmem:[%s2820 + $0x78] sm:$0xf]
        %v2852 = vld [vmem:[%s2820 + $0x7c] sm:$0xf]
        %v2853 = vld [vmem:[%s2820 + $0x80] sm:$0xf]
        %v2854 = vld [vmem:[%s2820 + $0x84] sm:$0xf]
        %v2855 = vld [vmem:[%s2820 + $0x88] sm:$0xf]
        %v2856 = vld [vmem:[%s2820 + $0x8c] sm:$0xf]
        %v2860 = vrot.slane %v2349, 1
        %v2861 = vrot.slane %v2350, 1
        %v2862 = vrot.slane %v2351, 1
        %v2901 = vunpack.c.l.b16 %v2821
        %v2902 = vunpack.c.l.b16 %v2822
        %v2903 = vunpack.c.l.b16 %v2823
        %v2904 = vunpack.c.l.b16 %v2824
        %v2905 = vunpack.c.l.b16 %v2825
        %v2906 = vunpack.c.l.b16 %v2826
        %v2907 = vunpack.c.l.b16 %v2827
        %v2908 = vunpack.c.l.b16 %v2828
        %v2909 = vunpack.c.l.b16 %v2829
        %v2910 = vunpack.c.l.b16 %v2830
        %v2911 = vunpack.c.l.b16 %v2831
        %v2912 = vunpack.c.l.b16 %v2832
        %v2913 = vunpack.c.l.b16 %v2833
        %v2914 = vunpack.c.l.b16 %v2834
        %v2915 = vunpack.c.l.b16 %v2835
        %v2916 = vunpack.c.l.b16 %v2836
        %v2917 = vunpack.c.l.b16 %v2837
        %v2918 = vunpack.c.l.b16 %v2838
        %v2919 = vunpack.c.l.b16 %v2839
        %v2920 = vunpack.c.l.b16 %v2840
        %v2921 = vunpack.c.l.b16 %v2841
        %v2922 = vunpack.c.l.b16 %v2842
        %v2923 = vunpack.c.l.b16 %v2843
        %v2924 = vunpack.c.l.b16 %v2844
        %v2925 = vunpack.c.l.b16 %v2845
        %v2926 = vunpack.c.l.b16 %v2846
        %v2927 = vunpack.c.l.b16 %v2847
        %v2928 = vunpack.c.l.b16 %v2848
        %v2929 = vunpack.c.l.b16 %v2849
        %v2930 = vunpack.c.l.b16 %v2850
        %v2931 = vunpack.c.l.b16 %v2851
        %v2932 = vunpack.c.l.b16 %v2852
        %v2933 = vunpack.c.l.b16 %v2853
        %v2934 = vunpack.c.l.b16 %v2854
        %v2935 = vunpack.c.l.b16 %v2855
        %v2936 = vunpack.c.l.b16 %v2856
        %v2937 = vpack.c.b16 %v2902, %v2901
        %v2938 = vpack.c.b16 %v2904, %v2903
        %v2939 = vpack.c.b16 %v2906, %v2905
        %v2940 = vpack.c.b16 %v2908, %v2907
        %v2941 = vpack.c.b16 %v2910, %v2909
        %v2942 = vpack.c.b16 %v2912, %v2911
        %v2943 = vpack.c.b16 %v2914, %v2913
        %v2944 = vpack.c.b16 %v2916, %v2915
        %v2945 = vpack.c.b16 %v2918, %v2917
        %v2946 = vpack.c.b16 %v2920, %v2919
        %v2947 = vpack.c.b16 %v2922, %v2921
        %v2948 = vpack.c.b16 %v2924, %v2923
        %v2949 = vpack.c.b16 %v2926, %v2925
        %v2950 = vpack.c.b16 %v2928, %v2927
        %v2951 = vpack.c.b16 %v2930, %v2929
        %v2952 = vpack.c.b16 %v2932, %v2931
        %v2953 = vpack.c.b16 %v2934, %v2933
        %v2954 = vpack.c.b16 %v2936, %v2935
        %v2974 = vsel %vm2496, %v2862, 0
        %2976 = vmatprep.subr.bf16.mxu0 0
        %2977 = vmatpush1.bf16.msra.mxu0 %v2944
        %2978 = vmatprep.subr.bf16.mxu0 0
        %2979 = vmatpush1.bf16.msra.mxu0 %v2943
        %2980 = vmatprep.subr.bf16.mxu0 0
        %2981 = vmatpush1.bf16.msra.mxu0 %v2942
        %2982 = vmatprep.subr.bf16.mxu0 0
        %2983 = vmatpush1.bf16.msra.mxu0 %v2941
        %2984 = vmatprep.subr.bf16.mxu0 0
        %2985 = vmatpush1.bf16.msra.mxu0 %v2940
        %2986 = vmatprep.subr.bf16.mxu0 0
        %2987 = vmatpush1.bf16.msra.mxu0 %v2939
        %2988 = vmatprep.subr.bf16.mxu0 0
        %2989 = vmatpush1.bf16.msra.mxu0 %v2938
        %2990 = vmatprep.subr.bf16.mxu0 0
        %2991 = vmatpush1.bf16.msra.mxu0 %v2937
        %2992 = vmatprep.subr.bf16.mxu0 0
        %2993 = vmatpush2.bf16.msra.mxu0 %v2952
        %2994 = vmatprep.subr.bf16.mxu0 0
        %2995 = vmatpush2.bf16.msra.mxu0 %v2951
        %2996 = vmatprep.subr.bf16.mxu0 0
        %2997 = vmatpush2.bf16.msra.mxu0 %v2950
        %2998 = vmatprep.subr.bf16.mxu0 0
        %2999 = vmatpush2.bf16.msra.mxu0 %v2949
        %3000 = vmatprep.subr.bf16.mxu0 0
        %3001 = vmatpush2.bf16.msra.mxu0 %v2948
        %3002 = vmatprep.subr.bf16.mxu0 0
        %3003 = vmatpush2.bf16.msra.mxu0 %v2947
        %3004 = vmatprep.subr.bf16.mxu0 0
        %3005 = vmatpush2.bf16.msra.mxu0 %v2946
        %3006 = vmatprep.subr.bf16.mxu0 0
        %3007 = vmatpush2.bf16.msra.mxu0 %v2945
        %3008 = vmatprep.mubr.bf16.mxu0 %v2861
        %3009 = vmatmul.mubr.bf16.gmra.mxu0 %v2860
        %v3010 = vpop.f32.mrf.mxu0
        %v3011 = vadd.f32 0.0, %v3010
        %v3012 = vpop.f32.mrf.mxu0
        %v3013 = vpop.f32.mrf.mxu0
        %v3014 = vpop.f32.mrf.mxu0
        %3015 = vdwg.mxu0
        %3016 = vmatprep.subr.bf16.mxu0 0
        %3017 = vmatpush1.bf16.msra.mxu0 0
        %3018 = vmatprep.subr.bf16.mxu0 0
        %3019 = vmatpush1.bf16.msra.mxu0 0
        %3020 = vmatprep.subr.bf16.mxu0 0
        %3021 = vmatpush1.bf16.msra.mxu0 0
        %3022 = vmatprep.subr.bf16.mxu0 0
        %3023 = vmatpush1.bf16.msra.mxu0 0
        %3024 = vmatprep.subr.bf16.mxu0 0
        %3025 = vmatpush1.bf16.msra.mxu0 0
        %3026 = vmatprep.subr.bf16.mxu0 0
        %3027 = vmatpush1.bf16.msra.mxu0 0
        %3028 = vmatprep.subr.bf16.mxu0 0
        %3029 = vmatpush1.bf16.msra.mxu0 %v2954
        %3030 = vmatprep.subr.bf16.mxu0 0
        %3031 = vmatpush1.bf16.msra.mxu0 %v2953
        %3032 = vmatprep.subr.bf16.mxu0 0
        %3033 = vmatpush2.bf16.msra.mxu0 0
        %3034 = vmatprep.subr.bf16.mxu0 0
        %3035 = vmatpush2.bf16.msra.mxu0 0
        %3036 = vmatprep.subr.bf16.mxu0 0
        %3037 = vmatpush2.bf16.msra.mxu0 0
        %3038 = vmatprep.subr.bf16.mxu0 0
        %3039 = vmatpush2.bf16.msra.mxu0 0
        %3040 = vmatprep.subr.bf16.mxu0 0
        %3041 = vmatpush2.bf16.msra.mxu0 0
        %3042 = vmatprep.subr.bf16.mxu0 0
        %3043 = vmatpush2.bf16.msra.mxu0 0
        %3044 = vmatprep.subr.bf16.mxu0 0
        %3045 = vmatpush2.bf16.msra.mxu0 0
        %3046 = vmatprep.subr.bf16.mxu0 0
        %3047 = vmatpush2.bf16.msra.mxu0 0
        %3048 = vmatprep.mubr.bf16.mxu0 0
        %3049 = vmatmul.mubr.bf16.gmra.mxu0 %v2974
        %v3050 = vpop.f32.mrf.mxu0
        %v3051 = vadd.f32 %v3011, %v3050
        %v3052 = vpop.f32.mrf.mxu0
        %v3053 = vpop.f32.mrf.mxu0
        %v3054 = vpop.f32.mrf.mxu0
        %3055 = vdwg.mxu0
        %v3056 = vadd.f32 %v2819, %v3051
        %s3057 = scalar_lea.vmem [#allocation3], 432
        %v3058 = vld [vmem:[%s3057] sm:$0xf]
        %v3059 = vld [vmem:[%s3057 + $0x4] sm:$0xf]
        %v3060 = vld [vmem:[%s3057 + $0x8] sm:$0xf]
        %v3061 = vld [vmem:[%s3057 + $0xc] sm:$0xf]
        %v3062 = vld [vmem:[%s3057 + $0x10] sm:$0xf]
        %v3063 = vld [vmem:[%s3057 + $0x14] sm:$0xf]
        %v3064 = vld [vmem:[%s3057 + $0x18] sm:$0xf]
        %v3065 = vld [vmem:[%s3057 + $0x1c] sm:$0xf]
        %v3066 = vld [vmem:[%s3057 + $0x20] sm:$0xf]
        %v3067 = vld [vmem:[%s3057 + $0x24] sm:$0xf]
        %v3068 = vld [vmem:[%s3057 + $0x28] sm:$0xf]
        %v3069 = vld [vmem:[%s3057 + $0x2c] sm:$0xf]
        %v3070 = vld [vmem:[%s3057 + $0x30] sm:$0xf]
        %v3071 = vld [vmem:[%s3057 + $0x34] sm:$0xf]
        %v3072 = vld [vmem:[%s3057 + $0x38] sm:$0xf]
        %v3073 = vld [vmem:[%s3057 + $0x3c] sm:$0xf]
        %v3074 = vld [vmem:[%s3057 + $0x40] sm:$0xf]
        %v3075 = vld [vmem:[%s3057 + $0x44] sm:$0xf]
        %v3076 = vld [vmem:[%s3057 + $0x48] sm:$0xf]
        %v3077 = vld [vmem:[%s3057 + $0x4c] sm:$0xf]
        %v3078 = vld [vmem:[%s3057 + $0x50] sm:$0xf]
        %v3079 = vld [vmem:[%s3057 + $0x54] sm:$0xf]
        %v3080 = vld [vmem:[%s3057 + $0x58] sm:$0xf]
        %v3081 = vld [vmem:[%s3057 + $0x5c] sm:$0xf]
        %v3082 = vld [vmem:[%s3057 + $0x60] sm:$0xf]
        %v3083 = vld [vmem:[%s3057 + $0x64] sm:$0xf]
        %v3084 = vld [vmem:[%s3057 + $0x68] sm:$0xf]
        %v3085 = vld [vmem:[%s3057 + $0x6c] sm:$0xf]
        %v3086 = vld [vmem:[%s3057 + $0x70] sm:$0xf]
        %v3087 = vld [vmem:[%s3057 + $0x74] sm:$0xf]
        %v3088 = vld [vmem:[%s3057 + $0x78] sm:$0xf]
        %v3089 = vld [vmem:[%s3057 + $0x7c] sm:$0xf]
        %v3090 = vld [vmem:[%s3057 + $0x80] sm:$0xf]
        %v3091 = vld [vmem:[%s3057 + $0x84] sm:$0xf]
        %v3092 = vld [vmem:[%s3057 + $0x88] sm:$0xf]
        %v3093 = vld [vmem:[%s3057 + $0x8c] sm:$0xf]
        %v3094 = vrot.slane %v2619, 1
        %v3095 = vrot.slane %v2622, 1
        %v3096 = vrot.slane %v2624, 1
        %v3135 = vunpack.c.l.b16 %v3058
        %v3136 = vunpack.c.l.b16 %v3059
        %v3137 = vunpack.c.l.b16 %v3060
        %v3138 = vunpack.c.l.b16 %v3061
        %v3139 = vunpack.c.l.b16 %v3062
        %v3140 = vunpack.c.l.b16 %v3063
        %v3141 = vunpack.c.l.b16 %v3064
        %v3142 = vunpack.c.l.b16 %v3065
        %v3143 = vunpack.c.l.b16 %v3066
        %v3144 = vunpack.c.l.b16 %v3067
        %v3145 = vunpack.c.l.b16 %v3068
        %v3146 = vunpack.c.l.b16 %v3069
        %v3147 = vunpack.c.l.b16 %v3070
        %v3148 = vunpack.c.l.b16 %v3071
        %v3149 = vunpack.c.l.b16 %v3072
        %v3150 = vunpack.c.l.b16 %v3073
        %v3151 = vunpack.c.l.b16 %v3074
        %v3152 = vunpack.c.l.b16 %v3075
        %v3153 = vunpack.c.l.b16 %v3076
        %v3154 = vunpack.c.l.b16 %v3077
        %v3155 = vunpack.c.l.b16 %v3078
        %v3156 = vunpack.c.l.b16 %v3079
        %v3157 = vunpack.c.l.b16 %v3080
        %v3158 = vunpack.c.l.b16 %v3081
        %v3159 = vunpack.c.l.b16 %v3082
        %v3160 = vunpack.c.l.b16 %v3083
        %v3161 = vunpack.c.l.b16 %v3084
        %v3162 = vunpack.c.l.b16 %v3085
        %v3163 = vunpack.c.l.b16 %v3086
        %v3164 = vunpack.c.l.b16 %v3087
        %v3165 = vunpack.c.l.b16 %v3088
        %v3166 = vunpack.c.l.b16 %v3089
        %v3167 = vunpack.c.l.b16 %v3090
        %v3168 = vunpack.c.l.b16 %v3091
        %v3169 = vunpack.c.l.b16 %v3092
        %v3170 = vunpack.c.l.b16 %v3093
        %v3171 = vpack.c.b16 %v3136, %v3135
        %v3172 = vpack.c.b16 %v3138, %v3137
        %v3173 = vpack.c.b16 %v3140, %v3139
        %v3174 = vpack.c.b16 %v3142, %v3141
        %v3175 = vpack.c.b16 %v3144, %v3143
        %v3176 = vpack.c.b16 %v3146, %v3145
        %v3177 = vpack.c.b16 %v3148, %v3147
        %v3178 = vpack.c.b16 %v3150, %v3149
        %v3179 = vpack.c.b16 %v3152, %v3151
        %v3180 = vpack.c.b16 %v3154, %v3153
        %v3181 = vpack.c.b16 %v3156, %v3155
        %v3182 = vpack.c.b16 %v3158, %v3157
        %v3183 = vpack.c.b16 %v3160, %v3159
        %v3184 = vpack.c.b16 %v3162, %v3161
        %v3185 = vpack.c.b16 %v3164, %v3163
        %v3186 = vpack.c.b16 %v3166, %v3165
        %v3187 = vpack.c.b16 %v3168, %v3167
        %v3188 = vpack.c.b16 %v3170, %v3169
        %v3208 = vsel %vm2496, %v3096, 0
        %3210 = vmatprep.subr.bf16.mxu0 0
        %3211 = vmatpush1.bf16.msra.mxu0 %v3178
        %3212 = vmatprep.subr.bf16.mxu0 0
        %3213 = vmatpush1.bf16.msra.mxu0 %v3177
        %3214 = vmatprep.subr.bf16.mxu0 0
        %3215 = vmatpush1.bf16.msra.mxu0 %v3176
        %3216 = vmatprep.subr.bf16.mxu0 0
        %3217 = vmatpush1.bf16.msra.mxu0 %v3175
        %3218 = vmatprep.subr.bf16.mxu0 0
        %3219 = vmatpush1.bf16.msra.mxu0 %v3174
        %3220 = vmatprep.subr.bf16.mxu0 0
        %3221 = vmatpush1.bf16.msra.mxu0 %v3173
        %3222 = vmatprep.subr.bf16.mxu0 0
        %3223 = vmatpush1.bf16.msra.mxu0 %v3172
        %3224 = vmatprep.subr.bf16.mxu0 0
        %3225 = vmatpush1.bf16.msra.mxu0 %v3171
        %3226 = vmatprep.subr.bf16.mxu0 0
        %3227 = vmatpush2.bf16.msra.mxu0 %v3186
        %3228 = vmatprep.subr.bf16.mxu0 0
        %3229 = vmatpush2.bf16.msra.mxu0 %v3185
        %3230 = vmatprep.subr.bf16.mxu0 0
        %3231 = vmatpush2.bf16.msra.mxu0 %v3184
        %3232 = vmatprep.subr.bf16.mxu0 0
        %3233 = vmatpush2.bf16.msra.mxu0 %v3183
        %3234 = vmatprep.subr.bf16.mxu0 0
        %3235 = vmatpush2.bf16.msra.mxu0 %v3182
        %3236 = vmatprep.subr.bf16.mxu0 0
        %3237 = vmatpush2.bf16.msra.mxu0 %v3181
        %3238 = vmatprep.subr.bf16.mxu0 0
        %3239 = vmatpush2.bf16.msra.mxu0 %v3180
        %3240 = vmatprep.subr.bf16.mxu0 0
        %3241 = vmatpush2.bf16.msra.mxu0 %v3179
        %3242 = vmatprep.mubr.bf16.mxu0 %v3095
        %3243 = vmatmul.mubr.bf16.gmra.mxu0 %v3094
        %v3244 = vpop.f32.mrf.mxu0
        %v3245 = vadd.f32 0.0, %v3244
        %v3246 = vpop.f32.mrf.mxu0
        %v3247 = vpop.f32.mrf.mxu0
        %v3248 = vpop.f32.mrf.mxu0
        %3249 = vdwg.mxu0
        %3250 = vmatprep.subr.bf16.mxu0 0
        %3251 = vmatpush1.bf16.msra.mxu0 0
        %3252 = vmatprep.subr.bf16.mxu0 0
        %3253 = vmatpush1.bf16.msra.mxu0 0
        %3254 = vmatprep.subr.bf16.mxu0 0
        %3255 = vmatpush1.bf16.msra.mxu0 0
        %3256 = vmatprep.subr.bf16.mxu0 0
        %3257 = vmatpush1.bf16.msra.mxu0 0
        %3258 = vmatprep.subr.bf16.mxu0 0
        %3259 = vmatpush1.bf16.msra.mxu0 0
        %3260 = vmatprep.subr.bf16.mxu0 0
        %3261 = vmatpush1.bf16.msra.mxu0 0
        %3262 = vmatprep.subr.bf16.mxu0 0
        %3263 = vmatpush1.bf16.msra.mxu0 %v3188
        %3264 = vmatprep.subr.bf16.mxu0 0
        %3265 = vmatpush1.bf16.msra.mxu0 %v3187
        %3266 = vmatprep.subr.bf16.mxu0 0
        %3267 = vmatpush2.bf16.msra.mxu0 0
        %3268 = vmatprep.subr.bf16.mxu0 0
        %3269 = vmatpush2.bf16.msra.mxu0 0
        %3270 = vmatprep.subr.bf16.mxu0 0
        %3271 = vmatpush2.bf16.msra.mxu0 0
        %3272 = vmatprep.subr.bf16.mxu0 0
        %3273 = vmatpush2.bf16.msra.mxu0 0
        %3274 = vmatprep.subr.bf16.mxu0 0
        %3275 = vmatpush2.bf16.msra.mxu0 0
        %3276 = vmatprep.subr.bf16.mxu0 0
        %3277 = vmatpush2.bf16.msra.mxu0 0
        %3278 = vmatprep.subr.bf16.mxu0 0
        %3279 = vmatpush2.bf16.msra.mxu0 0
        %3280 = vmatprep.subr.bf16.mxu0 0
        %3281 = vmatpush2.bf16.msra.mxu0 0
        %3282 = vmatprep.mubr.bf16.mxu0 0
        %3283 = vmatmul.mubr.bf16.gmra.mxu0 %v3208
        %v3284 = vpop.f32.mrf.mxu0
        %v3285 = vadd.f32 %v3245, %v3284
        %v3286 = vpop.f32.mrf.mxu0
        %v3287 = vpop.f32.mrf.mxu0
        %v3288 = vpop.f32.mrf.mxu0
        %3289 = vdwg.mxu0
        %v3290 = vadd.f32 %v3056, %v3285
        %s3291 = scalar_lea.vmem [#allocation3], 576
        %v3292 = vld [vmem:[%s3291] sm:$0xf]
        %v3293 = vld [vmem:[%s3291 + $0x4] sm:$0xf]
        %v3294 = vld [vmem:[%s3291 + $0x8] sm:$0xf]
        %v3295 = vld [vmem:[%s3291 + $0xc] sm:$0xf]
        %v3296 = vld [vmem:[%s3291 + $0x10] sm:$0xf]
        %v3297 = vld [vmem:[%s3291 + $0x14] sm:$0xf]
        %v3298 = vld [vmem:[%s3291 + $0x18] sm:$0xf]
        %v3299 = vld [vmem:[%s3291 + $0x1c] sm:$0xf]
        %v3300 = vld [vmem:[%s3291 + $0x20] sm:$0xf]
        %v3301 = vld [vmem:[%s3291 + $0x24] sm:$0xf]
        %v3302 = vld [vmem:[%s3291 + $0x28] sm:$0xf]
        %v3303 = vld [vmem:[%s3291 + $0x2c] sm:$0xf]
        %v3304 = vld [vmem:[%s3291 + $0x30] sm:$0xf]
        %v3305 = vld [vmem:[%s3291 + $0x34] sm:$0xf]
        %v3306 = vld [vmem:[%s3291 + $0x38] sm:$0xf]
        %v3307 = vld [vmem:[%s3291 + $0x3c] sm:$0xf]
        %v3308 = vld [vmem:[%s3291 + $0x40] sm:$0xf]
        %v3309 = vld [vmem:[%s3291 + $0x44] sm:$0xf]
        %v3310 = vld [vmem:[%s3291 + $0x48] sm:$0xf]
        %v3311 = vld [vmem:[%s3291 + $0x4c] sm:$0xf]
        %v3312 = vld [vmem:[%s3291 + $0x50] sm:$0xf]
        %v3313 = vld [vmem:[%s3291 + $0x54] sm:$0xf]
        %v3314 = vld [vmem:[%s3291 + $0x58] sm:$0xf]
        %v3315 = vld [vmem:[%s3291 + $0x5c] sm:$0xf]
        %v3316 = vld [vmem:[%s3291 + $0x60] sm:$0xf]
        %v3317 = vld [vmem:[%s3291 + $0x64] sm:$0xf]
        %v3318 = vld [vmem:[%s3291 + $0x68] sm:$0xf]
        %v3319 = vld [vmem:[%s3291 + $0x6c] sm:$0xf]
        %v3320 = vld [vmem:[%s3291 + $0x70] sm:$0xf]
        %v3321 = vld [vmem:[%s3291 + $0x74] sm:$0xf]
        %v3322 = vld [vmem:[%s3291 + $0x78] sm:$0xf]
        %v3323 = vld [vmem:[%s3291 + $0x7c] sm:$0xf]
        %v3324 = vld [vmem:[%s3291 + $0x80] sm:$0xf]
        %v3325 = vld [vmem:[%s3291 + $0x84] sm:$0xf]
        %v3326 = vld [vmem:[%s3291 + $0x88] sm:$0xf]
        %v3327 = vld [vmem:[%s3291 + $0x8c] sm:$0xf]
        %v3328 = vrot.slane %v2349, 2
        %v3329 = vrot.slane %v2350, 2
        %v3330 = vrot.slane %v2351, 2
        %v3369 = vunpack.c.l.b16 %v3292
        %v3370 = vunpack.c.l.b16 %v3293
        %v3371 = vunpack.c.l.b16 %v3294
        %v3372 = vunpack.c.l.b16 %v3295
        %v3373 = vunpack.c.l.b16 %v3296
        %v3374 = vunpack.c.l.b16 %v3297
        %v3375 = vunpack.c.l.b16 %v3298
        %v3376 = vunpack.c.l.b16 %v3299
        %v3377 = vunpack.c.l.b16 %v3300
        %v3378 = vunpack.c.l.b16 %v3301
        %v3379 = vunpack.c.l.b16 %v3302
        %v3380 = vunpack.c.l.b16 %v3303
        %v3381 = vunpack.c.l.b16 %v3304
        %v3382 = vunpack.c.l.b16 %v3305
        %v3383 = vunpack.c.l.b16 %v3306
        %v3384 = vunpack.c.l.b16 %v3307
        %v3385 = vunpack.c.l.b16 %v3308
        %v3386 = vunpack.c.l.b16 %v3309
        %v3387 = vunpack.c.l.b16 %v3310
        %v3388 = vunpack.c.l.b16 %v3311
        %v3389 = vunpack.c.l.b16 %v3312
        %v3390 = vunpack.c.l.b16 %v3313
        %v3391 = vunpack.c.l.b16 %v3314
        %v3392 = vunpack.c.l.b16 %v3315
        %v3393 = vunpack.c.l.b16 %v3316
        %v3394 = vunpack.c.l.b16 %v3317
        %v3395 = vunpack.c.l.b16 %v3318
        %v3396 = vunpack.c.l.b16 %v3319
        %v3397 = vunpack.c.l.b16 %v3320
        %v3398 = vunpack.c.l.b16 %v3321
        %v3399 = vunpack.c.l.b16 %v3322
        %v3400 = vunpack.c.l.b16 %v3323
        %v3401 = vunpack.c.l.b16 %v3324
        %v3402 = vunpack.c.l.b16 %v3325
        %v3403 = vunpack.c.l.b16 %v3326
        %v3404 = vunpack.c.l.b16 %v3327
        %v3405 = vpack.c.b16 %v3370, %v3369
        %v3406 = vpack.c.b16 %v3372, %v3371
        %v3407 = vpack.c.b16 %v3374, %v3373
        %v3408 = vpack.c.b16 %v3376, %v3375
        %v3409 = vpack.c.b16 %v3378, %v3377
        %v3410 = vpack.c.b16 %v3380, %v3379
        %v3411 = vpack.c.b16 %v3382, %v3381
        %v3412 = vpack.c.b16 %v3384, %v3383
        %v3413 = vpack.c.b16 %v3386, %v3385
        %v3414 = vpack.c.b16 %v3388, %v3387
        %v3415 = vpack.c.b16 %v3390, %v3389
        %v3416 = vpack.c.b16 %v3392, %v3391
        %v3417 = vpack.c.b16 %v3394, %v3393
        %v3418 = vpack.c.b16 %v3396, %v3395
        %v3419 = vpack.c.b16 %v3398, %v3397
        %v3420 = vpack.c.b16 %v3400, %v3399
        %v3421 = vpack.c.b16 %v3402, %v3401
        %v3422 = vpack.c.b16 %v3404, %v3403
        %v3442 = vsel %vm2496, %v3330, 0
        %3444 = vmatprep.subr.bf16.mxu0 0
        %3445 = vmatpush1.bf16.msra.mxu0 %v3412
        %3446 = vmatprep.subr.bf16.mxu0 0
        %3447 = vmatpush1.bf16.msra.mxu0 %v3411
        %3448 = vmatprep.subr.bf16.mxu0 0
        %3449 = vmatpush1.bf16.msra.mxu0 %v3410
        %3450 = vmatprep.subr.bf16.mxu0 0
        %3451 = vmatpush1.bf16.msra.mxu0 %v3409
        %3452 = vmatprep.subr.bf16.mxu0 0
        %3453 = vmatpush1.bf16.msra.mxu0 %v3408
        %3454 = vmatprep.subr.bf16.mxu0 0
        %3455 = vmatpush1.bf16.msra.mxu0 %v3407
        %3456 = vmatprep.subr.bf16.mxu0 0
        %3457 = vmatpush1.bf16.msra.mxu0 %v3406
        %3458 = vmatprep.subr.bf16.mxu0 0
        %3459 = vmatpush1.bf16.msra.mxu0 %v3405
        %3460 = vmatprep.subr.bf16.mxu0 0
        %3461 = vmatpush2.bf16.msra.mxu0 %v3420
        %3462 = vmatprep.subr.bf16.mxu0 0
        %3463 = vmatpush2.bf16.msra.mxu0 %v3419
        %3464 = vmatprep.subr.bf16.mxu0 0
        %3465 = vmatpush2.bf16.msra.mxu0 %v3418
        %3466 = vmatprep.subr.bf16.mxu0 0
        %3467 = vmatpush2.bf16.msra.mxu0 %v3417
        %3468 = vmatprep.subr.bf16.mxu0 0
        %3469 = vmatpush2.bf16.msra.mxu0 %v3416
        %3470 = vmatprep.subr.bf16.mxu0 0
        %3471 = vmatpush2.bf16.msra.mxu0 %v3415
        %3472 = vmatprep.subr.bf16.mxu0 0
        %3473 = vmatpush2.bf16.msra.mxu0 %v3414
        %3474 = vmatprep.subr.bf16.mxu0 0
        %3475 = vmatpush2.bf16.msra.mxu0 %v3413
        %3476 = vmatprep.mubr.bf16.mxu0 %v3329
        %3477 = vmatmul.mubr.bf16.gmra.mxu0 %v3328
        %v3478 = vpop.f32.mrf.mxu0
        %v3479 = vadd.f32 0.0, %v3478
        %v3480 = vpop.f32.mrf.mxu0
        %v3481 = vpop.f32.mrf.mxu0
        %v3482 = vpop.f32.mrf.mxu0
        %3483 = vdwg.mxu0
        %3484 = vmatprep.subr.bf16.mxu0 0
        %3485 = vmatpush1.bf16.msra.mxu0 0
        %3486 = vmatprep.subr.bf16.mxu0 0
        %3487 = vmatpush1.bf16.msra.mxu0 0
        %3488 = vmatprep.subr.bf16.mxu0 0
        %3489 = vmatpush1.bf16.msra.mxu0 0
        %3490 = vmatprep.subr.bf16.mxu0 0
        %3491 = vmatpush1.bf16.msra.mxu0 0
        %3492 = vmatprep.subr.bf16.mxu0 0
        %3493 = vmatpush1.bf16.msra.mxu0 0
        %3494 = vmatprep.subr.bf16.mxu0 0
        %3495 = vmatpush1.bf16.msra.mxu0 0
        %3496 = vmatprep.subr.bf16.mxu0 0
        %3497 = vmatpush1.bf16.msra.mxu0 %v3422
        %3498 = vmatprep.subr.bf16.mxu0 0
        %3499 = vmatpush1.bf16.msra.mxu0 %v3421
        %3500 = vmatprep.subr.bf16.mxu0 0
        %3501 = vmatpush2.bf16.msra.mxu0 0
        %3502 = vmatprep.subr.bf16.mxu0 0
        %3503 = vmatpush2.bf16.msra.mxu0 0
        %3504 = vmatprep.subr.bf16.mxu0 0
        %3505 = vmatpush2.bf16.msra.mxu0 0
        %3506 = vmatprep.subr.bf16.mxu0 0
        %3507 = vmatpush2.bf16.msra.mxu0 0
        %3508 = vmatprep.subr.bf16.mxu0 0
        %3509 = vmatpush2.bf16.msra.mxu0 0
        %3510 = vmatprep.subr.bf16.mxu0 0
        %3511 = vmatpush2.bf16.msra.mxu0 0
        %3512 = vmatprep.subr.bf16.mxu0 0
        %3513 = vmatpush2.bf16.msra.mxu0 0
        %3514 = vmatprep.subr.bf16.mxu0 0
        %3515 = vmatpush2.bf16.msra.mxu0 0
        %3516 = vmatprep.mubr.bf16.mxu0 0
        %3517 = vmatmul.mubr.bf16.gmra.mxu0 %v3442
        %v3518 = vpop.f32.mrf.mxu0
        %v3519 = vadd.f32 %v3479, %v3518
        %v3520 = vpop.f32.mrf.mxu0
        %v3521 = vpop.f32.mrf.mxu0
        %v3522 = vpop.f32.mrf.mxu0
        %3523 = vdwg.mxu0
        %v3524 = vadd.f32 %v3290, %v3519
        %s3525 = scalar_lea.vmem [#allocation3], 720
        %v3526 = vld [vmem:[%s3525] sm:$0xf]
        %v3527 = vld [vmem:[%s3525 + $0x4] sm:$0xf]
        %v3528 = vld [vmem:[%s3525 + $0x8] sm:$0xf]
        %v3529 = vld [vmem:[%s3525 + $0xc] sm:$0xf]
        %v3530 = vld [vmem:[%s3525 + $0x10] sm:$0xf]
        %v3531 = vld [vmem:[%s3525 + $0x14] sm:$0xf]
        %v3532 = vld [vmem:[%s3525 + $0x18] sm:$0xf]
        %v3533 = vld [vmem:[%s3525 + $0x1c] sm:$0xf]
        %v3534 = vld [vmem:[%s3525 + $0x20] sm:$0xf]
        %v3535 = vld [vmem:[%s3525 + $0x24] sm:$0xf]
        %v3536 = vld [vmem:[%s3525 + $0x28] sm:$0xf]
        %v3537 = vld [vmem:[%s3525 + $0x2c] sm:$0xf]
        %v3538 = vld [vmem:[%s3525 + $0x30] sm:$0xf]
        %v3539 = vld [vmem:[%s3525 + $0x34] sm:$0xf]
        %v3540 = vld [vmem:[%s3525 + $0x38] sm:$0xf]
        %v3541 = vld [vmem:[%s3525 + $0x3c] sm:$0xf]
        %v3542 = vld [vmem:[%s3525 + $0x40] sm:$0xf]
        %v3543 = vld [vmem:[%s3525 + $0x44] sm:$0xf]
        %v3544 = vld [vmem:[%s3525 + $0x48] sm:$0xf]
        %v3545 = vld [vmem:[%s3525 + $0x4c] sm:$0xf]
        %v3546 = vld [vmem:[%s3525 + $0x50] sm:$0xf]
        %v3547 = vld [vmem:[%s3525 + $0x54] sm:$0xf]
        %v3548 = vld [vmem:[%s3525 + $0x58] sm:$0xf]
        %v3549 = vld [vmem:[%s3525 + $0x5c] sm:$0xf]
        %v3550 = vld [vmem:[%s3525 + $0x60] sm:$0xf]
        %v3551 = vld [vmem:[%s3525 + $0x64] sm:$0xf]
        %v3552 = vld [vmem:[%s3525 + $0x68] sm:$0xf]
        %v3553 = vld [vmem:[%s3525 + $0x6c] sm:$0xf]
        %v3554 = vld [vmem:[%s3525 + $0x70] sm:$0xf]
        %v3555 = vld [vmem:[%s3525 + $0x74] sm:$0xf]
        %v3556 = vld [vmem:[%s3525 + $0x78] sm:$0xf]
        %v3557 = vld [vmem:[%s3525 + $0x7c] sm:$0xf]
        %v3558 = vld [vmem:[%s3525 + $0x80] sm:$0xf]
        %v3559 = vld [vmem:[%s3525 + $0x84] sm:$0xf]
        %v3560 = vld [vmem:[%s3525 + $0x88] sm:$0xf]
        %v3561 = vld [vmem:[%s3525 + $0x8c] sm:$0xf]
        %v3562 = vrot.slane %v2619, 2
        %v3563 = vrot.slane %v2622, 2
        %v3564 = vrot.slane %v2624, 2
        %v3603 = vunpack.c.l.b16 %v3526
        %v3604 = vunpack.c.l.b16 %v3527
        %v3605 = vunpack.c.l.b16 %v3528
        %v3606 = vunpack.c.l.b16 %v3529
        %v3607 = vunpack.c.l.b16 %v3530
        %v3608 = vunpack.c.l.b16 %v3531
        %v3609 = vunpack.c.l.b16 %v3532
        %v3610 = vunpack.c.l.b16 %v3533
        %v3611 = vunpack.c.l.b16 %v3534
        %v3612 = vunpack.c.l.b16 %v3535
        %v3613 = vunpack.c.l.b16 %v3536
        %v3614 = vunpack.c.l.b16 %v3537
        %v3615 = vunpack.c.l.b16 %v3538
        %v3616 = vunpack.c.l.b16 %v3539
        %v3617 = vunpack.c.l.b16 %v3540
        %v3618 = vunpack.c.l.b16 %v3541
        %v3619 = vunpack.c.l.b16 %v3542
        %v3620 = vunpack.c.l.b16 %v3543
        %v3621 = vunpack.c.l.b16 %v3544
        %v3622 = vunpack.c.l.b16 %v3545
        %v3623 = vunpack.c.l.b16 %v3546
        %v3624 = vunpack.c.l.b16 %v3547
        %v3625 = vunpack.c.l.b16 %v3548
        %v3626 = vunpack.c.l.b16 %v3549
        %v3627 = vunpack.c.l.b16 %v3550
        %v3628 = vunpack.c.l.b16 %v3551
        %v3629 = vunpack.c.l.b16 %v3552
        %v3630 = vunpack.c.l.b16 %v3553
        %v3631 = vunpack.c.l.b16 %v3554
        %v3632 = vunpack.c.l.b16 %v3555
        %v3633 = vunpack.c.l.b16 %v3556
        %v3634 = vunpack.c.l.b16 %v3557
        %v3635 = vunpack.c.l.b16 %v3558
        %v3636 = vunpack.c.l.b16 %v3559
        %v3637 = vunpack.c.l.b16 %v3560
        %v3638 = vunpack.c.l.b16 %v3561
        %v3639 = vpack.c.b16 %v3604, %v3603
        %v3640 = vpack.c.b16 %v3606, %v3605
        %v3641 = vpack.c.b16 %v3608, %v3607
        %v3642 = vpack.c.b16 %v3610, %v3609
        %v3643 = vpack.c.b16 %v3612, %v3611
        %v3644 = vpack.c.b16 %v3614, %v3613
        %v3645 = vpack.c.b16 %v3616, %v3615
        %v3646 = vpack.c.b16 %v3618, %v3617
        %v3647 = vpack.c.b16 %v3620, %v3619
        %v3648 = vpack.c.b16 %v3622, %v3621
        %v3649 = vpack.c.b16 %v3624, %v3623
        %v3650 = vpack.c.b16 %v3626, %v3625
        %v3651 = vpack.c.b16 %v3628, %v3627
        %v3652 = vpack.c.b16 %v3630, %v3629
        %v3653 = vpack.c.b16 %v3632, %v3631
        %v3654 = vpack.c.b16 %v3634, %v3633
        %v3655 = vpack.c.b16 %v3636, %v3635
        %v3656 = vpack.c.b16 %v3638, %v3637
        %v3676 = vsel %vm2496, %v3564, 0
        %3678 = vmatprep.subr.bf16.mxu0 0
        %3679 = vmatpush1.bf16.msra.mxu0 %v3646
        %3680 = vmatprep.subr.bf16.mxu0 0
        %3681 = vmatpush1.bf16.msra.mxu0 %v3645
        %3682 = vmatprep.subr.bf16.mxu0 0
        %3683 = vmatpush1.bf16.msra.mxu0 %v3644
        %3684 = vmatprep.subr.bf16.mxu0 0
        %3685 = vmatpush1.bf16.msra.mxu0 %v3643
        %3686 = vmatprep.subr.bf16.mxu0 0
        %3687 = vmatpush1.bf16.msra.mxu0 %v3642
        %3688 = vmatprep.subr.bf16.mxu0 0
        %3689 = vmatpush1.bf16.msra.mxu0 %v3641
        %3690 = vmatprep.subr.bf16.mxu0 0
        %3691 = vmatpush1.bf16.msra.mxu0 %v3640
        %3692 = vmatprep.subr.bf16.mxu0 0
        %3693 = vmatpush1.bf16.msra.mxu0 %v3639
        %3694 = vmatprep.subr.bf16.mxu0 0
        %3695 = vmatpush2.bf16.msra.mxu0 %v3654
        %3696 = vmatprep.subr.bf16.mxu0 0
        %3697 = vmatpush2.bf16.msra.mxu0 %v3653
        %3698 = vmatprep.subr.bf16.mxu0 0
        %3699 = vmatpush2.bf16.msra.mxu0 %v3652
        %3700 = vmatprep.subr.bf16.mxu0 0
        %3701 = vmatpush2.bf16.msra.mxu0 %v3651
        %3702 = vmatprep.subr.bf16.mxu0 0
        %3703 = vmatpush2.bf16.msra.mxu0 %v3650
        %3704 = vmatprep.subr.bf16.mxu0 0
        %3705 = vmatpush2.bf16.msra.mxu0 %v3649
        %3706 = vmatprep.subr.bf16.mxu0 0
        %3707 = vmatpush2.bf16.msra.mxu0 %v3648
        %3708 = vmatprep.subr.bf16.mxu0 0
        %3709 = vmatpush2.bf16.msra.mxu0 %v3647
        %3710 = vmatprep.mubr.bf16.mxu0 %v3563
        %3711 = vmatmul.mubr.bf16.gmra.mxu0 %v3562
        %v3712 = vpop.f32.mrf.mxu0
        %v3713 = vadd.f32 0.0, %v3712
        %v3714 = vpop.f32.mrf.mxu0
        %v3715 = vpop.f32.mrf.mxu0
        %v3716 = vpop.f32.mrf.mxu0
        %3717 = vdwg.mxu0
        %3718 = vmatprep.subr.bf16.mxu0 0
        %3719 = vmatpush1.bf16.msra.mxu0 0
        %3720 = vmatprep.subr.bf16.mxu0 0
        %3721 = vmatpush1.bf16.msra.mxu0 0
        %3722 = vmatprep.subr.bf16.mxu0 0
        %3723 = vmatpush1.bf16.msra.mxu0 0
        %3724 = vmatprep.subr.bf16.mxu0 0
        %3725 = vmatpush1.bf16.msra.mxu0 0
        %3726 = vmatprep.subr.bf16.mxu0 0
        %3727 = vmatpush1.bf16.msra.mxu0 0
        %3728 = vmatprep.subr.bf16.mxu0 0
        %3729 = vmatpush1.bf16.msra.mxu0 0
        %3730 = vmatprep.subr.bf16.mxu0 0
        %3731 = vmatpush1.bf16.msra.mxu0 %v3656
        %3732 = vmatprep.subr.bf16.mxu0 0
        %3733 = vmatpush1.bf16.msra.mxu0 %v3655
        %3734 = vmatprep.subr.bf16.mxu0 0
        %3735 = vmatpush2.bf16.msra.mxu0 0
        %3736 = vmatprep.subr.bf16.mxu0 0
        %3737 = vmatpush2.bf16.msra.mxu0 0
        %3738 = vmatprep.subr.bf16.mxu0 0
        %3739 = vmatpush2.bf16.msra.mxu0 0
        %3740 = vmatprep.subr.bf16.mxu0 0
        %3741 = vmatpush2.bf16.msra.mxu0 0
        %3742 = vmatprep.subr.bf16.mxu0 0
        %3743 = vmatpush2.bf16.msra.mxu0 0
        %3744 = vmatprep.subr.bf16.mxu0 0
        %3745 = vmatpush2.bf16.msra.mxu0 0
        %3746 = vmatprep.subr.bf16.mxu0 0
        %3747 = vmatpush2.bf16.msra.mxu0 0
        %3748 = vmatprep.subr.bf16.mxu0 0
        %3749 = vmatpush2.bf16.msra.mxu0 0
        %3750 = vmatprep.mubr.bf16.mxu0 0
        %3751 = vmatmul.mubr.bf16.gmra.mxu0 %v3676
        %v3752 = vpop.f32.mrf.mxu0
        %v3753 = vadd.f32 %v3713, %v3752
        %v3754 = vpop.f32.mrf.mxu0
        %v3755 = vpop.f32.mrf.mxu0
        %v3756 = vpop.f32.mrf.mxu0
        %3757 = vdwg.mxu0
        %v3758 = vadd.f32 %v3524, %v3753
        %s3759 = scalar_lea.vmem [#allocation3], 864
        %v3760 = vld [vmem:[%s3759] sm:$0xf]
        %v3761 = vld [vmem:[%s3759 + $0x4] sm:$0xf]
        %v3762 = vld [vmem:[%s3759 + $0x8] sm:$0xf]
        %v3763 = vld [vmem:[%s3759 + $0xc] sm:$0xf]
        %v3764 = vld [vmem:[%s3759 + $0x10] sm:$0xf]
        %v3765 = vld [vmem:[%s3759 + $0x14] sm:$0xf]
        %v3766 = vld [vmem:[%s3759 + $0x18] sm:$0xf]
        %v3767 = vld [vmem:[%s3759 + $0x1c] sm:$0xf]
        %v3768 = vld [vmem:[%s3759 + $0x20] sm:$0xf]
        %v3769 = vld [vmem:[%s3759 + $0x24] sm:$0xf]
        %v3770 = vld [vmem:[%s3759 + $0x28] sm:$0xf]
        %v3771 = vld [vmem:[%s3759 + $0x2c] sm:$0xf]
        %v3772 = vld [vmem:[%s3759 + $0x30] sm:$0xf]
        %v3773 = vld [vmem:[%s3759 + $0x34] sm:$0xf]
        %v3774 = vld [vmem:[%s3759 + $0x38] sm:$0xf]
        %v3775 = vld [vmem:[%s3759 + $0x3c] sm:$0xf]
        %v3776 = vld [vmem:[%s3759 + $0x40] sm:$0xf]
        %v3777 = vld [vmem:[%s3759 + $0x44] sm:$0xf]
        %v3778 = vld [vmem:[%s3759 + $0x48] sm:$0xf]
        %v3779 = vld [vmem:[%s3759 + $0x4c] sm:$0xf]
        %v3780 = vld [vmem:[%s3759 + $0x50] sm:$0xf]
        %v3781 = vld [vmem:[%s3759 + $0x54] sm:$0xf]
        %v3782 = vld [vmem:[%s3759 + $0x58] sm:$0xf]
        %v3783 = vld [vmem:[%s3759 + $0x5c] sm:$0xf]
        %v3784 = vld [vmem:[%s3759 + $0x60] sm:$0xf]
        %v3785 = vld [vmem:[%s3759 + $0x64] sm:$0xf]
        %v3786 = vld [vmem:[%s3759 + $0x68] sm:$0xf]
        %v3787 = vld [vmem:[%s3759 + $0x6c] sm:$0xf]
        %v3788 = vld [vmem:[%s3759 + $0x70] sm:$0xf]
        %v3789 = vld [vmem:[%s3759 + $0x74] sm:$0xf]
        %v3790 = vld [vmem:[%s3759 + $0x78] sm:$0xf]
        %v3791 = vld [vmem:[%s3759 + $0x7c] sm:$0xf]
        %v3792 = vld [vmem:[%s3759 + $0x80] sm:$0xf]
        %v3793 = vld [vmem:[%s3759 + $0x84] sm:$0xf]
        %v3794 = vld [vmem:[%s3759 + $0x88] sm:$0xf]
        %v3795 = vld [vmem:[%s3759 + $0x8c] sm:$0xf]
        %v3796 = vrot.slane %v2349, 3
        %v3797 = vrot.slane %v2350, 3
        %v3798 = vrot.slane %v2351, 3
        %v3837 = vunpack.c.l.b16 %v3760
        %v3838 = vunpack.c.l.b16 %v3761
        %v3839 = vunpack.c.l.b16 %v3762
        %v3840 = vunpack.c.l.b16 %v3763
        %v3841 = vunpack.c.l.b16 %v3764
        %v3842 = vunpack.c.l.b16 %v3765
        %v3843 = vunpack.c.l.b16 %v3766
        %v3844 = vunpack.c.l.b16 %v3767
        %v3845 = vunpack.c.l.b16 %v3768
        %v3846 = vunpack.c.l.b16 %v3769
        %v3847 = vunpack.c.l.b16 %v3770
        %v3848 = vunpack.c.l.b16 %v3771
        %v3849 = vunpack.c.l.b16 %v3772
        %v3850 = vunpack.c.l.b16 %v3773
        %v3851 = vunpack.c.l.b16 %v3774
        %v3852 = vunpack.c.l.b16 %v3775
        %v3853 = vunpack.c.l.b16 %v3776
        %v3854 = vunpack.c.l.b16 %v3777
        %v3855 = vunpack.c.l.b16 %v3778
        %v3856 = vunpack.c.l.b16 %v3779
        %v3857 = vunpack.c.l.b16 %v3780
        %v3858 = vunpack.c.l.b16 %v3781
        %v3859 = vunpack.c.l.b16 %v3782
        %v3860 = vunpack.c.l.b16 %v3783
        %v3861 = vunpack.c.l.b16 %v3784
        %v3862 = vunpack.c.l.b16 %v3785
        %v3863 = vunpack.c.l.b16 %v3786
        %v3864 = vunpack.c.l.b16 %v3787
        %v3865 = vunpack.c.l.b16 %v3788
        %v3866 = vunpack.c.l.b16 %v3789
        %v3867 = vunpack.c.l.b16 %v3790
        %v3868 = vunpack.c.l.b16 %v3791
        %v3869 = vunpack.c.l.b16 %v3792
        %v3870 = vunpack.c.l.b16 %v3793
        %v3871 = vunpack.c.l.b16 %v3794
        %v3872 = vunpack.c.l.b16 %v3795
        %v3873 = vpack.c.b16 %v3838, %v3837
        %v3874 = vpack.c.b16 %v3840, %v3839
        %v3875 = vpack.c.b16 %v3842, %v3841
        %v3876 = vpack.c.b16 %v3844, %v3843
        %v3877 = vpack.c.b16 %v3846, %v3845
        %v3878 = vpack.c.b16 %v3848, %v3847
        %v3879 = vpack.c.b16 %v3850, %v3849
        %v3880 = vpack.c.b16 %v3852, %v3851
        %v3881 = vpack.c.b16 %v3854, %v3853
        %v3882 = vpack.c.b16 %v3856, %v3855
        %v3883 = vpack.c.b16 %v3858, %v3857
        %v3884 = vpack.c.b16 %v3860, %v3859
        %v3885 = vpack.c.b16 %v3862, %v3861
        %v3886 = vpack.c.b16 %v3864, %v3863
        %v3887 = vpack.c.b16 %v3866, %v3865
        %v3888 = vpack.c.b16 %v3868, %v3867
        %v3889 = vpack.c.b16 %v3870, %v3869
        %v3890 = vpack.c.b16 %v3872, %v3871
        %v3910 = vsel %vm2496, %v3798, 0
        %3912 = vmatprep.subr.bf16.mxu0 0
        %3913 = vmatpush1.bf16.msra.mxu0 %v3880
        %3914 = vmatprep.subr.bf16.mxu0 0
        %3915 = vmatpush1.bf16.msra.mxu0 %v3879
        %3916 = vmatprep.subr.bf16.mxu0 0
        %3917 = vmatpush1.bf16.msra.mxu0 %v3878
        %3918 = vmatprep.subr.bf16.mxu0 0
        %3919 = vmatpush1.bf16.msra.mxu0 %v3877
        %3920 = vmatprep.subr.bf16.mxu0 0
        %3921 = vmatpush1.bf16.msra.mxu0 %v3876
        %3922 = vmatprep.subr.bf16.mxu0 0
        %3923 = vmatpush1.bf16.msra.mxu0 %v3875
        %3924 = vmatprep.subr.bf16.mxu0 0
        %3925 = vmatpush1.bf16.msra.mxu0 %v3874
        %3926 = vmatprep.subr.bf16.mxu0 0
        %3927 = vmatpush1.bf16.msra.mxu0 %v3873
        %3928 = vmatprep.subr.bf16.mxu0 0
        %3929 = vmatpush2.bf16.msra.mxu0 %v3888
        %3930 = vmatprep.subr.bf16.mxu0 0
        %3931 = vmatpush2.bf16.msra.mxu0 %v3887
        %3932 = vmatprep.subr.bf16.mxu0 0
        %3933 = vmatpush2.bf16.msra.mxu0 %v3886
        %3934 = vmatprep.subr.bf16.mxu0 0
        %3935 = vmatpush2.bf16.msra.mxu0 %v3885
        %3936 = vmatprep.subr.bf16.mxu0 0
        %3937 = vmatpush2.bf16.msra.mxu0 %v3884
        %3938 = vmatprep.subr.bf16.mxu0 0
        %3939 = vmatpush2.bf16.msra.mxu0 %v3883
        %3940 = vmatprep.subr.bf16.mxu0 0
        %3941 = vmatpush2.bf16.msra.mxu0 %v3882
        %3942 = vmatprep.subr.bf16.mxu0 0
        %3943 = vmatpush2.bf16.msra.mxu0 %v3881
        %3944 = vmatprep.mubr.bf16.mxu0 %v3797
        %3945 = vmatmul.mubr.bf16.gmra.mxu0 %v3796
        %v3946 = vpop.f32.mrf.mxu0
        %v3947 = vadd.f32 0.0, %v3946
        %v3948 = vpop.f32.mrf.mxu0
        %v3949 = vpop.f32.mrf.mxu0
        %v3950 = vpop.f32.mrf.mxu0
        %3951 = vdwg.mxu0
        %3952 = vmatprep.subr.bf16.mxu0 0
        %3953 = vmatpush1.bf16.msra.mxu0 0
        %3954 = vmatprep.subr.bf16.mxu0 0
        %3955 = vmatpush1.bf16.msra.mxu0 0
        %3956 = vmatprep.subr.bf16.mxu0 0
        %3957 = vmatpush1.bf16.msra.mxu0 0
        %3958 = vmatprep.subr.bf16.mxu0 0
        %3959 = vmatpush1.bf16.msra.mxu0 0
        %3960 = vmatprep.subr.bf16.mxu0 0
        %3961 = vmatpush1.bf16.msra.mxu0 0
        %3962 = vmatprep.subr.bf16.mxu0 0
        %3963 = vmatpush1.bf16.msra.mxu0 0
        %3964 = vmatprep.subr.bf16.mxu0 0
        %3965 = vmatpush1.bf16.msra.mxu0 %v3890
        %3966 = vmatprep.subr.bf16.mxu0 0
        %3967 = vmatpush1.bf16.msra.mxu0 %v3889
        %3968 = vmatprep.subr.bf16.mxu0 0
        %3969 = vmatpush2.bf16.msra.mxu0 0
        %3970 = vmatprep.subr.bf16.mxu0 0
        %3971 = vmatpush2.bf16.msra.mxu0 0
        %3972 = vmatprep.subr.bf16.mxu0 0
        %3973 = vmatpush2.bf16.msra.mxu0 0
        %3974 = vmatprep.subr.bf16.mxu0 0
        %3975 = vmatpush2.bf16.msra.mxu0 0
        %3976 = vmatprep.subr.bf16.mxu0 0
        %3977 = vmatpush2.bf16.msra.mxu0 0
        %3978 = vmatprep.subr.bf16.mxu0 0
        %3979 = vmatpush2.bf16.msra.mxu0 0
        %3980 = vmatprep.subr.bf16.mxu0 0
        %3981 = vmatpush2.bf16.msra.mxu0 0
        %3982 = vmatprep.subr.bf16.mxu0 0
        %3983 = vmatpush2.bf16.msra.mxu0 0
        %3984 = vmatprep.mubr.bf16.mxu0 0
        %3985 = vmatmul.mubr.bf16.gmra.mxu0 %v3910
        %v3986 = vpop.f32.mrf.mxu0
        %v3987 = vadd.f32 %v3947, %v3986
        %v3988 = vpop.f32.mrf.mxu0
        %v3989 = vpop.f32.mrf.mxu0
        %v3990 = vpop.f32.mrf.mxu0
        %3991 = vdwg.mxu0
        %v3992 = vadd.f32 %v3758, %v3987
        %s3993 = scalar_lea.vmem [#allocation3], 1008
        %v3994 = vld [vmem:[%s3993] sm:$0xf]
        %v3995 = vld [vmem:[%s3993 + $0x4] sm:$0xf]
        %v3996 = vld [vmem:[%s3993 + $0x8] sm:$0xf]
        %v3997 = vld [vmem:[%s3993 + $0xc] sm:$0xf]
        %v3998 = vld [vmem:[%s3993 + $0x10] sm:$0xf]
        %v3999 = vld [vmem:[%s3993 + $0x14] sm:$0xf]
        %v4000 = vld [vmem:[%s3993 + $0x18] sm:$0xf]
        %v4001 = vld [vmem:[%s3993 + $0x1c] sm:$0xf]
        %v4002 = vld [vmem:[%s3993 + $0x20] sm:$0xf]
        %v4003 = vld [vmem:[%s3993 + $0x24] sm:$0xf]
        %v4004 = vld [vmem:[%s3993 + $0x28] sm:$0xf]
        %v4005 = vld [vmem:[%s3993 + $0x2c] sm:$0xf]
        %v4006 = vld [vmem:[%s3993 + $0x30] sm:$0xf]
        %v4007 = vld [vmem:[%s3993 + $0x34] sm:$0xf]
        %v4008 = vld [vmem:[%s3993 + $0x38] sm:$0xf]
        %v4009 = vld [vmem:[%s3993 + $0x3c] sm:$0xf]
        %v4010 = vld [vmem:[%s3993 + $0x40] sm:$0xf]
        %v4011 = vld [vmem:[%s3993 + $0x44] sm:$0xf]
        %v4012 = vld [vmem:[%s3993 + $0x48] sm:$0xf]
        %v4013 = vld [vmem:[%s3993 + $0x4c] sm:$0xf]
        %v4014 = vld [vmem:[%s3993 + $0x50] sm:$0xf]
        %v4015 = vld [vmem:[%s3993 + $0x54] sm:$0xf]
        %v4016 = vld [vmem:[%s3993 + $0x58] sm:$0xf]
        %v4017 = vld [vmem:[%s3993 + $0x5c] sm:$0xf]
        %v4018 = vld [vmem:[%s3993 + $0x60] sm:$0xf]
        %v4019 = vld [vmem:[%s3993 + $0x64] sm:$0xf]
        %v4020 = vld [vmem:[%s3993 + $0x68] sm:$0xf]
        %v4021 = vld [vmem:[%s3993 + $0x6c] sm:$0xf]
        %v4022 = vld [vmem:[%s3993 + $0x70] sm:$0xf]
        %v4023 = vld [vmem:[%s3993 + $0x74] sm:$0xf]
        %v4024 = vld [vmem:[%s3993 + $0x78] sm:$0xf]
        %v4025 = vld [vmem:[%s3993 + $0x7c] sm:$0xf]
        %v4026 = vld [vmem:[%s3993 + $0x80] sm:$0xf]
        %v4027 = vld [vmem:[%s3993 + $0x84] sm:$0xf]
        %v4028 = vld [vmem:[%s3993 + $0x88] sm:$0xf]
        %v4029 = vld [vmem:[%s3993 + $0x8c] sm:$0xf]
        %v4030 = vrot.slane %v2619, 3
        %v4031 = vrot.slane %v2622, 3
        %v4032 = vrot.slane %v2624, 3
        %v4071 = vunpack.c.l.b16 %v3994
        %v4072 = vunpack.c.l.b16 %v3995
        %v4073 = vunpack.c.l.b16 %v3996
        %v4074 = vunpack.c.l.b16 %v3997
        %v4075 = vunpack.c.l.b16 %v3998
        %v4076 = vunpack.c.l.b16 %v3999
        %v4077 = vunpack.c.l.b16 %v4000
        %v4078 = vunpack.c.l.b16 %v4001
        %v4079 = vunpack.c.l.b16 %v4002
        %v4080 = vunpack.c.l.b16 %v4003
        %v4081 = vunpack.c.l.b16 %v4004
        %v4082 = vunpack.c.l.b16 %v4005
        %v4083 = vunpack.c.l.b16 %v4006
        %v4084 = vunpack.c.l.b16 %v4007
        %v4085 = vunpack.c.l.b16 %v4008
        %v4086 = vunpack.c.l.b16 %v4009
        %v4087 = vunpack.c.l.b16 %v4010
        %v4088 = vunpack.c.l.b16 %v4011
        %v4089 = vunpack.c.l.b16 %v4012
        %v4090 = vunpack.c.l.b16 %v4013
        %v4091 = vunpack.c.l.b16 %v4014
        %v4092 = vunpack.c.l.b16 %v4015
        %v4093 = vunpack.c.l.b16 %v4016
        %v4094 = vunpack.c.l.b16 %v4017
        %v4095 = vunpack.c.l.b16 %v4018
        %v4096 = vunpack.c.l.b16 %v4019
        %v4097 = vunpack.c.l.b16 %v4020
        %v4098 = vunpack.c.l.b16 %v4021
        %v4099 = vunpack.c.l.b16 %v4022
        %v4100 = vunpack.c.l.b16 %v4023
        %v4101 = vunpack.c.l.b16 %v4024
        %v4102 = vunpack.c.l.b16 %v4025
        %v4103 = vunpack.c.l.b16 %v4026
        %v4104 = vunpack.c.l.b16 %v4027
        %v4105 = vunpack.c.l.b16 %v4028
        %v4106 = vunpack.c.l.b16 %v4029
        %v4107 = vpack.c.b16 %v4072, %v4071
        %v4108 = vpack.c.b16 %v4074, %v4073
        %v4109 = vpack.c.b16 %v4076, %v4075
        %v4110 = vpack.c.b16 %v4078, %v4077
        %v4111 = vpack.c.b16 %v4080, %v4079
        %v4112 = vpack.c.b16 %v4082, %v4081
        %v4113 = vpack.c.b16 %v4084, %v4083
        %v4114 = vpack.c.b16 %v4086, %v4085
        %v4115 = vpack.c.b16 %v4088, %v4087
        %v4116 = vpack.c.b16 %v4090, %v4089
        %v4117 = vpack.c.b16 %v4092, %v4091
        %v4118 = vpack.c.b16 %v4094, %v4093
        %v4119 = vpack.c.b16 %v4096, %v4095
        %v4120 = vpack.c.b16 %v4098, %v4097
        %v4121 = vpack.c.b16 %v4100, %v4099
        %v4122 = vpack.c.b16 %v4102, %v4101
        %v4123 = vpack.c.b16 %v4104, %v4103
        %v4124 = vpack.c.b16 %v4106, %v4105
        %v4144 = vsel %vm2496, %v4032, 0
        %4146 = vmatprep.subr.bf16.mxu0 0
        %4147 = vmatpush1.bf16.msra.mxu0 %v4114
        %4148 = vmatprep.subr.bf16.mxu0 0
        %4149 = vmatpush1.bf16.msra.mxu0 %v4113
        %4150 = vmatprep.subr.bf16.mxu0 0
        %4151 = vmatpush1.bf16.msra.mxu0 %v4112
        %4152 = vmatprep.subr.bf16.mxu0 0
        %4153 = vmatpush1.bf16.msra.mxu0 %v4111
        %4154 = vmatprep.subr.bf16.mxu0 0
        %4155 = vmatpush1.bf16.msra.mxu0 %v4110
        %4156 = vmatprep.subr.bf16.mxu0 0
        %4157 = vmatpush1.bf16.msra.mxu0 %v4109
        %4158 = vmatprep.subr.bf16.mxu0 0
        %4159 = vmatpush1.bf16.msra.mxu0 %v4108
        %4160 = vmatprep.subr.bf16.mxu0 0
        %4161 = vmatpush1.bf16.msra.mxu0 %v4107
        %4162 = vmatprep.subr.bf16.mxu0 0
        %4163 = vmatpush2.bf16.msra.mxu0 %v4122
        %4164 = vmatprep.subr.bf16.mxu0 0
        %4165 = vmatpush2.bf16.msra.mxu0 %v4121
        %4166 = vmatprep.subr.bf16.mxu0 0
        %4167 = vmatpush2.bf16.msra.mxu0 %v4120
        %4168 = vmatprep.subr.bf16.mxu0 0
        %4169 = vmatpush2.bf16.msra.mxu0 %v4119
        %4170 = vmatprep.subr.bf16.mxu0 0
        %4171 = vmatpush2.bf16.msra.mxu0 %v4118
        %4172 = vmatprep.subr.bf16.mxu0 0
        %4173 = vmatpush2.bf16.msra.mxu0 %v4117
        %4174 = vmatprep.subr.bf16.mxu0 0
        %4175 = vmatpush2.bf16.msra.mxu0 %v4116
        %4176 = vmatprep.subr.bf16.mxu0 0
        %4177 = vmatpush2.bf16.msra.mxu0 %v4115
        %4178 = vmatprep.mubr.bf16.mxu0 %v4031
        %4179 = vmatmul.mubr.bf16.gmra.mxu0 %v4030
        %v4180 = vpop.f32.mrf.mxu0
        %v4181 = vadd.f32 0.0, %v4180
        %v4182 = vpop.f32.mrf.mxu0
        %v4183 = vpop.f32.mrf.mxu0
        %v4184 = vpop.f32.mrf.mxu0
        %4185 = vdwg.mxu0
        %4186 = vmatprep.subr.bf16.mxu0 0
        %4187 = vmatpush1.bf16.msra.mxu0 0
        %4188 = vmatprep.subr.bf16.mxu0 0
        %4189 = vmatpush1.bf16.msra.mxu0 0
        %4190 = vmatprep.subr.bf16.mxu0 0
        %4191 = vmatpush1.bf16.msra.mxu0 0
        %4192 = vmatprep.subr.bf16.mxu0 0
        %4193 = vmatpush1.bf16.msra.mxu0 0
        %4194 = vmatprep.subr.bf16.mxu0 0
        %4195 = vmatpush1.bf16.msra.mxu0 0
        %4196 = vmatprep.subr.bf16.mxu0 0
        %4197 = vmatpush1.bf16.msra.mxu0 0
        %4198 = vmatprep.subr.bf16.mxu0 0
        %4199 = vmatpush1.bf16.msra.mxu0 %v4124
        %4200 = vmatprep.subr.bf16.mxu0 0
        %4201 = vmatpush1.bf16.msra.mxu0 %v4123
        %4202 = vmatprep.subr.bf16.mxu0 0
        %4203 = vmatpush2.bf16.msra.mxu0 0
        %4204 = vmatprep.subr.bf16.mxu0 0
        %4205 = vmatpush2.bf16.msra.mxu0 0
        %4206 = vmatprep.subr.bf16.mxu0 0
        %4207 = vmatpush2.bf16.msra.mxu0 0
        %4208 = vmatprep.subr.bf16.mxu0 0
        %4209 = vmatpush2.bf16.msra.mxu0 0
        %4210 = vmatprep.subr.bf16.mxu0 0
        %4211 = vmatpush2.bf16.msra.mxu0 0
        %4212 = vmatprep.subr.bf16.mxu0 0
        %4213 = vmatpush2.bf16.msra.mxu0 0
        %4214 = vmatprep.subr.bf16.mxu0 0
        %4215 = vmatpush2.bf16.msra.mxu0 0
        %4216 = vmatprep.subr.bf16.mxu0 0
        %4217 = vmatpush2.bf16.msra.mxu0 0
        %4218 = vmatprep.mubr.bf16.mxu0 0
        %4219 = vmatmul.mubr.bf16.gmra.mxu0 %v4144
        %v4220 = vpop.f32.mrf.mxu0
        %v4221 = vadd.f32 %v4181, %v4220
        %v4222 = vpop.f32.mrf.mxu0
        %v4223 = vpop.f32.mrf.mxu0
        %v4224 = vpop.f32.mrf.mxu0
        %4225 = vdwg.mxu0
        %v4226 = vadd.f32 %v3992, %v4221
        %v4228 = vlaneseq
        %v4229 = vshrl.u32 %v4228, 7
        %v4230 = vsub.s32 0, %v4229
        %v4231 = vrot.slane %v4226, %v4230
        %4233 = vst [vmem:[%s313] sm:$0xff] %v4231
        %s4234 = sand.u32 %s204, 1
        %s4235 = scalar_lea.sflag [#allocation5], %s4234
        %s4236 = sand.u32 %s204, 1
        %s4237 = smul.addr %s4236, 8
        %s4238 = scalar_lea.vmem [#allocation6], %s4237
        // Predicated region
        $region57: #{tpu_custom_call.1} parent=51 // pred_check
          %p4239 = pneg %p214
        $region58: #{tpu_custom_call.1} parent=51 // pred_check_branch
          %4241 = sbr.rel (%p4239) target = $region60
        $region59: #{tpu_custom_call.1} parent=51 // pred_region
          %s4243 = ssub.s32 128, 128
          %4244 = vsyncadd %s4235, %s4243
          %s4245 = smul.addr %s23, 128
          %s4246 = scalar_lea.hbm %s8, %s4245
          %s4248 = sshll.u32 %s4238, 4
          %s4249 = int_to_ptr.vmem [resolvable:$true] %s4248
          %4251 = dma.vmem_to_hbm [thread:$0]  %s4249, 128, %s4246, %s4235
        $region60: #{tpu_custom_call.1} parent=51 // pred_fallthru
          _
      $region52: #{tpu_custom_call.1} parent=5 // pred_fallthru
        _
      %p4252 = scmp.le.s32.totalorder 2, %s18
      // Predicated region
      $region61: #{tpu_custom_call.1} parent=5 // pred_check
        %p4253 = pneg %p4252
      $region62: #{tpu_custom_call.1} parent=5 // pred_check_branch
        %4255 = sbr.rel (%p4253) target = $region64
      $region63: #{tpu_custom_call.1} parent=5 // pred_region
        %s4256 = ssub.s32 %s18, 2
        // Predicated region
        $region65: #{tpu_custom_call.1} parent=63 // pred_check
          %p4257 = pneg %p220
        $region66: #{tpu_custom_call.1} parent=63 // pred_check_branch
          %4259 = sbr.rel (%p4257) target = $region68
        $region67: #{tpu_custom_call.1} parent=63 // pred_region
          %s4260 = sand.u32 %s205, 1
          %s4261 = scalar_lea.sflag [#allocation5], %s4260
          %s4262 = sand.u32 %s205, 1
          %s4263 = smul.addr %s4262, 8
          %s4264 = scalar_lea.vmem [#allocation6], %s4263
          %4265 = dma.done %s4261, 128
        $region68: #{tpu_custom_call.1} parent=63 // pred_fallthru
          _
      $region64: #{tpu_custom_call.1} parent=5 // pred_fallthru
        _
    $region6: #{tpu_custom_call.1} parent=1 // loop_footer
      %s22 = sadd.s32 1, %s18
    $region7: #{tpu_custom_call.1} parent=1 // loop_footer_branch
      %17 = sbr.rel target = $region3
    $region8: #{tpu_custom_call.1} parent=1 // loop_exit
      _
    %4266 = vsyncpa [#allocation4], 1
    %s4267 = scalar_lea.sflag [#allocation4], 1
    %4268 = vsyncpa %s4267, 1
    %4269 = vsyncpa [#allocation5], 1
    %s4270 = scalar_lea.sflag [#allocation5], 1
    %4271 = vsyncpa %s4270, 1

</llo_original>
